<compile_context>
chip_gen: v7x
topology: tpu7x:2x2x1
jax: 0.10.0
libtpu: 0.0.40
codegen_flags: <defaults>
</compile_context>

<pallas_src>
import functools

import jax
import jax.numpy as jnp
from jax.experimental import pallas as pl
from jax.experimental.pallas import tpu as pltpu


# ----------------------------------------------------------------------------
# VMEM budget (per-generation): ~75% of physical VMEM, queried from the chip.
# ----------------------------------------------------------------------------
def _vmem_limit() -> int:
    cap = 64 * 1024 * 1024
    try:
        cap = int(getattr(pltpu.get_tpu_info(), "vmem_capacity_bytes", cap))
    except Exception:
        pass
    return max(16 * 1024 * 1024, (cap * 3) // 4)


_VMEM_LIMIT = _vmem_limit()


# ----------------------------------------------------------------------------
# tile-size helpers (byte-aware)
# ----------------------------------------------------------------------------
def _pick_row_tile(m, bytes_per_row):
    """Rows per block: tm == m or (tm % 8 == 0 and m % tm == 0), within budget."""
    budget = max(_VMEM_LIMIT // 3, 1 << 20)
    cap = max(8, budget // max(bytes_per_row, 1))
    if m <= 8:
        return m
    if m <= cap:
        # prefer >=2 grid steps (pipelining / megacore) when cheaply possible
        return m // 2 if (m % 16 == 0 and m > 16) else m
    t = (min(cap, m) // 8) * 8
    while t >= 8:
        if m % t == 0:
            return t
        t -= 8
    return m  # TODO(synk): pad/mask ragged row counts instead of one big block.


def _pick_i_tile(n, h):
    """Node-i rows per edge block: ti == n or (ti % 8 == 0 and n % ti == 0)."""
    # Per i row (f32): e_in + e_out blocks double-buffered plus ~3 block-sized
    # in-kernel intermediates (Ce / e_new / gates).
    per_row = 4 * n * h * 7
    cap = max(1, (_VMEM_LIMIT // 2) // per_row)
    if n <= cap:
        # guarantee >=2 grid steps along i when cheap (helps v7x's 2 cores)
        return n // 2 if (n % 16 == 0 and n > 16) else n
    divs = [d for d in range(8, n, 8) if n % d == 0]
    fit = [d for d in divs if d <= cap]
    if fit:
        return fit[-1]
    if divs:
        return divs[0]  # TODO(synk): pad the i axis for awkward N instead.
    return n


# ----------------------------------------------------------------------------
# Kernel 1: row-tiled Linear  (X[M,K] @ W[K,Hout] + b)
# ----------------------------------------------------------------------------
def _linear_kernel(x_ref, w_ref, b_ref, o_ref):
    o_ref[...] = (
        jnp.dot(x_ref[...], w_ref[...], preferred_element_type=jnp.float32)
        + b_ref[...])


def linear(x2d, w, b):
    m, k = x2d.shape
    hout = w.shape[1]
    tm = _pick_row_tile(m, 2 * (k + hout) * 4)
    return pl.pallas_call(
        _linear_kernel,
        grid=(pl.cdiv(m, tm),),
        out_shape=jax.ShapeDtypeStruct((m, hout), jnp.float32),
        in_specs=[
            pl.BlockSpec((tm, k), lambda i: (i, 0)),
            pl.BlockSpec((k, hout), lambda i: (0, 0)),
            pl.BlockSpec((1, hout), lambda i: (0, 0)),
        ],
        out_specs=pl.BlockSpec((tm, hout), lambda i: (i, 0)),
        compiler_params=pltpu.CompilerParams(
            dimension_semantics=("parallel",),
            vmem_limit_bytes=_VMEM_LIMIT),
    )(x2d, w, b.reshape(1, hout))


# ----------------------------------------------------------------------------
# Kernel 2 (pass 1): packed edge update -> gated aggregation + BN statistics.
#   e_new[i,j,:] = Ah[j] + Bh[i] + (e_in[i,j,:] @ Wc + bc)
#   h_pre[i,:]   = Uh[i] + aggregate_j(sigmoid(e_new) * Vh[j])
# e_new is NOT written to HBM; only h_pre and per-block sum / sum-of-squares.
# ----------------------------------------------------------------------------
def _edge_stats_kernel(e_ref, uvab_ref, ahg_ref, vhg_ref, wc_ref, bc_ref,
                       hpre_ref, stats_ref, *, aggregation, ti, G, P, H, N):
    C = P * H
    i0 = pl.multiple_of(pl.program_id(1) * ti, ti)
    uvab_i = uvab_ref[0, pl.ds(i0, ti), :]                     # (ti, 4H)
    uh = uvab_i[:, 0:H]
    bh = uvab_i[:, 3 * H:4 * H]
    bh_c = bh if P == 1 else jnp.concatenate([bh] * P, axis=1)  # (ti, C)

    e2 = e_ref[0]                                              # (ti*G, C)
    ce2 = jnp.dot(e2, wc_ref[...],
                  preferred_element_type=jnp.float32) + bc_ref[...]
    e_new = (ce2.reshape(ti, G, C)
             + ahg_ref[0][None, :, :] + bh_c[:, None, :])      # (ti, G, C)
    gated = jax.nn.sigmoid(e_new) * vhg_ref[0][None, :, :]

    if aggregation == 'max':
        part = jnp.max(gated, axis=1)                          # (ti, C)
        agg = part[:, 0:H]
        for g in range(1, P):
            agg = jnp.maximum(agg, part[:, g * H:(g + 1) * H])
    else:
        part = jnp.sum(gated, axis=1)
        agg = part[:, 0:H]
        for g in range(1, P):
            agg = agg + part[:, g * H:(g + 1) * H]
        if aggregation == 'mean':
            agg = agg * (1.0 / N)

    h_pre = uh + agg                                           # (ti, H)
    hpre_ref[0] = h_pre

    # Per-block BatchNorm statistics (folded into global stats in the wrapper).
    # TODO(synk): switch to shifted sums if |mean| >> std ever bites numerics.
    h_sum = jnp.sum(h_pre, axis=0, keepdims=True)
    h_sq = jnp.sum(h_pre * h_pre, axis=0, keepdims=True)
    es_c = jnp.sum(jnp.sum(e_new, axis=0), axis=0, keepdims=True)           # (1, C)
    eq_c = jnp.sum(jnp.sum(e_new * e_new, axis=0), axis=0, keepdims=True)   # (1, C)
    e_sum = es_c[:, 0:H]
    e_sq = eq_c[:, 0:H]
    for g in range(1, P):
        e_sum = e_sum + es_c[:, g * H:(g + 1) * H]
        e_sq = e_sq + eq_c[:, g * H:(g + 1) * H]

    stats_ref[0, 0, 0:1, :] = h_sum
    stats_ref[0, 0, 1:2, :] = h_sq
    stats_ref[0, 0, 2:3, :] = e_sum
    stats_ref[0, 0, 3:4, :] = e_sq


def edge_stats(e_pack, uvab3, ahg, vhg, wcP, bcP, *, aggregation, N, H, P, ti):
    B = e_pack.shape[0]
    G = N // P
    C = P * H
    TR = ti * G
    n_it = N // ti
    kernel = functools.partial(
        _edge_stats_kernel, aggregation=aggregation, ti=ti, G=G, P=P, H=H, N=N)
    return pl.pallas_call(
        kernel,
        grid=(B, n_it),
        out_shape=(
            jax.ShapeDtypeStruct((B, N, H), jnp.float32),      # h_pre
            jax.ShapeDtypeStruct((B, n_it, 4, H), jnp.float32),  # BN stats
        ),
        in_specs=[
            pl.BlockSpec((1, TR, C), lambda b, it: (b, it, 0)),     # e_in packed
            pl.BlockSpec((1, N, 4 * H), lambda b, it: (b, 0, 0)),   # uvab (resident)
            pl.BlockSpec((1, G, C), lambda b, it: (b, 0, 0)),       # Ah packed
            pl.BlockSpec((1, G, C), lambda b, it: (b, 0, 0)),       # Vh packed
            pl.BlockSpec((C, C), lambda b, it: (0, 0)),             # block-diag Wc
            pl.BlockSpec((1, C), lambda b, it: (0, 0)),             # tiled bc
        ],
        out_specs=(
            pl.BlockSpec((1, ti, H), lambda b, it: (b, it, 0)),
            pl.BlockSpec((1, 1, 4, H), lambda b, it: (b, it, 0, 0)),
        ),
        compiler_params=pltpu.CompilerParams(
            dimension_semantics=("parallel", "parallel"),
            vmem_limit_bytes=_VMEM_LIMIT),
    )(e_pack, uvab3, ahg, vhg, wcP, bcP)


# ----------------------------------------------------------------------------
# Kernel 3 (pass 2): recompute e_new from e_in and apply BN + ReLU + residual,
# writing e_out directly in the packed lane-dense layout.
# ----------------------------------------------------------------------------
def _edge_apply_kernel(e_ref, uvab_ref, ahg_ref, wc_ref, bc_ref,
                       sc_ref, sh_ref, out_ref, *, ti, G, P, H):
    C = P * H
    i0 = pl.multiple_of(pl.program_id(1) * ti, ti)
    bh = uvab_ref[0, pl.ds(i0, ti), :][:, 3 * H:4 * H]
    bh_c = bh if P == 1 else jnp.concatenate([bh] * P, axis=1)

    e2 = e_ref[0]                                              # (ti*G, C)
    ce2 = jnp.dot(e2, wc_ref[...],
                  preferred_element_type=jnp.float32) + bc_ref[...]
    e_new = (ce2.reshape(ti, G, C)
             + ahg_ref[0][None, :, :] + bh_c[:, None, :]).reshape(ti * G, C)
    y = e_new * sc_ref[...] + sh_ref[...]
    out_ref[0] = e2 + jnp.maximum(y, 0.0)


def edge_apply(e_pack, uvab3, ahg, wcP, bcP, e_scaleP, e_shiftP, *, N, H, P, ti):
    B, R, C = e_pack.shape
    G = N // P
    TR = ti * G
    n_it = N // ti
    kernel = functools.partial(_edge_apply_kernel, ti=ti, G=G, P=P, H=H)
    return pl.pallas_call(
        kernel,
        grid=(B, n_it),
        out_shape=jax.ShapeDtypeStruct((B, R, C), jnp.float32),
        in_specs=[
            pl.BlockSpec((1, TR, C), lambda b, it: (b, it, 0)),
            pl.BlockSpec((1, N, 4 * H), lambda b, it: (b, 0, 0)),
            pl.BlockSpec((1, G, C), lambda b, it: (b, 0, 0)),
            pl.BlockSpec((C, C), lambda b, it: (0, 0)),
            pl.BlockSpec((1, C), lambda b, it: (0, 0)),
            pl.BlockSpec((1, C), lambda b, it: (0, 0)),
            pl.BlockSpec((1, C), lambda b, it: (0, 0)),
        ],
        out_specs=pl.BlockSpec((1, TR, C), lambda b, it: (b, it, 0)),
        compiler_params=pltpu.CompilerParams(
            dimension_semantics=("parallel", "parallel"),
            vmem_limit_bytes=_VMEM_LIMIT),
    )(e_pack, uvab3, ahg, wcP, bcP, e_scaleP, e_shiftP)


# ----------------------------------------------------------------------------
# Kernel 4: BatchNorm "apply" epilogue (node path): out = res + relu(x*s + t)
# ----------------------------------------------------------------------------
def _bn_apply_kernel(x_ref, s_ref, t_ref, r_ref, o_ref):
    y = x_ref[...] * s_ref[...] + t_ref[...]
    o_ref[...] = r_ref[...] + jnp.maximum(y, 0.0)


def bn_apply(x2d, scale, shift, res2d):
    m, c = x2d.shape
    tm = _pick_row_tile(m, 2 * 3 * c * 4)
    row = pl.BlockSpec((tm, c), lambda i: (i, 0))
    vec = pl.BlockSpec((1, c), lambda i: (0, 0))
    return pl.pallas_call(
        _bn_apply_kernel,
        grid=(pl.cdiv(m, tm),),
        out_shape=jax.ShapeDtypeStruct((m, c), jnp.float32),
        in_specs=[row, vec, vec, row],
        out_specs=row,
        compiler_params=pltpu.CompilerParams(
            dimension_semantics=("parallel",),
            vmem_limit_bytes=_VMEM_LIMIT),
    )(x2d, scale.reshape(1, c), shift.reshape(1, c), res2d)


# ----------------------------------------------------------------------------
# GNN layer / encoder (glue in tiny JAX, heavy compute in Pallas kernels)
# ----------------------------------------------------------------------------
def gnn_layer(h, e_pack, p, *, aggregation, eps=1e-5):
    B, N, H = h.shape
    C = e_pack.shape[-1]
    P = C // H
    G = N // P
    h_in = h

    # Fused U/V/A/B projection: one (H, 4H=128) matmul, lane-dense output.
    w_uvab = jnp.concatenate(
        [p['U']['w'], p['V']['w'], p['A']['w'], p['B']['w']], axis=1)
    b_uvab = jnp.concatenate(
        [p['U']['b'], p['V']['b'], p['A']['b'], p['B']['b']], axis=0)
    uvab = linear(h.reshape(B * N, H), w_uvab, b_uvab).reshape(B, N, 4 * H)

    # Small packed per-batch broadcast operands + block-diagonal Wc (hoisted).
    ahg = uvab[:, :, 2 * H:3 * H].reshape(B, G, C)
    vhg = uvab[:, :, H:2 * H].reshape(B, G, C)
    wcP = jnp.kron(jnp.eye(P, dtype=jnp.float32), p['C']['w'])   # (C, C)
    bcP = jnp.tile(p['C']['b'], P).reshape(1, C)

    ti = _pick_i_tile(N, H)

    # Pass 1: h_pre + BatchNorm statistics (e_new never round-trips to HBM).
    h_pre, stats = edge_stats(e_pack, uvab, ahg, vhg, wcP, bcP,
                              aggregation=aggregation, N=N, H=H, P=P, ti=ti)

    # Global batch statistics (tiny per-feature folds in plain JAX).
    mh = float(B * N)
    h_mean = jnp.sum(stats[:, :, 0, :], axis=(0, 1)) / mh
    h_var = jnp.maximum(
        jnp.sum(stats[:, :, 1, :], axis=(0, 1)) / mh - h_mean * h_mean, 0.0)
    h_scale = p['norm_h']['gamma'] * jax.lax.rsqrt(h_var + eps)
    h_shift = p['norm_h']['beta'] - h_mean * h_scale

    me = float(B * N * N)
    e_mean = jnp.sum(stats[:, :, 2, :], axis=(0, 1)) / me
    e_var = jnp.maximum(
        jnp.sum(stats[:, :, 3, :], axis=(0, 1)) / me - e_mean * e_mean, 0.0)
    e_scale = p['norm_e']['gamma'] * jax.lax.rsqrt(e_var + eps)
    e_shift = p['norm_e']['beta'] - e_mean * e_scale

    # Node epilogue: h_out = h_in + relu(BN(h_pre)), lane-packed when possible.
    mrows = B * N
    Q = 4 if mrows % 4 == 0 else (2 if mrows % 2 == 0 else 1)
    h_out = bn_apply(h_pre.reshape(mrows // Q, Q * H),
                     jnp.tile(h_scale, Q), jnp.tile(h_shift, Q),
                     h_in.reshape(mrows // Q, Q * H)).reshape(B, N, H)

    # Pass 2: recompute e_new, apply BN + ReLU + residual, write packed e_out.
    e_out = edge_apply(e_pack, uvab, ahg, wcP, bcP,
                       jnp.tile(e_scale, P).reshape(1, C),
                       jnp.tile(e_shift, P).reshape(1, C),
                       N=N, H=H, P=P, ti=ti)
    return h_out, e_out


def gnn_encoder(nodes, edges, params, *, aggregation='mean'):
    B, N, node_dim = nodes.shape
    edge_dim = edges.shape[-1]
    H = params['init_node']['w'].shape[1]
    P = 4 if N % 4 == 0 else (2 if N % 2 == 0 else 1)
    G = N // P
    C = P * H
    R = N * G

    h = linear(nodes.reshape(B * N, node_dim),
               params['init_node']['w'], params['init_node']['b']
               ).reshape(B, N, H)

    # Initial edge embedding straight into the packed lane-dense (B, R, C)
    # layout: P edge rows per kernel row, block-diagonal replicated weight.
    weP = jnp.kron(jnp.eye(P, dtype=jnp.float32), params['init_edge']['w'])
    beP = jnp.tile(params['init_edge']['b'], P)
    e = linear(edges.reshape(B * R, P * edge_dim), weP, beP).reshape(B, R, C)

    for lp in params['layers']:
        h, e = gnn_layer(h, e, lp, aggregation=aggregation)
    return h, e.reshape(B, N, N, H)   # unpack once, at the very end


# ----------------------------------------------------------------------------
# Deterministic parameter init (shapes follow the PyTorch module __init__)
# ----------------------------------------------------------------------------
def _init_linear(key, in_dim, out_dim):
    kw, kb = jax.random.split(key)
    # stored as (in, out) = W^T relative to PyTorch's (out, in)
    w = jax.random.normal(kw, (in_dim, out_dim), jnp.float32) * 0.1
    b = jax.random.normal(kb, (out_dim,), jnp.float32) * 0.1
    return {'w': w, 'b': b}


def init_params(key, node_dim, edge_dim, hidden_dim, n_layers):
    keys = jax.random.split(key, 2 + 5 * n_layers)
    params = {
        'init_node': _init_linear(keys[0], node_dim, hidden_dim),
        'init_edge': _init_linear(keys[1], edge_dim, hidden_dim),
        'layers': [],
    }
    for l in range(n_layers):
        base = 2 + 5 * l
        params['layers'].append({
            'U': _init_linear(keys[base + 0], hidden_dim, hidden_dim),
            'V': _init_linear(keys[base + 1], hidden_dim, hidden_dim),
            'A': _init_linear(keys[base + 2], hidden_dim, hidden_dim),
            'B': _init_linear(keys[base + 3], hidden_dim, hidden_dim),
            'C': _init_linear(keys[base + 4], hidden_dim, hidden_dim),
            # BatchNorm1d(affine=True, track_running_stats=False)
            'norm_h': {'gamma': jnp.ones((hidden_dim,), jnp.float32),
                       'beta': jnp.zeros((hidden_dim,), jnp.float32)},
            'norm_e': {'gamma': jnp.ones((hidden_dim,), jnp.float32),
                       'beta': jnp.zeros((hidden_dim,), jnp.float32)},
        })
    return params


# ----------------------------------------------------------------------------
# Pure-jnp reference of the PyTorch forward (for a correctness self-check)
# ----------------------------------------------------------------------------
def reference_encoder(nodes, edges, params, *, aggregation='mean', eps=1e-5):
    def lin(x, p):
        return x @ p['w'] + p['b']

    def bn(x2d, p):
        mean = jnp.mean(x2d, axis=0)
        var = jnp.mean((x2d - mean) ** 2, axis=0)
        return (x2d - mean) * jax.lax.rsqrt(var + eps) * p['gamma'] + p['beta']

    h = lin(nodes, params['init_node'])
    e = lin(edges, params['init_edge'])
    B, N, H = h.shape
    for p in params['layers']:
        h_in, e_in = h, e
        Uh, Vh, Ah, Bh = [lin(h, p[k]) for k in ('U', 'V', 'A', 'B')]
        Ce = lin(e, p['C'])
        e_new = Ah[:, None, :, :] + Bh[:, :, None, :] + Ce
        gates = jax.nn.sigmoid(e_new)
        gated = gates * Vh[:, None, :, :]
        if aggregation == 'mean':
            agg = jnp.sum(gated, axis=2) / N
        elif aggregation == 'max':
            agg = jnp.max(gated, axis=2)
        else:
            agg = jnp.sum(gated, axis=2)
        h_pre = Uh + agg
        h = h_in + jax.nn.relu(
            bn(h_pre.reshape(B * N, H), p['norm_h']).reshape(B, N, H))
        e = e_in + jax.nn.relu(
            bn(e_new.reshape(B * N * N, H), p['norm_e']).reshape(B, N, N, H))
    return h, e


if __name__ == "__main__":
    # model_params: node_dim=4, edge_dim=2, embedding_dim=32,
    #               n_encode_layers=2, aggregation='mean'
    B, N = 2, 8
    NODE_DIM, EDGE_DIM, HIDDEN, LAYERS = 4, 2, 32, 2

    key = jax.random.PRNGKey(0)
    k_nodes, k_edges, k_params = jax.random.split(key, 3)
    nodes = jax.random.normal(k_nodes, (B, N, NODE_DIM), jnp.float32)
    edges = jax.random.normal(k_edges, (B, N, N, EDGE_DIM), jnp.float32)
    params = init_params(k_params, NODE_DIM, EDGE_DIM, HIDDEN, LAYERS)

    encoder = jax.jit(functools.partial(gnn_encoder, aggregation='mean'))
    h, e = encoder(nodes, edges, params)
    jax.block_until_ready((h, e))
    assert h.shape == (B, N, HIDDEN) and e.shape == (B, N, N, HIDDEN)

    # correctness self-check against the pure-jnp reference of the PyTorch module
    h_want, e_want = reference_encoder(nodes, edges, params, aggregation='mean')
    err = max(float(jnp.max(jnp.abs(h - h_want))),
              float(jnp.max(jnp.abs(e - e_want))))
    assert err < 1e-2, f"mismatch vs reference: {err}"
    print("KERNEL_OK")
</pallas_src>

<mosaic_0001>
module attributes {stable_mosaic.version = 11 : i64} {
  func.func @_linear_kernel(%arg0: i32, %arg1: memref<16x4xf32, #tpu.memory_space<vmem>>, %arg2: memref<4x32xf32, #tpu.memory_space<vmem>>, %arg3: memref<1x32xf32, #tpu.memory_space<vmem>>, %arg4: memref<16x32xf32, #tpu.memory_space<vmem>>) attributes {dimension_semantics = [#tpu.dimension_semantics<parallel>], iteration_bounds = array<i64: 1>, scalar_prefetch = 0 : i64, scratch_operands = 0 : i64, tpu.core_type = #tpu.core_type<tc>, window_params = [{transform_indices = @transform_0, window_bounds = array<i64: 16, 4>}, {pipeline_mode = #tpu.pipeline_mode<synchronous>, transform_indices = @transform_1, window_bounds = array<i64: 4, 32>}, {pipeline_mode = #tpu.pipeline_mode<synchronous>, transform_indices = @transform_2, window_bounds = array<i64: 1, 32>}, {transform_indices = @transform_3, window_bounds = array<i64: 16, 32>}]} {
    %c0 = arith.constant 0 : index
    %c0_0 = arith.constant 0 : index
    %0 = vector.load %arg1[%c0, %c0_0] : memref<16x4xf32, #tpu.memory_space<vmem>>, vector<16x4xf32>
    %c0_1 = arith.constant 0 : index
    %c0_2 = arith.constant 0 : index
    %1 = vector.load %arg2[%c0_1, %c0_2] : memref<4x32xf32, #tpu.memory_space<vmem>>, vector<4x32xf32>
    %cst = arith.constant dense<0.000000e+00> : vector<16x32xf32>
    %2 = tpu.matmul %0, %1, %cst {dimension_numbers = #tpu.dot_dimension_numbers<[1], [0], [0], [1], [0, 0, 1, 1], [], []>} : vector<16x4xf32>, vector<4x32xf32>, vector<16x32xf32> -> vector<16x32xf32>
    %c0_3 = arith.constant 0 : index
    %c0_4 = arith.constant 0 : index
    %3 = vector.load %arg3[%c0_3, %c0_4] : memref<1x32xf32, #tpu.memory_space<vmem>>, vector<1x32xf32>
    %4 = vector.broadcast %3 : vector<1x32xf32> to vector<16x32xf32>
    %5 = arith.addf %2, %4 : vector<16x32xf32>
    %c0_5 = arith.constant 0 : index
    %c0_6 = arith.constant 0 : index
    %6 = vector.load %arg4[%c0_5, %c0_6] : memref<16x32xf32, #tpu.memory_space<vmem>>, vector<16x32xf32>
    tpu.vector_store %arg4[%c0_5, %c0_6], %5 {strides = array<i32>} : memref<16x32xf32, #tpu.memory_space<vmem>>, vector<16x32xf32>,
    return
  }
  func.func @transform_0(%arg0: i32) -> (i32, i32) {
    %c0_i32 = arith.constant 0 : i32
    %c0_i32_0 = arith.constant 0 : i32
    return %arg0, %c0_i32 : i32, i32
  }
  func.func @transform_1(%arg0: i32) -> (i32, i32) {
    %c0_i32 = arith.constant 0 : i32
    %c0_i32_0 = arith.constant 0 : i32
    %c0_i32_1 = arith.constant 0 : i32
    return %c0_i32, %c0_i32_0 : i32, i32
  }
  func.func @transform_2(%arg0: i32) -> (i32, i32) {
    %c0_i32 = arith.constant 0 : i32
    %c0_i32_0 = arith.constant 0 : i32
    %c0_i32_1 = arith.constant 0 : i32
    return %c0_i32, %c0_i32_0 : i32, i32
  }
  func.func @transform_3(%arg0: i32) -> (i32, i32) {
    %c0_i32 = arith.constant 0 : i32
    %c0_i32_0 = arith.constant 0 : i32
    return %arg0, %c0_i32 : i32, i32
  }
}

module attributes {stable_mosaic.version = 11 : i64} {
  func.func @_linear_kernel(%arg0: i32, %arg1: memref<16x32xf32, #tpu.memory_space<vmem>>, %arg2: memref<32x128xf32, #tpu.memory_space<vmem>>, %arg3: memref<1x128xf32, #tpu.memory_space<vmem>>, %arg4: memref<16x128xf32, #tpu.memory_space<vmem>>) attributes {dimension_semantics = [#tpu.dimension_semantics<parallel>], iteration_bounds = array<i64: 1>, scalar_prefetch = 0 : i64, scratch_operands = 0 : i64, tpu.core_type = #tpu.core_type<tc>, window_params = [{transform_indices = @transform_0, window_bounds = array<i64: 16, 32>}, {pipeline_mode = #tpu.pipeline_mode<synchronous>, transform_indices = @transform_1, window_bounds = array<i64: 32, 128>}, {pipeline_mode = #tpu.pipeline_mode<synchronous>, transform_indices = @transform_2, window_bounds = array<i64: 1, 128>}, {transform_indices = @transform_3, window_bounds = array<i64: 16, 128>}]} {
    %c0 = arith.constant 0 : index
    %c0_0 = arith.constant 0 : index
    %0 = vector.load %arg1[%c0, %c0_0] : memref<16x32xf32, #tpu.memory_space<vmem>>, vector<16x32xf32>
    %c0_1 = arith.constant 0 : index
    %c0_2 = arith.constant 0 : index
    %1 = vector.load %arg2[%c0_1, %c0_2] : memref<32x128xf32, #tpu.memory_space<vmem>>, vector<32x128xf32>
    %cst = arith.constant dense<0.000000e+00> : vector<16x128xf32>
    %2 = tpu.matmul %0, %1, %cst {dimension_numbers = #tpu.dot_dimension_numbers<[1], [0], [0], [1], [0, 0, 1, 1], [], []>} : vector<16x32xf32>, vector<32x128xf32>, vector<16x128xf32> -> vector<16x128xf32>
    %c0_3 = arith.constant 0 : index
    %c0_4 = arith.constant 0 : index
    %3 = vector.load %arg3[%c0_3, %c0_4] : memref<1x128xf32, #tpu.memory_space<vmem>>, vector<1x128xf32>
    %4 = vector.broadcast %3 : vector<1x128xf32> to vector<16x128xf32>
    %5 = arith.addf %2, %4 : vector<16x128xf32>
    %c0_5 = arith.constant 0 : index
    %c0_6 = arith.constant 0 : index
    %6 = vector.load %arg4[%c0_5, %c0_6] : memref<16x128xf32, #tpu.memory_space<vmem>>, vector<16x128xf32>
    tpu.vector_store %arg4[%c0_5, %c0_6], %5 {strides = array<i32>} : memref<16x128xf32, #tpu.memory_space<vmem>>, vector<16x128xf32>,
    return
  }
  func.func @transform_0(%arg0: i32) -> (i32, i32) {
    %c0_i32 = arith.constant 0 : i32
    %c0_i32_0 = arith.constant 0 : i32
    return %arg0, %c0_i32 : i32, i32
  }
  func.func @transform_1(%arg0: i32) -> (i32, i32) {
    %c0_i32 = arith.constant 0 : i32
    %c0_i32_0 = arith.constant 0 : i32
    %c0_i32_1 = arith.constant 0 : i32
    return %c0_i32, %c0_i32_0 : i32, i32
  }
  func.func @transform_2(%arg0: i32) -> (i32, i32) {
    %c0_i32 = arith.constant 0 : i32
    %c0_i32_0 = arith.constant 0 : i32
    %c0_i32_1 = arith.constant 0 : i32
    return %c0_i32, %c0_i32_0 : i32, i32
  }
  func.func @transform_3(%arg0: i32) -> (i32, i32) {
    %c0_i32 = arith.constant 0 : i32
    %c0_i32_0 = arith.constant 0 : i32
    return %arg0, %c0_i32 : i32, i32
  }
}

module attributes {stable_mosaic.version = 11 : i64} {
  func.func @_linear_kernel(%arg0: i32, %arg1: memref<16x8xf32, #tpu.memory_space<vmem>>, %arg2: memref<8x128xf32, #tpu.memory_space<vmem>>, %arg3: memref<1x128xf32, #tpu.memory_space<vmem>>, %arg4: memref<16x128xf32, #tpu.memory_space<vmem>>) attributes {dimension_semantics = [#tpu.dimension_semantics<parallel>], iteration_bounds = array<i64: 2>, scalar_prefetch = 0 : i64, scratch_operands = 0 : i64, tpu.core_type = #tpu.core_type<tc>, window_params = [{transform_indices = @transform_0, window_bounds = array<i64: 16, 8>}, {pipeline_mode = #tpu.pipeline_mode<synchronous>, transform_indices = @transform_1, window_bounds = array<i64: 8, 128>}, {pipeline_mode = #tpu.pipeline_mode<synchronous>, transform_indices = @transform_2, window_bounds = array<i64: 1, 128>}, {transform_indices = @transform_3, window_bounds = array<i64: 16, 128>}]} {
    %c0 = arith.constant 0 : index
    %c0_0 = arith.constant 0 : index
    %0 = vector.load %arg1[%c0, %c0_0] : memref<16x8xf32, #tpu.memory_space<vmem>>, vector<16x8xf32>
    %c0_1 = arith.constant 0 : index
    %c0_2 = arith.constant 0 : index
    %1 = vector.load %arg2[%c0_1, %c0_2] : memref<8x128xf32, #tpu.memory_space<vmem>>, vector<8x128xf32>
    %cst = arith.constant dense<0.000000e+00> : vector<16x128xf32>
    %2 = tpu.matmul %0, %1, %cst {dimension_numbers = #tpu.dot_dimension_numbers<[1], [0], [0], [1], [0, 0, 1, 1], [], []>} : vector<16x8xf32>, vector<8x128xf32>, vector<16x128xf32> -> vector<16x128xf32>
    %c0_3 = arith.constant 0 : index
    %c0_4 = arith.constant 0 : index
    %3 = vector.load %arg3[%c0_3, %c0_4] : memref<1x128xf32, #tpu.memory_space<vmem>>, vector<1x128xf32>
    %4 = vector.broadcast %3 : vector<1x128xf32> to vector<16x128xf32>
    %5 = arith.addf %2, %4 : vector<16x128xf32>
    %c0_5 = arith.constant 0 : index
    %c0_6 = arith.constant 0 : index
    %6 = vector.load %arg4[%c0_5, %c0_6] : memref<16x128xf32, #tpu.memory_space<vmem>>, vector<16x128xf32>
    tpu.vector_store %arg4[%c0_5, %c0_6], %5 {strides = array<i32>} : memref<16x128xf32, #tpu.memory_space<vmem>>, vector<16x128xf32>,
    return
  }
  func.func @transform_0(%arg0: i32) -> (i32, i32) {
    %c0_i32 = arith.constant 0 : i32
    %c0_i32_0 = arith.constant 0 : i32
    return %arg0, %c0_i32 : i32, i32
  }
  func.func @transform_1(%arg0: i32) -> (i32, i32) {
    %c0_i32 = arith.constant 0 : i32
    %c0_i32_0 = arith.constant 0 : i32
    %c0_i32_1 = arith.constant 0 : i32
    return %c0_i32, %c0_i32_0 : i32, i32
  }
  func.func @transform_2(%arg0: i32) -> (i32, i32) {
    %c0_i32 = arith.constant 0 : i32
    %c0_i32_0 = arith.constant 0 : i32
    %c0_i32_1 = arith.constant 0 : i32
    return %c0_i32, %c0_i32_0 : i32, i32
  }
  func.func @transform_3(%arg0: i32) -> (i32, i32) {
    %c0_i32 = arith.constant 0 : i32
    %c0_i32_0 = arith.constant 0 : i32
    return %arg0, %c0_i32 : i32, i32
  }
}

module attributes {stable_mosaic.version = 11 : i64} {
  func.func @_edge_stats_kernel(%arg0: i32, %arg1: i32, %arg2: memref<1x16x128xf32, #tpu.memory_space<vmem>>, %arg3: memref<1x8x128xf32, #tpu.memory_space<vmem>>, %arg4: memref<1x2x128xf32, #tpu.memory_space<vmem>>, %arg5: memref<1x2x128xf32, #tpu.memory_space<vmem>>, %arg6: memref<128x128xf32, #tpu.memory_space<vmem>>, %arg7: memref<1x128xf32, #tpu.memory_space<vmem>>, %arg8: memref<1x8x32xf32, #tpu.memory_space<vmem>>, %arg9: memref<1x1x4x32xf32, #tpu.memory_space<vmem>>) attributes {dimension_semantics = [#tpu.dimension_semantics<parallel>, #tpu.dimension_semantics<parallel>], iteration_bounds = array<i64: 2, 1>, scalar_prefetch = 0 : i64, scratch_operands = 0 : i64, tpu.core_type = #tpu.core_type<tc>, window_params = [{transform_indices = @transform_0, window_bounds = array<i64: 1, 16, 128>}, {transform_indices = @transform_1, window_bounds = array<i64: 1, 8, 128>}, {transform_indices = @transform_2, window_bounds = array<i64: 1, 2, 128>}, {transform_indices = @transform_3, window_bounds = array<i64: 1, 2, 128>}, {pipeline_mode = #tpu.pipeline_mode<synchronous>, transform_indices = @transform_4, window_bounds = array<i64: 128, 128>}, {pipeline_mode = #tpu.pipeline_mode<synchronous>, transform_indices = @transform_5, window_bounds = array<i64: 1, 128>}, {transform_indices = @transform_6, window_bounds = array<i64: 1, 8, 32>}, {transform_indices = @transform_7, window_bounds = array<i64: 1, 1, 4, 32>}]} {
    %c8_i32 = arith.constant 8 : i32
    %0 = arith.muli %arg1, %c8_i32 : i32
    %1 = tpu.assume_multiple %0, 8 : i32
    %c0 = arith.constant 0 : index
    %2 = arith.index_cast %1 : i32 to index
    %c0_0 = arith.constant 0 : index
    %3 = vector.load %arg3[%c0, %2, %c0_0] : memref<1x8x128xf32, #tpu.memory_space<vmem>>, vector<1x8x128xf32>
    %4 = vector.shape_cast %3 : vector<1x8x128xf32> to vector<8x128xf32>
    %5 = vector.extract_strided_slice %4 {offsets = [0, 0], sizes = [8, 32], strides = [1, 1]} : vector<8x128xf32> to vector<8x32xf32>
    %6 = vector.extract_strided_slice %4 {offsets = [0, 96], sizes = [8, 32], strides = [1, 1]} : vector<8x128xf32> to vector<8x32xf32>
    %7 = tpu.concatenate %6, %6, %6, %6 in 1 : vector<8x32xf32>, vector<8x32xf32>, vector<8x32xf32>, vector<8x32xf32> -> vector<8x128xf32>
    %c0_1 = arith.constant 0 : index
    %c0_2 = arith.constant 0 : index
    %c0_3 = arith.constant 0 : index
    %8 = vector.load %arg2[%c0_1, %c0_2, %c0_3] : memref<1x16x128xf32, #tpu.memory_space<vmem>>, vector<1x16x128xf32>
    %9 = vector.shape_cast %8 : vector<1x16x128xf32> to vector<16x128xf32>
    %c0_4 = arith.constant 0 : index
    %c0_5 = arith.constant 0 : index
    %10 = vector.load %arg6[%c0_4, %c0_5] : memref<128x128xf32, #tpu.memory_space<vmem>>, vector<128x128xf32>
    %cst = arith.constant dense<0.000000e+00> : vector<16x128xf32>
    %11 = tpu.matmul %9, %10, %cst {dimension_numbers = #tpu.dot_dimension_numbers<[1], [0], [0], [1], [0, 0, 1, 1], [], []>} : vector<16x128xf32>, vector<128x128xf32>, vector<16x128xf32> -> vector<16x128xf32>
    %c0_6 = arith.constant 0 : index
    %c0_7 = arith.constant 0 : index
    %12 = vector.load %arg7[%c0_6, %c0_7] : memref<1x128xf32, #tpu.memory_space<vmem>>, vector<1x128xf32>
    %13 = vector.broadcast %12 : vector<1x128xf32> to vector<16x128xf32>
    %14 = arith.addf %11, %13 : vector<16x128xf32>
    %15 = vector.shape_cast %14 : vector<16x128xf32> to vector<8x2x128xf32>
    %c0_8 = arith.constant 0 : index
    %c0_9 = arith.constant 0 : index
    %c0_10 = arith.constant 0 : index
    %16 = vector.load %arg4[%c0_8, %c0_9, %c0_10] : memref<1x2x128xf32, #tpu.memory_space<vmem>>, vector<1x2x128xf32>
    %17 = vector.shape_cast %16 : vector<1x2x128xf32> to vector<2x128xf32>
    %18 = vector.shape_cast %17 : vector<2x128xf32> to vector<1x2x128xf32>
    %19 = vector.broadcast %18 : vector<1x2x128xf32> to vector<8x2x128xf32>
    %20 = arith.addf %15, %19 : vector<8x2x128xf32>
    %21 = vector.shape_cast %7 : vector<8x128xf32> to vector<8x1x128xf32>
    %22 = vector.broadcast %21 : vector<8x1x128xf32> to vector<8x2x128xf32>
    %23 = arith.addf %20, %22 : vector<8x2x128xf32>
    %24 = arith.negf %23 : vector<8x2x128xf32>
    %25 = math.exp %24 : vector<8x2x128xf32>
    %cst_11 = arith.constant 1.000000e+00 : f32
    %26 = vector.broadcast %cst_11 : f32 to vector<8x2x128xf32>
    %27 = arith.addf %26, %25 : vector<8x2x128xf32>
    %28 = arith.divf %26, %27 : vector<8x2x128xf32>
    %c0_12 = arith.constant 0 : index
    %c0_13 = arith.constant 0 : index
    %c0_14 = arith.constant 0 : index
    %29 = vector.load %arg5[%c0_12, %c0_13, %c0_14] : memref<1x2x128xf32, #tpu.memory_space<vmem>>, vector<1x2x128xf32>
    %30 = vector.shape_cast %29 : vector<1x2x128xf32> to vector<2x128xf32>
    %31 = vector.shape_cast %30 : vector<2x128xf32> to vector<1x2x128xf32>
    %32 = vector.broadcast %31 : vector<1x2x128xf32> to vector<8x2x128xf32>
    %33 = arith.mulf %28, %32 : vector<8x2x128xf32>
    %cst_15 = arith.constant dense<0.000000e+00> : vector<8x128xf32>
    %34 = vector.multi_reduction <add>, %33, %cst_15 [1] : vector<8x2x128xf32> to vector<8x128xf32>
    %35 = vector.extract_strided_slice %34 {offsets = [0, 0], sizes = [8, 32], strides = [1, 1]} : vector<8x128xf32> to vector<8x32xf32>
    %36 = vector.extract_strided_slice %34 {offsets = [0, 32], sizes = [8, 32], strides = [1, 1]} : vector<8x128xf32> to vector<8x32xf32>
    %37 = arith.addf %35, %36 : vector<8x32xf32>
    %38 = vector.extract_strided_slice %34 {offsets = [0, 64], sizes = [8, 32], strides = [1, 1]} : vector<8x128xf32> to vector<8x32xf32>
    %39 = arith.addf %37, %38 : vector<8x32xf32>
    %40 = vector.extract_strided_slice %34 {offsets = [0, 96], sizes = [8, 32], strides = [1, 1]} : vector<8x128xf32> to vector<8x32xf32>
    %41 = arith.addf %39, %40 : vector<8x32xf32>
    %cst_16 = arith.constant 1.250000e-01 : f32
    %42 = vector.broadcast %cst_16 : f32 to vector<8x32xf32>
    %43 = arith.mulf %41, %42 : vector<8x32xf32>
    %44 = arith.addf %5, %43 : vector<8x32xf32>
    %c0_17 = arith.constant 0 : index
    %c0_18 = arith.constant 0 : index
    %c0_19 = arith.constant 0 : index
    %45 = vector.load %arg8[%c0_17, %c0_18, %c0_19] : memref<1x8x32xf32, #tpu.memory_space<vmem>>, vector<1x8x32xf32>
    %46 = vector.shape_cast %45 : vector<1x8x32xf32> to vector<8x32xf32>
    %47 = vector.shape_cast %44 : vector<8x32xf32> to vector<1x8x32xf32>
    tpu.vector_store %arg8[%c0_17, %c0_18, %c0_19], %47 {strides = array<i32>} : memref<1x8x32xf32, #tpu.memory_space<vmem>>, vector<1x8x32xf32>,
    %cst_20 = arith.constant dense<0.000000e+00> : vector<32xf32>
    %48 = vector.multi_reduction <add>, %44, %cst_20 [0] : vector<8x32xf32> to vector<32xf32>
    %49 = vector.shape_cast %48 : vector<32xf32> to vector<1x32xf32>
    %50 = arith.mulf %44, %44 : vector<8x32xf32>
    %cst_21 = arith.constant dense<0.000000e+00> : vector<32xf32>
    %51 = vector.multi_reduction <add>, %50, %cst_21 [0] : vector<8x32xf32> to vector<32xf32>
    %52 = vector.shape_cast %51 : vector<32xf32> to vector<1x32xf32>
    %cst_22 = arith.constant dense<0.000000e+00> : vector<2x128xf32>
    %53 = vector.multi_reduction <add>, %23, %cst_22 [0] : vector<8x2x128xf32> to vector<2x128xf32>
    %cst_23 = arith.constant dense<0.000000e+00> : vector<128xf32>
    %54 = vector.multi_reduction <add>, %53, %cst_23 [0] : vector<2x128xf32> to vector<128xf32>
    %55 = vector.shape_cast %54 : vector<128xf32> to vector<1x128xf32>
    %56 = arith.mulf %23, %23 : vector<8x2x128xf32>
    %cst_24 = arith.constant dense<0.000000e+00> : vector<2x128xf32>
    %57 = vector.multi_reduction <add>, %56, %cst_24 [0] : vector<8x2x128xf32> to vector<2x128xf32>
    %cst_25 = arith.constant dense<0.000000e+00> : vector<128xf32>
    %58 = vector.multi_reduction <add>, %57, %cst_25 [0] : vector<2x128xf32> to vector<128xf32>
    %59 = vector.shape_cast %58 : vector<128xf32> to vector<1x128xf32>
    %60 = vector.extract_strided_slice %55 {offsets = [0, 0], sizes = [1, 32], strides = [1, 1]} : vector<1x128xf32> to vector<1x32xf32>
    %61 = vector.extract_strided_slice %59 {offsets = [0, 0], sizes = [1, 32], strides = [1, 1]} : vector<1x128xf32> to vector<1x32xf32>
    %62 = vector.extract_strided_slice %55 {offsets = [0, 32], sizes = [1, 32], strides = [1, 1]} : vector<1x128xf32> to vector<1x32xf32>
    %63 = arith.addf %60, %62 : vector<1x32xf32>
    %64 = vector.extract_strided_slice %59 {offsets = [0, 32], sizes = [1, 32], strides = [1, 1]} : vector<1x128xf32> to vector<1x32xf32>
    %65 = arith.addf %61, %64 : vector<1x32xf32>
    %66 = vector.extract_strided_slice %55 {offsets = [0, 64], sizes = [1, 32], strides = [1, 1]} : vector<1x128xf32> to vector<1x32xf32>
    %67 = arith.addf %63, %66 : vector<1x32xf32>
    %68 = vector.extract_strided_slice %59 {offsets = [0, 64], sizes = [1, 32], strides = [1, 1]} : vector<1x128xf32> to vector<1x32xf32>
    %69 = arith.addf %65, %68 : vector<1x32xf32>
    %70 = vector.extract_strided_slice %55 {offsets = [0, 96], sizes = [1, 32], strides = [1, 1]} : vector<1x128xf32> to vector<1x32xf32>
    %71 = arith.addf %67, %70 : vector<1x32xf32>
    %72 = vector.extract_strided_slice %59 {offsets = [0, 96], sizes = [1, 32], strides = [1, 1]} : vector<1x128xf32> to vector<1x32xf32>
    %73 = arith.addf %69, %72 : vector<1x32xf32>
    %c0_26 = arith.constant 0 : index
    %c0_27 = arith.constant 0 : index
    %c0_28 = arith.constant 0 : index
    %c0_29 = arith.constant 0 : index
    %74 = vector.load %arg9[%c0_26, %c0_27, %c0_28, %c0_29] : memref<1x1x4x32xf32, #tpu.memory_space<vmem>>, vector<1x1x1x32xf32>
    %75 = vector.shape_cast %74 : vector<1x1x1x32xf32> to vector<1x32xf32>
    %76 = vector.shape_cast %49 : vector<1x32xf32> to vector<1x1x1x32xf32>
    tpu.vector_store %arg9[%c0_26, %c0_27, %c0_28, %c0_29], %76 {strides = array<i32>} : memref<1x1x4x32xf32, #tpu.memory_space<vmem>>, vector<1x1x1x32xf32>,
    %c0_30 = arith.constant 0 : index
    %c0_31 = arith.constant 0 : index
    %c1 = arith.constant 1 : index
    %c0_32 = arith.constant 0 : index
    %77 = vector.load %arg9[%c0_30, %c0_31, %c1, %c0_32] : memref<1x1x4x32xf32, #tpu.memory_space<vmem>>, vector<1x1x1x32xf32>
    %78 = vector.shape_cast %77 : vector<1x1x1x32xf32> to vector<1x32xf32>
    %79 = vector.shape_cast %52 : vector<1x32xf32> to vector<1x1x1x32xf32>
    tpu.vector_store %arg9[%c0_30, %c0_31, %c1, %c0_32], %79 {strides = array<i32>} : memref<1x1x4x32xf32, #tpu.memory_space<vmem>>, vector<1x1x1x32xf32>,
    %c0_33 = arith.constant 0 : index
    %c0_34 = arith.constant 0 : index
    %c2 = arith.constant 2 : index
    %c0_35 = arith.constant 0 : index
    %80 = vector.load %arg9[%c0_33, %c0_34, %c2, %c0_35] : memref<1x1x4x32xf32, #tpu.memory_space<vmem>>, vector<1x1x1x32xf32>
    %81 = vector.shape_cast %80 : vector<1x1x1x32xf32> to vector<1x32xf32>
    %82 = vector.shape_cast %71 : vector<1x32xf32> to vector<1x1x1x32xf32>
    tpu.vector_store %arg9[%c0_33, %c0_34, %c2, %c0_35], %82 {strides = array<i32>} : memref<1x1x4x32xf32, #tpu.memory_space<vmem>>, vector<1x1x1x32xf32>,
    %c0_36 = arith.constant 0 : index
    %c0_37 = arith.constant 0 : index
    %c3 = arith.constant 3 : index
    %c0_38 = arith.constant 0 : index
    %83 = vector.load %arg9[%c0_36, %c0_37, %c3, %c0_38] : memref<1x1x4x32xf32, #tpu.memory_space<vmem>>, vector<1x1x1x32xf32>
    %84 = vector.shape_cast %83 : vector<1x1x1x32xf32> to vector<1x32xf32>
    %85 = vector.shape_cast %73 : vector<1x32xf32> to vector<1x1x1x32xf32>
    tpu.vector_store %arg9[%c0_36, %c0_37, %c3, %c0_38], %85 {strides = array<i32>} : memref<1x1x4x32xf32, #tpu.memory_space<vmem>>, vector<1x1x1x32xf32>,
    return
  }
  func.func @transform_0(%arg0: i32, %arg1: i32) -> (i32, i32, i32) {
    %c0_i32 = arith.constant 0 : i32
    %c0_i32_0 = arith.constant 0 : i32
    return %arg0, %arg1, %c0_i32 : i32, i32, i32
  }
  func.func @transform_1(%arg0: i32, %arg1: i32) -> (i32, i32, i32) {
    %c0_i32 = arith.constant 0 : i32
    %c0_i32_0 = arith.constant 0 : i32
    %c0_i32_1 = arith.constant 0 : i32
    return %arg0, %c0_i32, %c0_i32_0 : i32, i32, i32
  }
  func.func @transform_2(%arg0: i32, %arg1: i32) -> (i32, i32, i32) {
    %c0_i32 = arith.constant 0 : i32
    %c0_i32_0 = arith.constant 0 : i32
    %c0_i32_1 = arith.constant 0 : i32
    return %arg0, %c0_i32, %c0_i32_0 : i32, i32, i32
  }
  func.func @transform_3(%arg0: i32, %arg1: i32) -> (i32, i32, i32) {
    %c0_i32 = arith.constant 0 : i32
    %c0_i32_0 = arith.constant 0 : i32
    %c0_i32_1 = arith.constant 0 : i32
    return %arg0, %c0_i32, %c0_i32_0 : i32, i32, i32
  }
  func.func @transform_4(%arg0: i32, %arg1: i32) -> (i32, i32) {
    %c0_i32 = arith.constant 0 : i32
    %c0_i32_0 = arith.constant 0 : i32
    %c0_i32_1 = arith.constant 0 : i32
    return %c0_i32, %c0_i32_0 : i32, i32
  }
  func.func @transform_5(%arg0: i32, %arg1: i32) -> (i32, i32) {
    %c0_i32 = arith.constant 0 : i32
    %c0_i32_0 = arith.constant 0 : i32
    %c0_i32_1 = arith.constant 0 : i32
    return %c0_i32, %c0_i32_0 : i32, i32
  }
  func.func @transform_6(%arg0: i32, %arg1: i32) -> (i32, i32, i32) {
    %c0_i32 = arith.constant 0 : i32
    %c0_i32_0 = arith.constant 0 : i32
    return %arg0, %arg1, %c0_i32 : i32, i32, i32
  }
  func.func @transform_7(%arg0: i32, %arg1: i32) -> (i32, i32, i32, i32) {
    %c0_i32 = arith.constant 0 : i32
    %c0_i32_0 = arith.constant 0 : i32
    %c0_i32_1 = arith.constant 0 : i32
    return %arg0, %arg1, %c0_i32, %c0_i32_0 : i32, i32, i32, i32
  }
}

module attributes {stable_mosaic.version = 11 : i64} {
  func.func @_bn_apply_kernel(%arg0: i32, %arg1: memref<4x128xf32, #tpu.memory_space<vmem>>, %arg2: memref<1x128xf32, #tpu.memory_space<vmem>>, %arg3: memref<1x128xf32, #tpu.memory_space<vmem>>, %arg4: memref<4x128xf32, #tpu.memory_space<vmem>>, %arg5: memref<4x128xf32, #tpu.memory_space<vmem>>) attributes {dimension_semantics = [#tpu.dimension_semantics<parallel>], iteration_bounds = array<i64: 1>, scalar_prefetch = 0 : i64, scratch_operands = 0 : i64, tpu.core_type = #tpu.core_type<tc>, window_params = [{transform_indices = @transform_0, window_bounds = array<i64: 4, 128>}, {pipeline_mode = #tpu.pipeline_mode<synchronous>, transform_indices = @transform_1, window_bounds = array<i64: 1, 128>}, {pipeline_mode = #tpu.pipeline_mode<synchronous>, transform_indices = @transform_2, window_bounds = array<i64: 1, 128>}, {transform_indices = @transform_3, window_bounds = array<i64: 4, 128>}, {transform_indices = @transform_4, window_bounds = array<i64: 4, 128>}]} {
    %c0 = arith.constant 0 : index
    %c0_0 = arith.constant 0 : index
    %0 = vector.load %arg1[%c0, %c0_0] : memref<4x128xf32, #tpu.memory_space<vmem>>, vector<4x128xf32>
    %c0_1 = arith.constant 0 : index
    %c0_2 = arith.constant 0 : index
    %1 = vector.load %arg2[%c0_1, %c0_2] : memref<1x128xf32, #tpu.memory_space<vmem>>, vector<1x128xf32>
    %2 = vector.broadcast %1 : vector<1x128xf32> to vector<4x128xf32>
    %3 = arith.mulf %0, %2 : vector<4x128xf32>
    %c0_3 = arith.constant 0 : index
    %c0_4 = arith.constant 0 : index
    %4 = vector.load %arg3[%c0_3, %c0_4] : memref<1x128xf32, #tpu.memory_space<vmem>>, vector<1x128xf32>
    %5 = vector.broadcast %4 : vector<1x128xf32> to vector<4x128xf32>
    %6 = arith.addf %3, %5 : vector<4x128xf32>
    %c0_5 = arith.constant 0 : index
    %c0_6 = arith.constant 0 : index
    %7 = vector.load %arg4[%c0_5, %c0_6] : memref<4x128xf32, #tpu.memory_space<vmem>>, vector<4x128xf32>
    %cst = arith.constant 0.000000e+00 : f32
    %8 = vector.broadcast %cst : f32 to vector<4x128xf32>
    %9 = arith.maximumf %6, %8 : vector<4x128xf32>
    %10 = arith.addf %7, %9 : vector<4x128xf32>
    %c0_7 = arith.constant 0 : index
    %c0_8 = arith.constant 0 : index
    %11 = vector.load %arg5[%c0_7, %c0_8] : memref<4x128xf32, #tpu.memory_space<vmem>>, vector<4x128xf32>
    tpu.vector_store %arg5[%c0_7, %c0_8], %10 {strides = array<i32>} : memref<4x128xf32, #tpu.memory_space<vmem>>, vector<4x128xf32>,
    return
  }
  func.func @transform_0(%arg0: i32) -> (i32, i32) {
    %c0_i32 = arith.constant 0 : i32
    %c0_i32_0 = arith.constant 0 : i32
    return %arg0, %c0_i32 : i32, i32
  }
  func.func @transform_1(%arg0: i32) -> (i32, i32) {
    %c0_i32 = arith.constant 0 : i32
    %c0_i32_0 = arith.constant 0 : i32
    %c0_i32_1 = arith.constant 0 : i32
    return %c0_i32, %c0_i32_0 : i32, i32
  }
  func.func @transform_2(%arg0: i32) -> (i32, i32) {
    %c0_i32 = arith.constant 0 : i32
    %c0_i32_0 = arith.constant 0 : i32
    %c0_i32_1 = arith.constant 0 : i32
    return %c0_i32, %c0_i32_0 : i32, i32
  }
  func.func @transform_3(%arg0: i32) -> (i32, i32) {
    %c0_i32 = arith.constant 0 : i32
    %c0_i32_0 = arith.constant 0 : i32
    return %arg0, %c0_i32 : i32, i32
  }
  func.func @transform_4(%arg0: i32) -> (i32, i32) {
    %c0_i32 = arith.constant 0 : i32
    %c0_i32_0 = arith.constant 0 : i32
    return %arg0, %c0_i32 : i32, i32
  }
}

module attributes {stable_mosaic.version = 11 : i64} {
  func.func @_edge_apply_kernel(%arg0: i32, %arg1: i32, %arg2: memref<1x16x128xf32, #tpu.memory_space<vmem>>, %arg3: memref<1x8x128xf32, #tpu.memory_space<vmem>>, %arg4: memref<1x2x128xf32, #tpu.memory_space<vmem>>, %arg5: memref<128x128xf32, #tpu.memory_space<vmem>>, %arg6: memref<1x128xf32, #tpu.memory_space<vmem>>, %arg7: memref<1x128xf32, #tpu.memory_space<vmem>>, %arg8: memref<1x128xf32, #tpu.memory_space<vmem>>, %arg9: memref<1x16x128xf32, #tpu.memory_space<vmem>>) attributes {dimension_semantics = [#tpu.dimension_semantics<parallel>, #tpu.dimension_semantics<parallel>], iteration_bounds = array<i64: 2, 1>, scalar_prefetch = 0 : i64, scratch_operands = 0 : i64, tpu.core_type = #tpu.core_type<tc>, window_params = [{transform_indices = @transform_0, window_bounds = array<i64: 1, 16, 128>}, {transform_indices = @transform_1, window_bounds = array<i64: 1, 8, 128>}, {transform_indices = @transform_2, window_bounds = array<i64: 1, 2, 128>}, {pipeline_mode = #tpu.pipeline_mode<synchronous>, transform_indices = @transform_3, window_bounds = array<i64: 128, 128>}, {pipeline_mode = #tpu.pipeline_mode<synchronous>, transform_indices = @transform_4, window_bounds = array<i64: 1, 128>}, {pipeline_mode = #tpu.pipeline_mode<synchronous>, transform_indices = @transform_5, window_bounds = array<i64: 1, 128>}, {pipeline_mode = #tpu.pipeline_mode<synchronous>, transform_indices = @transform_6, window_bounds = array<i64: 1, 128>}, {transform_indices = @transform_7, window_bounds = array<i64: 1, 16, 128>}]} {
    %c8_i32 = arith.constant 8 : i32
    %0 = arith.muli %arg1, %c8_i32 : i32
    %1 = tpu.assume_multiple %0, 8 : i32
    %c0 = arith.constant 0 : index
    %2 = arith.index_cast %1 : i32 to index
    %c0_0 = arith.constant 0 : index
    %3 = vector.load %arg3[%c0, %2, %c0_0] : memref<1x8x128xf32, #tpu.memory_space<vmem>>, vector<1x8x128xf32>
    %4 = vector.shape_cast %3 : vector<1x8x128xf32> to vector<8x128xf32>
    %5 = vector.extract_strided_slice %4 {offsets = [0, 96], sizes = [8, 32], strides = [1, 1]} : vector<8x128xf32> to vector<8x32xf32>
    %6 = tpu.concatenate %5, %5, %5, %5 in 1 : vector<8x32xf32>, vector<8x32xf32>, vector<8x32xf32>, vector<8x32xf32> -> vector<8x128xf32>
    %c0_1 = arith.constant 0 : index
    %c0_2 = arith.constant 0 : index
    %c0_3 = arith.constant 0 : index
    %7 = vector.load %arg2[%c0_1, %c0_2, %c0_3] : memref<1x16x128xf32, #tpu.memory_space<vmem>>, vector<1x16x128xf32>
    %8 = vector.shape_cast %7 : vector<1x16x128xf32> to vector<16x128xf32>
    %c0_4 = arith.constant 0 : index
    %c0_5 = arith.constant 0 : index
    %9 = vector.load %arg5[%c0_4, %c0_5] : memref<128x128xf32, #tpu.memory_space<vmem>>, vector<128x128xf32>
    %cst = arith.constant dense<0.000000e+00> : vector<16x128xf32>
    %10 = tpu.matmul %8, %9, %cst {dimension_numbers = #tpu.dot_dimension_numbers<[1], [0], [0], [1], [0, 0, 1, 1], [], []>} : vector<16x128xf32>, vector<128x128xf32>, vector<16x128xf32> -> vector<16x128xf32>
    %c0_6 = arith.constant 0 : index
    %c0_7 = arith.constant 0 : index
    %11 = vector.load %arg6[%c0_6, %c0_7] : memref<1x128xf32, #tpu.memory_space<vmem>>, vector<1x128xf32>
    %12 = vector.broadcast %11 : vector<1x128xf32> to vector<16x128xf32>
    %13 = arith.addf %10, %12 : vector<16x128xf32>
    %14 = vector.shape_cast %13 : vector<16x128xf32> to vector<8x2x128xf32>
    %c0_8 = arith.constant 0 : index
    %c0_9 = arith.constant 0 : index
    %c0_10 = arith.constant 0 : index
    %15 = vector.load %arg4[%c0_8, %c0_9, %c0_10] : memref<1x2x128xf32, #tpu.memory_space<vmem>>, vector<1x2x128xf32>
    %16 = vector.shape_cast %15 : vector<1x2x128xf32> to vector<2x128xf32>
    %17 = vector.shape_cast %16 : vector<2x128xf32> to vector<1x2x128xf32>
    %18 = vector.broadcast %17 : vector<1x2x128xf32> to vector<8x2x128xf32>
    %19 = arith.addf %14, %18 : vector<8x2x128xf32>
    %20 = vector.shape_cast %6 : vector<8x128xf32> to vector<8x1x128xf32>
    %21 = vector.broadcast %20 : vector<8x1x128xf32> to vector<8x2x128xf32>
    %22 = arith.addf %19, %21 : vector<8x2x128xf32>
    %23 = vector.shape_cast %22 : vector<8x2x128xf32> to vector<16x128xf32>
    %c0_11 = arith.constant 0 : index
    %c0_12 = arith.constant 0 : index
    %24 = vector.load %arg7[%c0_11, %c0_12] : memref<1x128xf32, #tpu.memory_space<vmem>>, vector<1x128xf32>
    %25 = vector.broadcast %24 : vector<1x128xf32> to vector<16x128xf32>
    %26 = arith.mulf %23, %25 : vector<16x128xf32>
    %c0_13 = arith.constant 0 : index
    %c0_14 = arith.constant 0 : index
    %27 = vector.load %arg8[%c0_13, %c0_14] : memref<1x128xf32, #tpu.memory_space<vmem>>, vector<1x128xf32>
    %28 = vector.broadcast %27 : vector<1x128xf32> to vector<16x128xf32>
    %29 = arith.addf %26, %28 : vector<16x128xf32>
    %cst_15 = arith.constant 0.000000e+00 : f32
    %30 = vector.broadcast %cst_15 : f32 to vector<16x128xf32>
    %31 = arith.maximumf %29, %30 : vector<16x128xf32>
    %32 = arith.addf %8, %31 : vector<16x128xf32>
    %c0_16 = arith.constant 0 : index
    %c0_17 = arith.constant 0 : index
    %c0_18 = arith.constant 0 : index
    %33 = vector.load %arg9[%c0_16, %c0_17, %c0_18] : memref<1x16x128xf32, #tpu.memory_space<vmem>>, vector<1x16x128xf32>
    %34 = vector.shape_cast %33 : vector<1x16x128xf32> to vector<16x128xf32>
    %35 = vector.shape_cast %32 : vector<16x128xf32> to vector<1x16x128xf32>
    tpu.vector_store %arg9[%c0_16, %c0_17, %c0_18], %35 {strides = array<i32>} : memref<1x16x128xf32, #tpu.memory_space<vmem>>, vector<1x16x128xf32>,
    return
  }
  func.func @transform_0(%arg0: i32, %arg1: i32) -> (i32, i32, i32) {
    %c0_i32 = arith.constant 0 : i32
    %c0_i32_0 = arith.constant 0 : i32
    return %arg0, %arg1, %c0_i32 : i32, i32, i32
  }
  func.func @transform_1(%arg0: i32, %arg1: i32) -> (i32, i32, i32) {
    %c0_i32 = arith.constant 0 : i32
    %c0_i32_0 = arith.constant 0 : i32
    %c0_i32_1 = arith.constant 0 : i32
    return %arg0, %c0_i32, %c0_i32_0 : i32, i32, i32
  }
  func.func @transform_2(%arg0: i32, %arg1: i32) -> (i32, i32, i32) {
    %c0_i32 = arith.constant 0 : i32
    %c0_i32_0 = arith.constant 0 : i32
    %c0_i32_1 = arith.constant 0 : i32
    return %arg0, %c0_i32, %c0_i32_0 : i32, i32, i32
  }
  func.func @transform_3(%arg0: i32, %arg1: i32) -> (i32, i32) {
    %c0_i32 = arith.constant 0 : i32
    %c0_i32_0 = arith.constant 0 : i32
    %c0_i32_1 = arith.constant 0 : i32
    return %c0_i32, %c0_i32_0 : i32, i32
  }
  func.func @transform_4(%arg0: i32, %arg1: i32) -> (i32, i32) {
    %c0_i32 = arith.constant 0 : i32
    %c0_i32_0 = arith.constant 0 : i32
    %c0_i32_1 = arith.constant 0 : i32
    return %c0_i32, %c0_i32_0 : i32, i32
  }
  func.func @transform_5(%arg0: i32, %arg1: i32) -> (i32, i32) {
    %c0_i32 = arith.constant 0 : i32
    %c0_i32_0 = arith.constant 0 : i32
    %c0_i32_1 = arith.constant 0 : i32
    return %c0_i32, %c0_i32_0 : i32, i32
  }
  func.func @transform_6(%arg0: i32, %arg1: i32) -> (i32, i32) {
    %c0_i32 = arith.constant 0 : i32
    %c0_i32_0 = arith.constant 0 : i32
    %c0_i32_1 = arith.constant 0 : i32
    return %c0_i32, %c0_i32_0 : i32, i32
  }
  func.func @transform_7(%arg0: i32, %arg1: i32) -> (i32, i32, i32) {
    %c0_i32 = arith.constant 0 : i32
    %c0_i32_0 = arith.constant 0 : i32
    return %arg0, %arg1, %c0_i32 : i32, i32, i32
  }
}

</mosaic_0001>

<llo_original>
// kernel: gnn_encoder.10
$region0: #{gnn_encoder.10}
  #allocation0 [shape = 'u32[]', space=smem, size = 0x4, offset = 0x4, fixed_abs, tag = 'smem constant byte address 0x4 - core index']
  #allocation1 [shape = 'u32[144,128]{1,0:T(1,128)}', space=vmem, size = 0x12000, scoped, tag = 'internal scratch']
  %s0 = inlined_call_operand.vmem [shape: f32[16,4], index: 0, kind: input, shape index: {}]
  %s1 = inlined_call_operand.vmem [shape: f32[4,32], index: 1, kind: input, shape index: {}]
  %s2 = inlined_call_operand.vmem [shape: f32[1,32], index: 2, kind: input, shape index: {}]
  %s3 = inlined_call_operand.vmem [shape: f32[16,32], index: 3, kind: output, shape index: {}]
  %s4 = sld [smem:[#allocation0]]
  $region22: #{gnn_encoder.10} parent=0
    _
  %s6 = ssub.s32 1, %s4
  %s7 = scalar_select 0, %s6, %s4
  // Predicated region
  $region2: #{gnn_encoder.10} parent=0 // pred_check
    _
  $region3: #{gnn_encoder.10} parent=0 // pred_check_branch
    %9 = sbr.rel (0) target = $region5
  $region4: #{gnn_encoder.10} parent=0 // pred_region
    _
  $region5: #{gnn_encoder.10} parent=0 // pred_fallthru
    _
  // Predicated region
  $region6: #{gnn_encoder.10} parent=0 // pred_check
    _
  $region7: #{gnn_encoder.10} parent=0 // pred_check_branch
    %11 = sbr.rel (0) target = $region9
  $region8: #{gnn_encoder.10} parent=0 // pred_region
    _
  $region9: #{gnn_encoder.10} parent=0 // pred_fallthru
    _
  // Predicated region
  $region10: #{gnn_encoder.10} parent=0 // pred_check
    _
  $region11: #{gnn_encoder.10} parent=0 // pred_check_branch
    %13 = sbr.rel (0) target = $region13
  $region12: #{gnn_encoder.10} parent=0 // pred_region
    _
  $region13: #{gnn_encoder.10} parent=0 // pred_fallthru
    _
  %v14 = vld [vmem:[%s0] sm:$0xff]
  %v15 = vld [vmem:[%s0 + $0x8] sm:$0xff]
  %v16 = vld [vmem:[%s1] sm:$0xf]
  %v17 = vld [vmem:[%s2] sm:$0x1]
  %v19 = vlaneseq
  %v20 = vshrl.u32 %v19, 7
  %v21 = vsub.s32 0, %v20
  %v22 = vrot.slane %v17, %v21
  %vm24 = vcmask 31744
  %v26 = vsel %vm24, %v14, 0
  %v29 = vsel %vm24, %v15, 0
  %vm31 = vcmask 1043456
  %v33 = vsel %vm31, %v16, 0
  %35 = vmatprep.subr.mxu0 0.0
  %36 = vmatpush1.msra.mxu0 %v33
  %37 = vmatprep.subr.mxu0 0.0
  %38 = vmatpush1.msra.mxu0 0.0
  %39 = vmatprep.subr.mxu0 0.0
  %40 = vmatpush1.msra.mxu0 0.0
  %41 = vmatprep.subr.mxu0 0.0
  %42 = vmatpush1.msra.mxu0 0.0
  %43 = vmatprep.subr.mxu0 0.0
  %44 = vmatpush1.msra.mxu0 0.0
  %45 = vmatprep.subr.mxu0 0.0
  %46 = vmatpush1.msra.mxu0 0.0
  %47 = vmatprep.subr.mxu0 0.0
  %48 = vmatpush1.msra.mxu0 0.0
  %49 = vmatprep.subr.mxu0 0.0
  %50 = vmatpush1.msra.mxu0 0.0
  %51 = vmatprep.subr.mxu0 0.0
  %52 = vmatpush1.msra.mxu0 0.0
  %53 = vmatprep.subr.mxu0 0.0
  %54 = vmatpush1.msra.mxu0 0.0
  %55 = vmatprep.subr.mxu0 0.0
  %56 = vmatpush1.msra.mxu0 0.0
  %57 = vmatprep.subr.mxu0 0.0
  %58 = vmatpush1.msra.mxu0 0.0
  %59 = vmatprep.subr.mxu0 0.0
  %60 = vmatpush1.msra.mxu0 0.0
  %61 = vmatprep.subr.mxu0 0.0
  %62 = vmatpush1.msra.mxu0 0.0
  %63 = vmatprep.subr.mxu0 0.0
  %64 = vmatpush1.msra.mxu0 0.0
  %65 = vmatprep.subr.mxu0 0.0
  %66 = vmatpush1.msra.mxu0 0.0
  %67 = vmatprep.subr.mxu0 0.0
  %68 = vmatpush1.msra.mxu0 0.0
  %69 = vmatprep.subr.mxu0 0.0
  %70 = vmatpush1.msra.mxu0 0.0
  %71 = vmatprep.subr.mxu0 0.0
  %72 = vmatpush1.msra.mxu0 0.0
  %73 = vmatprep.subr.mxu0 0.0
  %74 = vmatpush1.msra.mxu0 0.0
  %75 = vmatprep.subr.mxu0 0.0
  %76 = vmatpush1.msra.mxu0 0.0
  %77 = vmatprep.subr.mxu0 0.0
  %78 = vmatpush1.msra.mxu0 0.0
  %79 = vmatprep.subr.mxu0 0.0
  %80 = vmatpush1.msra.mxu0 0.0
  %81 = vmatprep.subr.mxu0 0.0
  %82 = vmatpush1.msra.mxu0 0.0
  %83 = vmatprep.subr.mxu0 0.0
  %84 = vmatpush1.msra.mxu0 0.0
  %85 = vmatprep.subr.mxu0 0.0
  %86 = vmatpush1.msra.mxu0 0.0
  %87 = vmatprep.subr.mxu0 0.0
  %88 = vmatpush1.msra.mxu0 0.0
  %89 = vmatprep.subr.mxu0 0.0
  %90 = vmatpush1.msra.mxu0 0.0
  %91 = vmatprep.subr.mxu0 0.0
  %92 = vmatpush1.msra.mxu0 0.0
  %93 = vmatprep.subr.mxu0 0.0
  %94 = vmatpush1.msra.mxu0 0.0
  %95 = vmatprep.subr.mxu0 0.0
  %96 = vmatpush1.msra.mxu0 0.0
  %97 = vmatprep.subr.mxu0 0.0
  %98 = vmatpush1.msra.mxu0 0.0
  %99 = vmatprep.mubr.f32.mxu0 0.0
  %100 = vmatmul.mubr.f32.gmra.mrb[0].mxu0 %v26
  %v101 = vpop.f32.mrb[0].mxu0
  %v102 = vadd.f32 %v22, %v101
  %v103 = vpop.f32.mrb[0].mxu0
  %104 = vmatprep.mubr.f32.mxu0 0.0
  %105 = vmatmul.mubr.f32.gmra.mrb[0].mxu0 %v29
  %v106 = vpop.f32.mrb[0].mxu0
  %v107 = vadd.f32 %v22, %v106
  %v108 = vpop.f32.mrb[0].mxu0
  %109 = vdwg.mxu0
  %vm110 = vcmask 261120
  %111 = vst.msk [vmem:[%s3] sm:$0xff] %vm110, %v102
  %112 = vst.msk [vmem:[%s3 + $0x8] sm:$0xff] %vm110, %v107
  // Predicated region
  $region14: #{gnn_encoder.10} parent=0 // pred_check
    _
  $region15: #{gnn_encoder.10} parent=0 // pred_check_branch
    %114 = sbr.rel (0) target = $region17
  $region16: #{gnn_encoder.10} parent=0 // pred_region
    _
  $region17: #{gnn_encoder.10} parent=0 // pred_fallthru
    _
  // Predicated region
  $region18: #{gnn_encoder.10} parent=0 // pred_check
    _
  $region19: #{gnn_encoder.10} parent=0 // pred_check_branch
    %116 = sbr.rel (0) target = $region21
  $region20: #{gnn_encoder.10} parent=0 // pred_region
    _
  $region21: #{gnn_encoder.10} parent=0 // pred_fallthru
    _

// kernel: gnn_encoder.12
$region0: #{gnn_encoder.12}
  #allocation0 [shape = 'u32[]', space=smem, size = 0x4, offset = 0x4, fixed_abs, tag = 'smem constant byte address 0x4 - core index']
  #allocation1 [shape = 'u32[144,128]{1,0:T(1,128)}', space=vmem, size = 0x12000, scoped, tag = 'internal scratch']
  %s0 = inlined_call_operand.vmem [shape: f32[16,32], index: 0, kind: input, shape index: {}]
  %s1 = inlined_call_operand.vmem [shape: f32[32,128], index: 1, kind: input, shape index: {}]
  %s2 = inlined_call_operand.vmem [shape: f32[1,128], index: 2, kind: input, shape index: {}]
  %s3 = inlined_call_operand.vmem [shape: f32[16,128], index: 3, kind: output, shape index: {}]
  %s4 = sld [smem:[#allocation0]]
  $region22: #{gnn_encoder.12} parent=0
    _
  %s6 = ssub.s32 1, %s4
  %s7 = scalar_select 0, %s6, %s4
  // Predicated region
  $region2: #{gnn_encoder.12} parent=0 // pred_check
    _
  $region3: #{gnn_encoder.12} parent=0 // pred_check_branch
    %9 = sbr.rel (0) target = $region5
  $region4: #{gnn_encoder.12} parent=0 // pred_region
    _
  $region5: #{gnn_encoder.12} parent=0 // pred_fallthru
    _
  // Predicated region
  $region6: #{gnn_encoder.12} parent=0 // pred_check
    _
  $region7: #{gnn_encoder.12} parent=0 // pred_check_branch
    %11 = sbr.rel (0) target = $region9
  $region8: #{gnn_encoder.12} parent=0 // pred_region
    _
  $region9: #{gnn_encoder.12} parent=0 // pred_fallthru
    _
  // Predicated region
  $region10: #{gnn_encoder.12} parent=0 // pred_check
    _
  $region11: #{gnn_encoder.12} parent=0 // pred_check_branch
    %13 = sbr.rel (0) target = $region13
  $region12: #{gnn_encoder.12} parent=0 // pred_region
    _
  $region13: #{gnn_encoder.12} parent=0 // pred_fallthru
    _
  %v14 = vld [vmem:[%s0] sm:$0xff]
  %v15 = vld [vmem:[%s0 + $0x8] sm:$0xff]
  %v16 = vld [vmem:[%s1] sm:$0xff]
  %v17 = vld [vmem:[%s1 + $0x8] sm:$0xff]
  %v18 = vld [vmem:[%s1 + $0x10] sm:$0xff]
  %v19 = vld [vmem:[%s1 + $0x18] sm:$0xff]
  %v20 = vld [vmem:[%s2] sm:$0x1]
  %v22 = vlaneseq
  %v23 = vshrl.u32 %v22, 7
  %v24 = vsub.s32 0, %v23
  %v25 = vrot.slane %v20, %v24
  %vm27 = vcmask 261120
  %v29 = vsel %vm27, %v14, 0
  %v32 = vsel %vm27, %v15, 0
  %34 = vmatprep.subr.mxu0 0.0
  %35 = vmatpush1.msra.mxu0 %v16
  %36 = vmatprep.subr.mxu0 0.0
  %37 = vmatpush1.msra.mxu0 %v17
  %38 = vmatprep.subr.mxu0 0.0
  %39 = vmatpush1.msra.mxu0 %v18
  %40 = vmatprep.subr.mxu0 0.0
  %41 = vmatpush1.msra.mxu0 %v19
  %42 = vmatprep.subr.mxu0 0.0
  %43 = vmatpush1.msra.mxu0 0.0
  %44 = vmatprep.subr.mxu0 0.0
  %45 = vmatpush1.msra.mxu0 0.0
  %46 = vmatprep.subr.mxu0 0.0
  %47 = vmatpush1.msra.mxu0 0.0
  %48 = vmatprep.subr.mxu0 0.0
  %49 = vmatpush1.msra.mxu0 0.0
  %50 = vmatprep.subr.mxu0 0.0
  %51 = vmatpush1.msra.mxu0 0.0
  %52 = vmatprep.subr.mxu0 0.0
  %53 = vmatpush1.msra.mxu0 0.0
  %54 = vmatprep.subr.mxu0 0.0
  %55 = vmatpush1.msra.mxu0 0.0
  %56 = vmatprep.subr.mxu0 0.0
  %57 = vmatpush1.msra.mxu0 0.0
  %58 = vmatprep.subr.mxu0 0.0
  %59 = vmatpush1.msra.mxu0 0.0
  %60 = vmatprep.subr.mxu0 0.0
  %61 = vmatpush1.msra.mxu0 0.0
  %62 = vmatprep.subr.mxu0 0.0
  %63 = vmatpush1.msra.mxu0 0.0
  %64 = vmatprep.subr.mxu0 0.0
  %65 = vmatpush1.msra.mxu0 0.0
  %66 = vmatprep.subr.mxu0 0.0
  %67 = vmatpush1.msra.mxu0 0.0
  %68 = vmatprep.subr.mxu0 0.0
  %69 = vmatpush1.msra.mxu0 0.0
  %70 = vmatprep.subr.mxu0 0.0
  %71 = vmatpush1.msra.mxu0 0.0
  %72 = vmatprep.subr.mxu0 0.0
  %73 = vmatpush1.msra.mxu0 0.0
  %74 = vmatprep.subr.mxu0 0.0
  %75 = vmatpush1.msra.mxu0 0.0
  %76 = vmatprep.subr.mxu0 0.0
  %77 = vmatpush1.msra.mxu0 0.0
  %78 = vmatprep.subr.mxu0 0.0
  %79 = vmatpush1.msra.mxu0 0.0
  %80 = vmatprep.subr.mxu0 0.0
  %81 = vmatpush1.msra.mxu0 0.0
  %82 = vmatprep.subr.mxu0 0.0
  %83 = vmatpush1.msra.mxu0 0.0
  %84 = vmatprep.subr.mxu0 0.0
  %85 = vmatpush1.msra.mxu0 0.0
  %86 = vmatprep.subr.mxu0 0.0
  %87 = vmatpush1.msra.mxu0 0.0
  %88 = vmatprep.subr.mxu0 0.0
  %89 = vmatpush1.msra.mxu0 0.0
  %90 = vmatprep.subr.mxu0 0.0
  %91 = vmatpush1.msra.mxu0 0.0
  %92 = vmatprep.subr.mxu0 0.0
  %93 = vmatpush1.msra.mxu0 0.0
  %94 = vmatprep.subr.mxu0 0.0
  %95 = vmatpush1.msra.mxu0 0.0
  %96 = vmatprep.subr.mxu0 0.0
  %97 = vmatpush1.msra.mxu0 0.0
  %98 = vmatprep.mubr.f32.mxu0 0.0
  %99 = vmatmul.mubr.f32.gmra.mrb[0].mxu0 %v29
  %v100 = vpop.f32.mrb[0].mxu0
  %v101 = vadd.f32 %v25, %v100
  %v102 = vpop.f32.mrb[0].mxu0
  %103 = vmatprep.mubr.f32.mxu0 0.0
  %104 = vmatmul.mubr.f32.gmra.mrb[0].mxu0 %v32
  %v105 = vpop.f32.mrb[0].mxu0
  %v106 = vadd.f32 %v25, %v105
  %v107 = vpop.f32.mrb[0].mxu0
  %108 = vdwg.mxu0
  %109 = vst [vmem:[%s3] sm:$0xff] %v101
  %110 = vst [vmem:[%s3 + $0x8] sm:$0xff] %v106
  // Predicated region
  $region14: #{gnn_encoder.12} parent=0 // pred_check
    _
  $region15: #{gnn_encoder.12} parent=0 // pred_check_branch
    %112 = sbr.rel (0) target = $region17
  $region16: #{gnn_encoder.12} parent=0 // pred_region
    _
  $region17: #{gnn_encoder.12} parent=0 // pred_fallthru
    _
  // Predicated region
  $region18: #{gnn_encoder.12} parent=0 // pred_check
    _
  $region19: #{gnn_encoder.12} parent=0 // pred_check_branch
    %114 = sbr.rel (0) target = $region21
  $region20: #{gnn_encoder.12} parent=0 // pred_region
    _
  $region21: #{gnn_encoder.12} parent=0 // pred_fallthru
    _

// kernel: tile.58
$region0: #{tile.58}
  #allocation0 [shape = 's32[1]{0}', space=sflag, size = 0x4, scoped, tag = 'scoped memory for tile.58']
  %s0 = inlined_call_operand.vmem [shape: f32[32], index: 0, kind: input, shape index: {}]
  %s1 = inlined_call_operand.vmem [shape: f32[4,32], index: 1, kind: output, shape index: {}]
  // Predicated region
  $region2: #{tile.58} parent=0 // pred_check
    _
  $region3: #{tile.58} parent=0 // pred_check_branch
    %3 = sbr.rel (0) target = $region5
  $region4: #{tile.58} parent=0 // pred_region
    _
  $region5: #{tile.58} parent=0 // pred_fallthru
    _
  %v4 = vld [vmem:[%s0] ss:$0 sm:$0xff]
  %5 = vst [vmem:[%s1] sm:$0xf] %v4

// kernel: tile.59
$region0: #{tile.59}
  %s0 = inlined_call_operand.vmem [shape: f32[4,32], index: 0, kind: input, shape index: {}]
  %s1 = inlined_call_operand.vmem [shape: f32[1,128], index: 1, kind: output, shape index: {}]
  $region1: #{tile.59} parent=0
    #allocation0 [shape = 'u8[4096]{0}', space=vmem, size = 0x1000, scoped, tag = 'scoped mem for output reshape']
    #allocation1 [shape = 'u8[4096]{0}', space=vmem, size = 0x1000, scoped, tag = 'scoped mem for input reshape']
    %s3 = sshllo.u32 0, 4
    %v4 = vld [vmem:[%s0] sm:%s3]
    %5 = vst [vmem:[#allocation1] sm:%s3] %v4
    %v6 = vld [vmem:[#allocation1] sm:$0x1]
    %vm7 = vcmask 261120
    %8 = vst.msk [vmem:[#allocation0] sm:$0x1] %vm7, %v6
    %s9 = scalar_lea.vmem [#allocation1], 3
    %v10 = vld [vmem:[%s9] sm:$0x1]
    %11 = vrot.lane.b32.xlu0 %v10, 96
    %v12 = vpop.permute.xlu0 %11
    %vm13 = vcmask 1048320
    %14 = vst.msk [vmem:[#allocation0] sm:$0x1] %vm13, %v12
    %s15 = scalar_lea.vmem [#allocation1], 2
    %v16 = vld [vmem:[%s15] sm:$0x1]
    %17 = vrot.lane.b32.xlu0 %v16, 64
    %v18 = vpop.permute.xlu0 %17
    %vm19 = vcmask 785920
    %20 = vst.msk [vmem:[#allocation0] sm:$0x1] %vm19, %v18
    %s21 = scalar_lea.vmem [#allocation1], 1
    %v22 = vld [vmem:[%s21] sm:$0x1]
    %23 = vrot.lane.b32.xlu0 %v22, 32
    %v24 = vpop.permute.xlu0 %23
    %vm25 = vcmask 523520
    %26 = vst.msk [vmem:[#allocation0] sm:$0x1] %vm25, %v24
    %s28 = sshllo.u32 0, 1
    %v30 = vld [vmem:[#allocation0] sm:%s28]
    %s31 = sshllo.u32 0, 1
    %32 = vst [vmem:[%s1] sm:%s31] %v30

// kernel: gnn_encoder.11
$region0: #{gnn_encoder.11}
  #allocation0 [shape = 'u32[]', space=smem, size = 0x4, offset = 0x4, fixed_abs, tag = 'smem constant byte address 0x4 - core index']
  #allocation1 [shape = 'u32[144,128]{1,0:T(1,128)}', space=vmem, size = 0x12000, scoped, tag = 'internal scratch']
  %s0 = inlined_call_operand.vmem [shape: f32[32,8], index: 0, kind: input, shape index: {}]
  %s1 = inlined_call_operand.vmem [shape: f32[8,128], index: 1, kind: input, shape index: {}]
  %s2 = inlined_call_operand.vmem [shape: f32[1,128], index: 2, kind: input, shape index: {}]
  %s3 = inlined_call_operand.vmem [shape: f32[32,128], index: 3, kind: output, shape index: {}]
  %s4 = sld [smem:[#allocation0]]
  $region45: #{gnn_encoder.11} parent=0
    _
  %s6 = ssub.s32 1, %s4
  %s7 = scalar_select 0, %s6, %s4
  loop: start=0, step=1, limit=4
  $region2: #{gnn_encoder.11} parent=0 // loop_pre_header
    _
  $region3: #{gnn_encoder.11} parent=0 // loop_header
    %s9 = sphi 0, %s13
    %p10 = scmp.ge.s32.totalorder %s9, 4
    %s19 = sphi 0, %s21
    %s22 = sphi 0, %s19
    %s23 = sphi 0, %s22
    %s39 = sphi 0, %s23
    %s43 = sphi 0, %s43
    %s45 = sphi 0, %s43
    %s46 = sphi 0, %s45
    %s60 = sphi 0, %s46
    %s64 = sphi 0, %s64
    %s66 = sphi 0, %s64
    %s67 = sphi 0, %s66
    %s81 = sphi 0, %s67
    %s87 = sphi 0, %s89
    %s90 = sphi 0, %s87
    %s91 = sphi 0, %s90
    %s107 = sphi 0, %s91
  $region4: #{gnn_encoder.11} parent=0 // loop_header_branch
    %12 = sbr.rel (%p10) target = $region8
  $region5: #{gnn_encoder.11} parent=0 // loop_body
    %s14 = ssub.s32 %s9, 1
    %s15 = ssub.s32 %s9, 2
    %s16 = sadd.s32 %s9, 1
    %s17 = ssub.s32 %s9, %s16
    %p18 = scmp.eq.s32.totalorder %s17, 0
    %s20 = sadd.s32 %s19, 1
    %s21 = scalar_select %p18, %s19, %s20
    %p24 = pneg %p18
    %p25 = scmp.eq.s32.totalorder %s9, 1
    %p26 = por %p24, %p25
    %p27 = scmp.ne.s32.totalorder %s19, %s22
    %p28 = scmp.eq.s32.totalorder %s9, 0
    %p29 = por %p27, %p28
    %p30 = scmp.ne.s32.totalorder %s19, %s22
    %p31 = scmp.eq.s32.totalorder %s14, 1
    %p32 = por %p30, %p31
    %p33 = scmp.ne.s32.totalorder %s22, %s23
    %p34 = scmp.eq.s32.totalorder %s14, 0
    %p35 = por %p33, %p34
    %p36 = scmp.ne.s32.totalorder %s22, %s23
    %p37 = scmp.eq.s32.totalorder %s15, 1
    %p38 = por %p36, %p37
    %p40 = scmp.ne.s32.totalorder %s23, %s39
    %p41 = scmp.eq.s32.totalorder %s15, 0
    %p42 = por %p40, %p41
    %s44 = sadd.s32 %s43, 1
    %p47 = scmp.eq.s32.totalorder %s9, 1
    %p48 = scmp.ne.s32.totalorder %s43, %s45
    %p49 = scmp.eq.s32.totalorder %s9, 0
    %p50 = por %p48, %p49
    %p51 = scmp.ne.s32.totalorder %s43, %s45
    %p52 = scmp.eq.s32.totalorder %s14, 1
    %p53 = por %p51, %p52
    %p54 = scmp.ne.s32.totalorder %s45, %s46
    %p55 = scmp.eq.s32.totalorder %s14, 0
    %p56 = por %p54, %p55
    %p57 = scmp.ne.s32.totalorder %s45, %s46
    %p58 = scmp.eq.s32.totalorder %s15, 1
    %p59 = por %p57, %p58
    %p61 = scmp.ne.s32.totalorder %s46, %s60
    %p62 = scmp.eq.s32.totalorder %s15, 0
    %p63 = por %p61, %p62
    %s65 = sadd.s32 %s64, 1
    %p68 = scmp.eq.s32.totalorder %s9, 1
    %p69 = scmp.ne.s32.totalorder %s64, %s66
    %p70 = scmp.eq.s32.totalorder %s9, 0
    %p71 = por %p69, %p70
    %p72 = scmp.ne.s32.totalorder %s64, %s66
    %p73 = scmp.eq.s32.totalorder %s14, 1
    %p74 = por %p72, %p73
    %p75 = scmp.ne.s32.totalorder %s66, %s67
    %p76 = scmp.eq.s32.totalorder %s14, 0
    %p77 = por %p75, %p76
    %p78 = scmp.ne.s32.totalorder %s66, %s67
    %p79 = scmp.eq.s32.totalorder %s15, 1
    %p80 = por %p78, %p79
    %p82 = scmp.ne.s32.totalorder %s67, %s81
    %p83 = scmp.eq.s32.totalorder %s15, 0
    %p84 = por %p82, %p83
    %s85 = ssub.s32 %s9, %s16
    %p86 = scmp.eq.s32.totalorder %s85, 0
    %s88 = sadd.s32 %s87, 1
    %s89 = scalar_select %p86, %s87, %s88
    %p92 = pneg %p86
    %p93 = scmp.eq.s32.totalorder %s9, 1
    %p94 = por %p92, %p93
    %p95 = scmp.ne.s32.totalorder %s87, %s90
    %p96 = scmp.eq.s32.totalorder %s9, 0
    %p97 = por %p95, %p96
    %p98 = scmp.ne.s32.totalorder %s87, %s90
    %p99 = scmp.eq.s32.totalorder %s14, 1
    %p100 = por %p98, %p99
    %p101 = scmp.ne.s32.totalorder %s90, %s91
    %p102 = scmp.eq.s32.totalorder %s14, 0
    %p103 = por %p101, %p102
    %p104 = scmp.ne.s32.totalorder %s90, %s91
    %p105 = scmp.eq.s32.totalorder %s15, 1
    %p106 = por %p104, %p105
    %p108 = scmp.ne.s32.totalorder %s91, %s107
    %p109 = scmp.eq.s32.totalorder %s15, 0
    %p110 = por %p108, %p109
    %p111 = scmp.le.s32.totalorder 1, %s9
    %p112 = scmp.lt.s32.totalorder %s9, 3
    %p113 = pnand %p111, %p112
    %p114 = pneg %p113
    // Predicated region
    $region9: #{gnn_encoder.11} parent=5 // pred_check
      _
    $region10: #{gnn_encoder.11} parent=5 // pred_check_branch
      %116 = sbr.rel (%p113) target = $region12
    $region11: #{gnn_encoder.11} parent=5 // pred_region
      %s117 = ssub.s32 %s9, 1
      // Predicated region
      $region13: #{gnn_encoder.11} parent=11 // pred_check
        %p118 = pneg %p56
      $region14: #{gnn_encoder.11} parent=11 // pred_check_branch
        %120 = sbr.rel (%p118) target = $region16
      $region15: #{gnn_encoder.11} parent=11 // pred_region
        _
      $region16: #{gnn_encoder.11} parent=11 // pred_fallthru
        _
      // Predicated region
      $region17: #{gnn_encoder.11} parent=11 // pred_check
        %p121 = pneg %p77
      $region18: #{gnn_encoder.11} parent=11 // pred_check_branch
        %123 = sbr.rel (%p121) target = $region20
      $region19: #{gnn_encoder.11} parent=11 // pred_region
        _
      $region20: #{gnn_encoder.11} parent=11 // pred_fallthru
        _
    $region12: #{gnn_encoder.11} parent=5 // pred_fallthru
      _
    %p124 = scmp.lt.s32.totalorder %s9, 2
    // Predicated region
    $region21: #{gnn_encoder.11} parent=5 // pred_check
      %p125 = pneg %p124
    $region22: #{gnn_encoder.11} parent=5 // pred_check_branch
      %127 = sbr.rel (%p125) target = $region24
    $region23: #{gnn_encoder.11} parent=5 // pred_region
      // Predicated region
      $region25: #{gnn_encoder.11} parent=23 // pred_check
        %p128 = pneg %p29
      $region26: #{gnn_encoder.11} parent=23 // pred_check_branch
        %130 = sbr.rel (%p128) target = $region28
      $region27: #{gnn_encoder.11} parent=23 // pred_region
        %s131 = smul.u32 2, %s9
        %p132 = scmp.lt.s32.totalorder %s131, 3
        %s133 = scalar_select %p132, %s131, 3
        %s134 = smul.addr %s133, 8
        %s135 = scalar_lea.vmem %s0, %s134
        %s136 = smul.u32 2, %s9
      $region28: #{gnn_encoder.11} parent=23 // pred_fallthru
        _
    $region24: #{gnn_encoder.11} parent=5 // pred_fallthru
      _
    %p137 = scmp.le.s32.totalorder 1, %s9
    %p138 = scmp.lt.s32.totalorder %s9, 3
    %p139 = pnand %p137, %p138
    %p140 = pneg %p139
    // Predicated region
    $region29: #{gnn_encoder.11} parent=5 // pred_check
      _
    $region30: #{gnn_encoder.11} parent=5 // pred_check_branch
      %142 = sbr.rel (%p139) target = $region32
    $region31: #{gnn_encoder.11} parent=5 // pred_region
      %s143 = ssub.s32 %s9, 1
      %s144 = smul.u32 2, %s14
      %p145 = scmp.lt.s32.totalorder %s144, 3
      %s146 = scalar_select %p145, %s144, 3
      %s147 = smul.addr %s146, 8
      %s148 = scalar_lea.vmem %s0, %s147
      %p149 = pneg %p35
      %p150 = pneg %p32
      %p151 = pneg %p56
      %p152 = pneg %p53
      %p153 = pneg %p77
      %p154 = pneg %p74
      %p155 = pneg %p103
      %p156 = pneg %p100
      %s157 = smul.u32 2, %s14
      %p158 = scmp.lt.s32.totalorder %s157, 3
      %s159 = scalar_select %p158, %s157, 3
      %s160 = smul.addr %s159, 8
      %s161 = scalar_lea.vmem %s3, %s160
      %s162 = smul.u32 2, %s14
      %p163 = scmp.lt.s32.totalorder %s162, 3
      %s164 = scalar_select %p163, %s162, 3
      %s165 = smul.addr %s164, 8
      %s166 = scalar_lea.vmem %s0, %s165
      %s167 = smul.u32 2, %s14
      %s168 = smul.u32 2, %s14
      %p169 = scmp.lt.s32.totalorder %s168, 3
      %s170 = scalar_select %p169, %s168, 3
      %s171 = smul.addr %s170, 8
      %s172 = scalar_lea.vmem %s3, %s171
      %s173 = smul.u32 2, %s14
      %v174 = vld [vmem:[%s166] sm:$0xff]
      %v175 = vld [vmem:[%s166 + $0x8] sm:$0xff]
      %v176 = vld [vmem:[%s1] sm:$0xff]
      %v177 = vld [vmem:[%s2] sm:$0x1]
      %v179 = vlaneseq
      %v180 = vshrl.u32 %v179, 7
      %v181 = vsub.s32 0, %v180
      %v182 = vrot.slane %v177, %v181
      %vm184 = vcmask 64512
      %v186 = vsel %vm184, %v174, 0
      %v189 = vsel %vm184, %v175, 0
      %191 = vmatprep.subr.mxu0 0.0
      %192 = vmatpush1.msra.mxu0 %v176
      %193 = vmatprep.subr.mxu0 0.0
      %194 = vmatpush1.msra.mxu0 0.0
      %195 = vmatprep.subr.mxu0 0.0
      %196 = vmatpush1.msra.mxu0 0.0
      %197 = vmatprep.subr.mxu0 0.0
      %198 = vmatpush1.msra.mxu0 0.0
      %199 = vmatprep.subr.mxu0 0.0
      %200 = vmatpush1.msra.mxu0 0.0
      %201 = vmatprep.subr.mxu0 0.0
      %202 = vmatpush1.msra.mxu0 0.0
      %203 = vmatprep.subr.mxu0 0.0
      %204 = vmatpush1.msra.mxu0 0.0
      %205 = vmatprep.subr.mxu0 0.0
      %206 = vmatpush1.msra.mxu0 0.0
      %207 = vmatprep.subr.mxu0 0.0
      %208 = vmatpush1.msra.mxu0 0.0
      %209 = vmatprep.subr.mxu0 0.0
      %210 = vmatpush1.msra.mxu0 0.0
      %211 = vmatprep.subr.mxu0 0.0
      %212 = vmatpush1.msra.mxu0 0.0
      %213 = vmatprep.subr.mxu0 0.0
      %214 = vmatpush1.msra.mxu0 0.0
      %215 = vmatprep.subr.mxu0 0.0
      %216 = vmatpush1.msra.mxu0 0.0
      %217 = vmatprep.subr.mxu0 0.0
      %218 = vmatpush1.msra.mxu0 0.0
      %219 = vmatprep.subr.mxu0 0.0
      %220 = vmatpush1.msra.mxu0 0.0
      %221 = vmatprep.subr.mxu0 0.0
      %222 = vmatpush1.msra.mxu0 0.0
      %223 = vmatprep.subr.mxu0 0.0
      %224 = vmatpush1.msra.mxu0 0.0
      %225 = vmatprep.subr.mxu0 0.0
      %226 = vmatpush1.msra.mxu0 0.0
      %227 = vmatprep.subr.mxu0 0.0
      %228 = vmatpush1.msra.mxu0 0.0
      %229 = vmatprep.subr.mxu0 0.0
      %230 = vmatpush1.msra.mxu0 0.0
      %231 = vmatprep.subr.mxu0 0.0
      %232 = vmatpush1.msra.mxu0 0.0
      %233 = vmatprep.subr.mxu0 0.0
      %234 = vmatpush1.msra.mxu0 0.0
      %235 = vmatprep.subr.mxu0 0.0
      %236 = vmatpush1.msra.mxu0 0.0
      %237 = vmatprep.subr.mxu0 0.0
      %238 = vmatpush1.msra.mxu0 0.0
      %239 = vmatprep.subr.mxu0 0.0
      %240 = vmatpush1.msra.mxu0 0.0
      %241 = vmatprep.subr.mxu0 0.0
      %242 = vmatpush1.msra.mxu0 0.0
      %243 = vmatprep.subr.mxu0 0.0
      %244 = vmatpush1.msra.mxu0 0.0
      %245 = vmatprep.subr.mxu0 0.0
      %246 = vmatpush1.msra.mxu0 0.0
      %247 = vmatprep.subr.mxu0 0.0
      %248 = vmatpush1.msra.mxu0 0.0
      %249 = vmatprep.subr.mxu0 0.0
      %250 = vmatpush1.msra.mxu0 0.0
      %251 = vmatprep.subr.mxu0 0.0
      %252 = vmatpush1.msra.mxu0 0.0
      %253 = vmatprep.subr.mxu0 0.0
      %254 = vmatpush1.msra.mxu0 0.0
      %255 = vmatprep.mubr.f32.mxu0 0.0
      %256 = vmatmul.mubr.f32.gmra.mrb[0].mxu0 %v186
      %v257 = vpop.f32.mrb[0].mxu0
      %v258 = vadd.f32 %v182, %v257
      %v259 = vpop.f32.mrb[0].mxu0
      %260 = vmatprep.mubr.f32.mxu0 0.0
      %261 = vmatmul.mubr.f32.gmra.mrb[0].mxu0 %v189
      %v262 = vpop.f32.mrb[0].mxu0
      %v263 = vadd.f32 %v182, %v262
      %v264 = vpop.f32.mrb[0].mxu0
      %265 = vdwg.mxu0
      %266 = vst [vmem:[%s172] sm:$0xff] %v258
      %267 = vst [vmem:[%s172 + $0x8] sm:$0xff] %v263
      %s268 = smul.u32 2, %s14
      %p269 = scmp.lt.s32.totalorder %s268, 3
      %s270 = scalar_select %p269, %s268, 3
      %s271 = smul.addr %s270, 8
      %s272 = scalar_lea.vmem %s3, %s271
      // Predicated region
      $region33: #{gnn_encoder.11} parent=31 // pred_check
        %p273 = pneg %p100
      $region34: #{gnn_encoder.11} parent=31 // pred_check_branch
        %275 = sbr.rel (%p273) target = $region36
      $region35: #{gnn_encoder.11} parent=31 // pred_region
        %s276 = smul.u32 2, %s14
      $region36: #{gnn_encoder.11} parent=31 // pred_fallthru
        _
    $region32: #{gnn_encoder.11} parent=5 // pred_fallthru
      _
    %p277 = scmp.le.s32.totalorder 2, %s9
    // Predicated region
    $region37: #{gnn_encoder.11} parent=5 // pred_check
      %p278 = pneg %p277
    $region38: #{gnn_encoder.11} parent=5 // pred_check_branch
      %280 = sbr.rel (%p278) target = $region40
    $region39: #{gnn_encoder.11} parent=5 // pred_region
      %s281 = ssub.s32 %s9, 2
      // Predicated region
      $region41: #{gnn_encoder.11} parent=39 // pred_check
        %p282 = pneg %p106
      $region42: #{gnn_encoder.11} parent=39 // pred_check_branch
        %284 = sbr.rel (%p282) target = $region44
      $region43: #{gnn_encoder.11} parent=39 // pred_region
        %s285 = smul.u32 2, %s15
        %p286 = scmp.lt.s32.totalorder %s285, 3
        %s287 = scalar_select %p286, %s285, 3
        %s288 = smul.addr %s287, 8
        %s289 = scalar_lea.vmem %s3, %s288
      $region44: #{gnn_encoder.11} parent=39 // pred_fallthru
        _
    $region40: #{gnn_encoder.11} parent=5 // pred_fallthru
      _
  $region6: #{gnn_encoder.11} parent=0 // loop_footer
    %s13 = sadd.s32 1, %s9
  $region7: #{gnn_encoder.11} parent=0 // loop_footer_branch
    %8 = sbr.rel target = $region3
  $region8: #{gnn_encoder.11} parent=0 // loop_exit
    _

// kernel: gnn_encoder.14
$region0: #{gnn_encoder.14}
  #allocation0 [shape = 'u32[]', space=smem, size = 0x4, offset = 0x4, fixed_abs, tag = 'smem constant byte address 0x4 - core index']
  #allocation1 [shape = 'u32[144,128]{1,0:T(1,128)}', space=vmem, size = 0x12000, scoped, tag = 'internal scratch']
  %s0 = inlined_call_operand.vmem [shape: f32[4,128], index: 0, kind: input, shape index: {}]
  %s1 = inlined_call_operand.vmem [shape: f32[1,128], index: 1, kind: input, shape index: {}]
  %s2 = inlined_call_operand.vmem [shape: f32[1,128], index: 2, kind: input, shape index: {}]
  %s3 = inlined_call_operand.vmem [shape: f32[4,128], index: 3, kind: input, shape index: {}]
  %s4 = inlined_call_operand.vmem [shape: f32[4,128], index: 4, kind: output, shape index: {}]
  %s5 = sld [smem:[#allocation0]]
  $region26: #{gnn_encoder.14} parent=0
    _
  %s7 = ssub.s32 1, %s5
  %s8 = scalar_select 0, %s7, %s5
  // Predicated region
  $region2: #{gnn_encoder.14} parent=0 // pred_check
    _
  $region3: #{gnn_encoder.14} parent=0 // pred_check_branch
    %10 = sbr.rel (0) target = $region5
  $region4: #{gnn_encoder.14} parent=0 // pred_region
    _
  $region5: #{gnn_encoder.14} parent=0 // pred_fallthru
    _
  // Predicated region
  $region6: #{gnn_encoder.14} parent=0 // pred_check
    _
  $region7: #{gnn_encoder.14} parent=0 // pred_check_branch
    %12 = sbr.rel (0) target = $region9
  $region8: #{gnn_encoder.14} parent=0 // pred_region
    _
  $region9: #{gnn_encoder.14} parent=0 // pred_fallthru
    _
  // Predicated region
  $region10: #{gnn_encoder.14} parent=0 // pred_check
    _
  $region11: #{gnn_encoder.14} parent=0 // pred_check_branch
    %14 = sbr.rel (0) target = $region13
  $region12: #{gnn_encoder.14} parent=0 // pred_region
    _
  $region13: #{gnn_encoder.14} parent=0 // pred_fallthru
    _
  // Predicated region
  $region14: #{gnn_encoder.14} parent=0 // pred_check
    _
  $region15: #{gnn_encoder.14} parent=0 // pred_check_branch
    %16 = sbr.rel (0) target = $region17
  $region16: #{gnn_encoder.14} parent=0 // pred_region
    _
  $region17: #{gnn_encoder.14} parent=0 // pred_fallthru
    _
  %v17 = vld [vmem:[%s0] sm:$0xf]
  %v18 = vld [vmem:[%s1] sm:$0x1]
  %v20 = vlaneseq
  %v21 = vshrl.u32 %v20, 7
  %v22 = vsub.s32 0, %v21
  %v23 = vrot.slane %v18, %v22
  %v25 = vmul.f32 %v17, %v23
  %v26 = vld [vmem:[%s2] sm:$0x1]
  %v28 = vlaneseq
  %v29 = vshrl.u32 %v28, 7
  %v30 = vsub.s32 0, %v29
  %v31 = vrot.slane %v26, %v30
  %v33 = vadd.f32 %v25, %v31
  %v34 = vld [vmem:[%s3] sm:$0xf]
  %v35 = vmax.f32 %v33, 0.0
  %v36 = vadd.f32 %v34, %v35
  %37 = vst [vmem:[%s4] sm:$0xf] %v36
  // Predicated region
  $region18: #{gnn_encoder.14} parent=0 // pred_check
    _
  $region19: #{gnn_encoder.14} parent=0 // pred_check_branch
    %39 = sbr.rel (0) target = $region21
  $region20: #{gnn_encoder.14} parent=0 // pred_region
    _
  $region21: #{gnn_encoder.14} parent=0 // pred_fallthru
    _
  // Predicated region
  $region22: #{gnn_encoder.14} parent=0 // pred_check
    _
  $region23: #{gnn_encoder.14} parent=0 // pred_check_branch
    %41 = sbr.rel (0) target = $region25
  $region24: #{gnn_encoder.14} parent=0 // pred_region
    _
  $region25: #{gnn_encoder.14} parent=0 // pred_fallthru
    _

// kernel: gnn_encoder.13
$region0: #{gnn_encoder.13}
  #allocation0 [shape = 'u32[]', space=smem, size = 0x4, offset = 0x4, fixed_abs, tag = 'smem constant byte address 0x4 - core index']
  #allocation1 [shape = 'u32[144,128]{1,0:T(1,128)}', space=vmem, size = 0x12000, scoped, tag = 'internal scratch']
  %s0 = inlined_call_operand.vmem [shape: f32[2,16,128], index: 0, kind: input, shape index: {}]
  %s1 = inlined_call_operand.vmem [shape: f32[2,8,128], index: 1, kind: input, shape index: {}]
  %s2 = inlined_call_operand.vmem [shape: f32[2,2,128], index: 2, kind: input, shape index: {}]
  %s3 = inlined_call_operand.vmem [shape: f32[2,2,128], index: 3, kind: input, shape index: {}]
  %s4 = inlined_call_operand.vmem [shape: f32[128,128], index: 4, kind: input, shape index: {}]
  %s5 = inlined_call_operand.vmem [shape: f32[1,128], index: 5, kind: input, shape index: {}]
  %s6 = inlined_call_operand.vmem [shape: f32[2,8,32], index: 6, kind: output, shape index: {0}]
  %s7 = inlined_call_operand.vmem [shape: f32[2,1,4,32], index: 7, kind: output, shape index: {1}]
  %8 = xla_tuple %s6, %s7
  %s9 = sld [smem:[#allocation0]]
  $region65: #{gnn_encoder.13} parent=0
    _
  %s11 = ssub.s32 1, %s9
  %s12 = scalar_select 0, %s11, %s9
  loop: start=0, step=1, limit=4
  $region2: #{gnn_encoder.13} parent=0 // loop_pre_header
    _
  $region3: #{gnn_encoder.13} parent=0 // loop_header
    %s14 = sphi 0, %s18
    %p15 = scmp.ge.s32.totalorder %s14, 4
    %s21 = sphi 0, %s33
    %s22 = sphi 0, %s29
    %s23 = sphi 0, %s21
    %s24 = sphi 0, %s22
    %s25 = sphi 0, %s23
    %s26 = sphi 0, %s24
    %s38 = sphi 0, %s40
    %s41 = sphi 0, %s38
    %s42 = sphi 0, %s41
    %s58 = sphi 0, %s42
    %s64 = sphi 0, %s66
    %s67 = sphi 0, %s64
    %s68 = sphi 0, %s67
    %s84 = sphi 0, %s68
    %s90 = sphi 0, %s92
    %s93 = sphi 0, %s90
    %s94 = sphi 0, %s93
    %s110 = sphi 0, %s94
    %s116 = sphi 0, %s118
    %s119 = sphi 0, %s116
    %s120 = sphi 0, %s119
    %s136 = sphi 0, %s120
    %s140 = sphi 0, %s140
    %s142 = sphi 0, %s140
    %s143 = sphi 0, %s142
    %s157 = sphi 0, %s143
    %s161 = sphi 0, %s161
    %s163 = sphi 0, %s161
    %s164 = sphi 0, %s163
    %s178 = sphi 0, %s164
    %s186 = sphi 0, %s188
    %s189 = sphi 0, %s186
    %s190 = sphi 0, %s189
    %s206 = sphi 0, %s190
    %s214 = sphi 0, %s216
    %s217 = sphi 0, %s214
    %s218 = sphi 0, %s217
    %s234 = sphi 0, %s218
  $region4: #{gnn_encoder.13} parent=0 // loop_header_branch
    %17 = sbr.rel (%p15) target = $region8
  $region5: #{gnn_encoder.13} parent=0 // loop_body
    %s19 = ssub.s32 %s14, 1
    %s20 = ssub.s32 %s14, 2
    %s27 = sadd.s32 1, %s22
    %p28 = scmp.ge.s32.totalorder %s27, 1
    %s29 = scalar_select %p28, 0, %s27
    %s30 = sadd.s32 1, %s21
    %s31 = scalar_select %p28, %s30, %s21
    %p32 = scmp.ge.s32.totalorder %s31, 2
    %s33 = scalar_select %p32, 0, %s31
    %s34 = ssub.s32 %s21, %s33
    %s35 = ssub.s32 %s22, %s29
    %s36 = sor.u32 %s34, %s35
    %p37 = scmp.eq.s32.totalorder %s36, 0
    %s39 = sadd.s32 %s38, 1
    %s40 = scalar_select %p37, %s38, %s39
    %p43 = pneg %p37
    %p44 = scmp.eq.s32.totalorder %s14, 1
    %p45 = por %p43, %p44
    %p46 = scmp.ne.s32.totalorder %s38, %s41
    %p47 = scmp.eq.s32.totalorder %s14, 0
    %p48 = por %p46, %p47
    %p49 = scmp.ne.s32.totalorder %s38, %s41
    %p50 = scmp.eq.s32.totalorder %s19, 1
    %p51 = por %p49, %p50
    %p52 = scmp.ne.s32.totalorder %s41, %s42
    %p53 = scmp.eq.s32.totalorder %s19, 0
    %p54 = por %p52, %p53
    %p55 = scmp.ne.s32.totalorder %s41, %s42
    %p56 = scmp.eq.s32.totalorder %s20, 1
    %p57 = por %p55, %p56
    %p59 = scmp.ne.s32.totalorder %s42, %s58
    %p60 = scmp.eq.s32.totalorder %s20, 0
    %p61 = por %p59, %p60
    %s62 = ssub.s32 %s21, %s33
    %p63 = scmp.eq.s32.totalorder %s62, 0
    %s65 = sadd.s32 %s64, 1
    %s66 = scalar_select %p63, %s64, %s65
    %p69 = pneg %p63
    %p70 = scmp.eq.s32.totalorder %s14, 1
    %p71 = por %p69, %p70
    %p72 = scmp.ne.s32.totalorder %s64, %s67
    %p73 = scmp.eq.s32.totalorder %s14, 0
    %p74 = por %p72, %p73
    %p75 = scmp.ne.s32.totalorder %s64, %s67
    %p76 = scmp.eq.s32.totalorder %s19, 1
    %p77 = por %p75, %p76
    %p78 = scmp.ne.s32.totalorder %s67, %s68
    %p79 = scmp.eq.s32.totalorder %s19, 0
    %p80 = por %p78, %p79
    %p81 = scmp.ne.s32.totalorder %s67, %s68
    %p82 = scmp.eq.s32.totalorder %s20, 1
    %p83 = por %p81, %p82
    %p85 = scmp.ne.s32.totalorder %s68, %s84
    %p86 = scmp.eq.s32.totalorder %s20, 0
    %p87 = por %p85, %p86
    %s88 = ssub.s32 %s21, %s33
    %p89 = scmp.eq.s32.totalorder %s88, 0
    %s91 = sadd.s32 %s90, 1
    %s92 = scalar_select %p89, %s90, %s91
    %p95 = pneg %p89
    %p96 = scmp.eq.s32.totalorder %s14, 1
    %p97 = por %p95, %p96
    %p98 = scmp.ne.s32.totalorder %s90, %s93
    %p99 = scmp.eq.s32.totalorder %s14, 0
    %p100 = por %p98, %p99
    %p101 = scmp.ne.s32.totalorder %s90, %s93
    %p102 = scmp.eq.s32.totalorder %s19, 1
    %p103 = por %p101, %p102
    %p104 = scmp.ne.s32.totalorder %s93, %s94
    %p105 = scmp.eq.s32.totalorder %s19, 0
    %p106 = por %p104, %p105
    %p107 = scmp.ne.s32.totalorder %s93, %s94
    %p108 = scmp.eq.s32.totalorder %s20, 1
    %p109 = por %p107, %p108
    %p111 = scmp.ne.s32.totalorder %s94, %s110
    %p112 = scmp.eq.s32.totalorder %s20, 0
    %p113 = por %p111, %p112
    %s114 = ssub.s32 %s21, %s33
    %p115 = scmp.eq.s32.totalorder %s114, 0
    %s117 = sadd.s32 %s116, 1
    %s118 = scalar_select %p115, %s116, %s117
    %p121 = pneg %p115
    %p122 = scmp.eq.s32.totalorder %s14, 1
    %p123 = por %p121, %p122
    %p124 = scmp.ne.s32.totalorder %s116, %s119
    %p125 = scmp.eq.s32.totalorder %s14, 0
    %p126 = por %p124, %p125
    %p127 = scmp.ne.s32.totalorder %s116, %s119
    %p128 = scmp.eq.s32.totalorder %s19, 1
    %p129 = por %p127, %p128
    %p130 = scmp.ne.s32.totalorder %s119, %s120
    %p131 = scmp.eq.s32.totalorder %s19, 0
    %p132 = por %p130, %p131
    %p133 = scmp.ne.s32.totalorder %s119, %s120
    %p134 = scmp.eq.s32.totalorder %s20, 1
    %p135 = por %p133, %p134
    %p137 = scmp.ne.s32.totalorder %s120, %s136
    %p138 = scmp.eq.s32.totalorder %s20, 0
    %p139 = por %p137, %p138
    %s141 = sadd.s32 %s140, 1
    %p144 = scmp.eq.s32.totalorder %s14, 1
    %p145 = scmp.ne.s32.totalorder %s140, %s142
    %p146 = scmp.eq.s32.totalorder %s14, 0
    %p147 = por %p145, %p146
    %p148 = scmp.ne.s32.totalorder %s140, %s142
    %p149 = scmp.eq.s32.totalorder %s19, 1
    %p150 = por %p148, %p149
    %p151 = scmp.ne.s32.totalorder %s142, %s143
    %p152 = scmp.eq.s32.totalorder %s19, 0
    %p153 = por %p151, %p152
    %p154 = scmp.ne.s32.totalorder %s142, %s143
    %p155 = scmp.eq.s32.totalorder %s20, 1
    %p156 = por %p154, %p155
    %p158 = scmp.ne.s32.totalorder %s143, %s157
    %p159 = scmp.eq.s32.totalorder %s20, 0
    %p160 = por %p158, %p159
    %s162 = sadd.s32 %s161, 1
    %p165 = scmp.eq.s32.totalorder %s14, 1
    %p166 = scmp.ne.s32.totalorder %s161, %s163
    %p167 = scmp.eq.s32.totalorder %s14, 0
    %p168 = por %p166, %p167
    %p169 = scmp.ne.s32.totalorder %s161, %s163
    %p170 = scmp.eq.s32.totalorder %s19, 1
    %p171 = por %p169, %p170
    %p172 = scmp.ne.s32.totalorder %s163, %s164
    %p173 = scmp.eq.s32.totalorder %s19, 0
    %p174 = por %p172, %p173
    %p175 = scmp.ne.s32.totalorder %s163, %s164
    %p176 = scmp.eq.s32.totalorder %s20, 1
    %p177 = por %p175, %p176
    %p179 = scmp.ne.s32.totalorder %s164, %s178
    %p180 = scmp.eq.s32.totalorder %s20, 0
    %p181 = por %p179, %p180
    %s182 = ssub.s32 %s21, %s33
    %s183 = ssub.s32 %s22, %s29
    %s184 = sor.u32 %s182, %s183
    %p185 = scmp.eq.s32.totalorder %s184, 0
    %s187 = sadd.s32 %s186, 1
    %s188 = scalar_select %p185, %s186, %s187
    %p191 = pneg %p185
    %p192 = scmp.eq.s32.totalorder %s14, 1
    %p193 = por %p191, %p192
    %p194 = scmp.ne.s32.totalorder %s186, %s189
    %p195 = scmp.eq.s32.totalorder %s14, 0
    %p196 = por %p194, %p195
    %p197 = scmp.ne.s32.totalorder %s186, %s189
    %p198 = scmp.eq.s32.totalorder %s19, 1
    %p199 = por %p197, %p198
    %p200 = scmp.ne.s32.totalorder %s189, %s190
    %p201 = scmp.eq.s32.totalorder %s19, 0
    %p202 = por %p200, %p201
    %p203 = scmp.ne.s32.totalorder %s189, %s190
    %p204 = scmp.eq.s32.totalorder %s20, 1
    %p205 = por %p203, %p204
    %p207 = scmp.ne.s32.totalorder %s190, %s206
    %p208 = scmp.eq.s32.totalorder %s20, 0
    %p209 = por %p207, %p208
    %s210 = ssub.s32 %s21, %s33
    %s211 = ssub.s32 %s22, %s29
    %s212 = sor.u32 %s210, %s211
    %p213 = scmp.eq.s32.totalorder %s212, 0
    %s215 = sadd.s32 %s214, 1
    %s216 = scalar_select %p213, %s214, %s215
    %p219 = pneg %p213
    %p220 = scmp.eq.s32.totalorder %s14, 1
    %p221 = por %p219, %p220
    %p222 = scmp.ne.s32.totalorder %s214, %s217
    %p223 = scmp.eq.s32.totalorder %s14, 0
    %p224 = por %p222, %p223
    %p225 = scmp.ne.s32.totalorder %s214, %s217
    %p226 = scmp.eq.s32.totalorder %s19, 1
    %p227 = por %p225, %p226
    %p228 = scmp.ne.s32.totalorder %s217, %s218
    %p229 = scmp.eq.s32.totalorder %s19, 0
    %p230 = por %p228, %p229
    %p231 = scmp.ne.s32.totalorder %s217, %s218
    %p232 = scmp.eq.s32.totalorder %s20, 1
    %p233 = por %p231, %p232
    %p235 = scmp.ne.s32.totalorder %s218, %s234
    %p236 = scmp.eq.s32.totalorder %s20, 0
    %p237 = por %p235, %p236
    %p238 = scmp.le.s32.totalorder 1, %s14
    %p239 = scmp.lt.s32.totalorder %s14, 3
    %p240 = pnand %p238, %p239
    %p241 = pneg %p240
    // Predicated region
    $region9: #{gnn_encoder.13} parent=5 // pred_check
      _
    $region10: #{gnn_encoder.13} parent=5 // pred_check_branch
      %243 = sbr.rel (%p240) target = $region12
    $region11: #{gnn_encoder.13} parent=5 // pred_region
      %s244 = ssub.s32 %s14, 1
      // Predicated region
      $region13: #{gnn_encoder.13} parent=11 // pred_check
        %p245 = pneg %p153
      $region14: #{gnn_encoder.13} parent=11 // pred_check_branch
        %247 = sbr.rel (%p245) target = $region16
      $region15: #{gnn_encoder.13} parent=11 // pred_region
        _
      $region16: #{gnn_encoder.13} parent=11 // pred_fallthru
        _
      // Predicated region
      $region17: #{gnn_encoder.13} parent=11 // pred_check
        %p248 = pneg %p174
      $region18: #{gnn_encoder.13} parent=11 // pred_check_branch
        %250 = sbr.rel (%p248) target = $region20
      $region19: #{gnn_encoder.13} parent=11 // pred_region
        _
      $region20: #{gnn_encoder.13} parent=11 // pred_fallthru
        _
    $region12: #{gnn_encoder.13} parent=5 // pred_fallthru
      _
    %p251 = scmp.lt.s32.totalorder %s14, 2
    // Predicated region
    $region21: #{gnn_encoder.13} parent=5 // pred_check
      %p252 = pneg %p251
    $region22: #{gnn_encoder.13} parent=5 // pred_check_branch
      %254 = sbr.rel (%p252) target = $region24
    $region23: #{gnn_encoder.13} parent=5 // pred_region
      // Predicated region
      $region25: #{gnn_encoder.13} parent=23 // pred_check
        %p255 = pneg %p48
      $region26: #{gnn_encoder.13} parent=23 // pred_check_branch
        %257 = sbr.rel (%p255) target = $region28
      $region27: #{gnn_encoder.13} parent=23 // pred_region
        %s258 = smul.u32 2, %s22
        %p259 = scmp.lt.s32.totalorder %s21, 1
        %s260 = scalar_select %p259, %s21, 1
        %p261 = scmp.lt.s32.totalorder %s258, 1
        %s262 = scalar_select %p261, %s258, 1
        %s263 = smul.addr %s260, 2
        %s264 = sadd.s32 %s262, %s263
        %s265 = smul.addr %s264, 8
        %s266 = scalar_lea.vmem %s0, %s265
        %s267 = smul.u32 2, %s22
      $region28: #{gnn_encoder.13} parent=23 // pred_fallthru
        _
      // Predicated region
      $region29: #{gnn_encoder.13} parent=23 // pred_check
        %p268 = pneg %p74
      $region30: #{gnn_encoder.13} parent=23 // pred_check_branch
        %270 = sbr.rel (%p268) target = $region32
      $region31: #{gnn_encoder.13} parent=23 // pred_region
        %p271 = scmp.lt.s32.totalorder %s21, 1
        %s272 = scalar_select %p271, %s21, 1
        %s273 = smul.addr %s272, 8
        %s274 = scalar_lea.vmem %s1, %s273
      $region32: #{gnn_encoder.13} parent=23 // pred_fallthru
        _
      // Predicated region
      $region33: #{gnn_encoder.13} parent=23 // pred_check
        %p275 = pneg %p100
      $region34: #{gnn_encoder.13} parent=23 // pred_check_branch
        %277 = sbr.rel (%p275) target = $region36
      $region35: #{gnn_encoder.13} parent=23 // pred_region
        %p278 = scmp.lt.s32.totalorder %s21, 1
        %s279 = scalar_select %p278, %s21, 1
        %s280 = smul.addr %s279, 2
        %s281 = scalar_lea.vmem %s2, %s280
      $region36: #{gnn_encoder.13} parent=23 // pred_fallthru
        _
      // Predicated region
      $region37: #{gnn_encoder.13} parent=23 // pred_check
        %p282 = pneg %p126
      $region38: #{gnn_encoder.13} parent=23 // pred_check_branch
        %284 = sbr.rel (%p282) target = $region40
      $region39: #{gnn_encoder.13} parent=23 // pred_region
        %p285 = scmp.lt.s32.totalorder %s21, 1
        %s286 = scalar_select %p285, %s21, 1
        %s287 = smul.addr %s286, 2
        %s288 = scalar_lea.vmem %s3, %s287
      $region40: #{gnn_encoder.13} parent=23 // pred_fallthru
        _
    $region24: #{gnn_encoder.13} parent=5 // pred_fallthru
      _
    %p289 = scmp.le.s32.totalorder 1, %s14
    %p290 = scmp.lt.s32.totalorder %s14, 3
    %p291 = pnand %p289, %p290
    %p292 = pneg %p291
    // Predicated region
    $region41: #{gnn_encoder.13} parent=5 // pred_check
      _
    $region42: #{gnn_encoder.13} parent=5 // pred_check_branch
      %294 = sbr.rel (%p291) target = $region44
    $region43: #{gnn_encoder.13} parent=5 // pred_region
      %s295 = ssub.s32 %s14, 1
      %s296 = smul.u32 2, %s24
      %p297 = scmp.lt.s32.totalorder %s23, 1
      %s298 = scalar_select %p297, %s23, 1
      %p299 = scmp.lt.s32.totalorder %s296, 1
      %s300 = scalar_select %p299, %s296, 1
      %s301 = smul.addr %s298, 2
      %s302 = sadd.s32 %s300, %s301
      %s303 = smul.addr %s302, 8
      %s304 = scalar_lea.vmem %s0, %s303
      %p305 = pneg %p54
      %p306 = pneg %p51
      %p307 = scmp.lt.s32.totalorder %s23, 1
      %s308 = scalar_select %p307, %s23, 1
      %s309 = smul.addr %s308, 8
      %s310 = scalar_lea.vmem %s1, %s309
      %p311 = pneg %p80
      %p312 = pneg %p77
      %p313 = scmp.lt.s32.totalorder %s23, 1
      %s314 = scalar_select %p313, %s23, 1
      %s315 = smul.addr %s314, 2
      %s316 = scalar_lea.vmem %s2, %s315
      %p317 = pneg %p106
      %p318 = pneg %p103
      %p319 = scmp.lt.s32.totalorder %s23, 1
      %s320 = scalar_select %p319, %s23, 1
      %s321 = smul.addr %s320, 2
      %s322 = scalar_lea.vmem %s3, %s321
      %p323 = pneg %p132
      %p324 = pneg %p129
      %p325 = pneg %p153
      %p326 = pneg %p150
      %p327 = pneg %p174
      %p328 = pneg %p171
      %p329 = pneg %p202
      %p330 = pneg %p199
      %p331 = scmp.lt.s32.totalorder %s23, 1
      %s332 = scalar_select %p331, %s23, 1
      %p333 = scmp.lt.s32.totalorder %s24, 0
      %s334 = scalar_select %p333, %s24, 0
      %s335 = sadd.s32 %s334, %s332
      %s336 = smul.addr %s335, 8
      %s337 = scalar_lea.vmem %s6, %s336
      %p338 = pneg %p230
      %p339 = pneg %p227
      %p340 = scmp.lt.s32.totalorder %s23, 1
      %s341 = scalar_select %p340, %s23, 1
      %p342 = scmp.lt.s32.totalorder %s24, 0
      %s343 = scalar_select %p342, %s24, 0
      %s344 = sadd.s32 %s343, %s341
      %s345 = smul.addr %s344, 4
      %s346 = scalar_lea.vmem %s7, %s345
      %s347 = smul.u32 2, %s24
      %p348 = scmp.lt.s32.totalorder %s23, 1
      %s349 = scalar_select %p348, %s23, 1
      %p350 = scmp.lt.s32.totalorder %s347, 1
      %s351 = scalar_select %p350, %s347, 1
      %s352 = smul.addr %s349, 2
      %s353 = sadd.s32 %s351, %s352
      %s354 = smul.addr %s353, 8
      %s355 = scalar_lea.vmem %s0, %s354
      %s356 = smul.u32 2, %s24
      %p357 = scmp.lt.s32.totalorder %s23, 1
      %s358 = scalar_select %p357, %s23, 1
      %s359 = smul.addr %s358, 8
      %s360 = scalar_lea.vmem %s1, %s359
      %p361 = scmp.lt.s32.totalorder %s23, 1
      %s362 = scalar_select %p361, %s23, 1
      %s363 = smul.addr %s362, 2
      %s364 = scalar_lea.vmem %s2, %s363
      %p365 = scmp.lt.s32.totalorder %s23, 1
      %s366 = scalar_select %p365, %s23, 1
      %s367 = smul.addr %s366, 2
      %s368 = scalar_lea.vmem %s3, %s367
      %p369 = scmp.lt.s32.totalorder %s23, 1
      %s370 = scalar_select %p369, %s23, 1
      %p371 = scmp.lt.s32.totalorder %s24, 0
      %s372 = scalar_select %p371, %s24, 0
      %s373 = sadd.s32 %s372, %s370
      %s374 = smul.addr %s373, 8
      %s375 = scalar_lea.vmem %s6, %s374
      %p376 = scmp.lt.s32.totalorder %s23, 1
      %s377 = scalar_select %p376, %s23, 1
      %p378 = scmp.lt.s32.totalorder %s24, 0
      %s379 = scalar_select %p378, %s24, 0
      %s380 = sadd.s32 %s379, %s377
      %s381 = smul.addr %s380, 4
      %s382 = scalar_lea.vmem %s7, %s381
      %s383 = smul.u32 %s24, 8
      %s384 = scalar_lea.vmem %s360, %s383
      %v385 = vld [vmem:[%s384] sm:$0xff]
      %387 = vrot.lane.b32.xlu0 %v385, 32
      %v388 = vpop.permute.xlu0 %387
      %390 = vrot.lane.b32.xlu0 %v385, 64
      %v391 = vpop.permute.xlu0 %390
      %393 = vrot.lane.b32.xlu0 %v385, 96
      %v394 = vpop.permute.xlu0 %393
      %vm396 = vcmask 261120
      %v397 = vsel %vm396, %v388, %v391
      %vm398 = vcmask 523264
      %v399 = vsel %vm398, %v397, %v394
      %vm400 = vcmask 785408
      %v401 = vsel %vm400, %v399, %v385
      %v402 = vld [vmem:[%s355] sm:$0xff]
      %v403 = vld [vmem:[%s355 + $0x8] sm:$0xff]
      %v404 = vld [vmem:[%s4] sm:$0xff]
      %v405 = vld [vmem:[%s4 + $0x8] sm:$0xff]
      %v406 = vld [vmem:[%s4 + $0x10] sm:$0xff]
      %v407 = vld [vmem:[%s4 + $0x18] sm:$0xff]
      %v408 = vld [vmem:[%s4 + $0x20] sm:$0xff]
      %v409 = vld [vmem:[%s4 + $0x28] sm:$0xff]
      %v410 = vld [vmem:[%s4 + $0x30] sm:$0xff]
      %v411 = vld [vmem:[%s4 + $0x38] sm:$0xff]
      %v412 = vld [vmem:[%s4 + $0x40] sm:$0xff]
      %v413 = vld [vmem:[%s4 + $0x48] sm:$0xff]
      %v414 = vld [vmem:[%s4 + $0x50] sm:$0xff]
      %v415 = vld [vmem:[%s4 + $0x58] sm:$0xff]
      %v416 = vld [vmem:[%s4 + $0x60] sm:$0xff]
      %v417 = vld [vmem:[%s4 + $0x68] sm:$0xff]
      %v418 = vld [vmem:[%s4 + $0x70] sm:$0xff]
      %v419 = vld [vmem:[%s4 + $0x78] sm:$0xff]
      %v420 = vld [vmem:[%s5] sm:$0x1]
      %v422 = vlaneseq
      %v423 = vshrl.u32 %v422, 7
      %v424 = vsub.s32 0, %v423
      %v425 = vrot.slane %v420, %v424
      %427 = vmatprep.subr.mxu0 0.0
      %428 = vmatpush1.msra.mxu0 %v404
      %429 = vmatprep.subr.mxu0 0.0
      %430 = vmatpush1.msra.mxu0 %v405
      %431 = vmatprep.subr.mxu0 0.0
      %432 = vmatpush1.msra.mxu0 %v406
      %433 = vmatprep.subr.mxu0 0.0
      %434 = vmatpush1.msra.mxu0 %v407
      %435 = vmatprep.subr.mxu0 0.0
      %436 = vmatpush1.msra.mxu0 %v408
      %437 = vmatprep.subr.mxu0 0.0
      %438 = vmatpush1.msra.mxu0 %v409
      %439 = vmatprep.subr.mxu0 0.0
      %440 = vmatpush1.msra.mxu0 %v410
      %441 = vmatprep.subr.mxu0 0.0
      %442 = vmatpush1.msra.mxu0 %v411
      %443 = vmatprep.subr.mxu0 0.0
      %444 = vmatpush1.msra.mxu0 %v412
      %445 = vmatprep.subr.mxu0 0.0
      %446 = vmatpush1.msra.mxu0 %v413
      %447 = vmatprep.subr.mxu0 0.0
      %448 = vmatpush1.msra.mxu0 %v414
      %449 = vmatprep.subr.mxu0 0.0
      %450 = vmatpush1.msra.mxu0 %v415
      %451 = vmatprep.subr.mxu0 0.0
      %452 = vmatpush1.msra.mxu0 %v416
      %453 = vmatprep.subr.mxu0 0.0
      %454 = vmatpush1.msra.mxu0 %v417
      %455 = vmatprep.subr.mxu0 0.0
      %456 = vmatpush1.msra.mxu0 %v418
      %457 = vmatprep.subr.mxu0 0.0
      %458 = vmatpush1.msra.mxu0 %v419
      %459 = vmatprep.subr.mxu0 0.0
      %460 = vmatpush1.msra.mxu0 0.0
      %461 = vmatprep.subr.mxu0 0.0
      %462 = vmatpush1.msra.mxu0 0.0
      %463 = vmatprep.subr.mxu0 0.0
      %464 = vmatpush1.msra.mxu0 0.0
      %465 = vmatprep.subr.mxu0 0.0
      %466 = vmatpush1.msra.mxu0 0.0
      %467 = vmatprep.subr.mxu0 0.0
      %468 = vmatpush1.msra.mxu0 0.0
      %469 = vmatprep.subr.mxu0 0.0
      %470 = vmatpush1.msra.mxu0 0.0
      %471 = vmatprep.subr.mxu0 0.0
      %472 = vmatpush1.msra.mxu0 0.0
      %473 = vmatprep.subr.mxu0 0.0
      %474 = vmatpush1.msra.mxu0 0.0
      %475 = vmatprep.subr.mxu0 0.0
      %476 = vmatpush1.msra.mxu0 0.0
      %477 = vmatprep.subr.mxu0 0.0
      %478 = vmatpush1.msra.mxu0 0.0
      %479 = vmatprep.subr.mxu0 0.0
      %480 = vmatpush1.msra.mxu0 0.0
      %481 = vmatprep.subr.mxu0 0.0
      %482 = vmatpush1.msra.mxu0 0.0
      %483 = vmatprep.subr.mxu0 0.0
      %484 = vmatpush1.msra.mxu0 0.0
      %485 = vmatprep.subr.mxu0 0.0
      %486 = vmatpush1.msra.mxu0 0.0
      %487 = vmatprep.subr.mxu0 0.0
      %488 = vmatpush1.msra.mxu0 0.0
      %489 = vmatprep.subr.mxu0 0.0
      %490 = vmatpush1.msra.mxu0 0.0
      %491 = vmatprep.mubr.f32.mxu0 0.0
      %492 = vmatmul.mubr.f32.gmra.mrb[0].mxu0 %v402
      %v493 = vpop.f32.mrb[0].mxu0
      %v494 = vadd.f32 %v425, %v493
      %v495 = vpop.f32.mrb[0].mxu0
      %496 = vmatprep.mubr.f32.mxu0 0.0
      %497 = vmatmul.mubr.f32.gmra.mrb[0].mxu0 %v403
      %v498 = vpop.f32.mrb[0].mxu0
      %v499 = vadd.f32 %v425, %v498
      %v500 = vpop.f32.mrb[0].mxu0
      %501 = vdwg.mxu0
      %v504 = vcombine.high %v494, %v494
      %v506 = vunpack.c.l.s4 1983009808
      %v507 = vunpack.c.0.s8 %v506
      %v508 = vlaneseq
      %v509 = vshrl.u32 %v508, 7
      %v510 = vsub.s32 %v507, %v509
      %v511 = vrot.slane %v494, %v510
      %v513 = vunpack.c.l.s4 1983009808
      %v514 = vunpack.c.0.s8 %v513
      %v515 = vlaneseq
      %v516 = vshrl.u32 %v515, 7
      %v517 = vsub.s32 %v514, %v516
      %v518 = vrot.slane %v504, %v517
      %v519 = vcombine.high %v511, %v511
      %v520 = vcombine.high %v518, %v518
      %v521 = vcombine.high %v499, %v499
      %v523 = vunpack.c.l.s4 1983009808
      %v524 = vunpack.c.0.s8 %v523
      %v525 = vlaneseq
      %v526 = vshrl.u32 %v525, 7
      %v527 = vsub.s32 %v524, %v526
      %v528 = vrot.slane %v499, %v527
      %v530 = vunpack.c.l.s4 1983009808
      %v531 = vunpack.c.0.s8 %v530
      %v532 = vlaneseq
      %v533 = vshrl.u32 %v532, 7
      %v534 = vsub.s32 %v531, %v533
      %v535 = vrot.slane %v521, %v534
      %v536 = vcombine.high %v528, %v528
      %v537 = vcombine.high %v535, %v535
      %v546 = vld [vmem:[%s364] sm:$0x3]
      %v547 = vadd.f32 %v511, %v546
      %v548 = vadd.f32 %v519, %v546
      %v549 = vadd.f32 %v518, %v546
      %v550 = vadd.f32 %v520, %v546
      %v551 = vadd.f32 %v528, %v546
      %v552 = vadd.f32 %v536, %v546
      %v553 = vadd.f32 %v535, %v546
      %v554 = vadd.f32 %v537, %v546
      %v556 = vcombine.high %v401, %v401
      %v558 = vunpack.c.l.s4 1966171168
      %v559 = vunpack.c.0.s8 %v558
      %v560 = vlaneseq
      %v561 = vshrl.u32 %v560, 7
      %v562 = vsub.s32 %v559, %v561
      %v563 = vrot.slane %v401, %v562
      %v565 = vunpack.c.l.s4 1966171168
      %v566 = vunpack.c.0.s8 %v565
      %v567 = vlaneseq
      %v568 = vshrl.u32 %v567, 7
      %v569 = vsub.s32 %v566, %v568
      %v570 = vrot.slane %v556, %v569
      %v571 = vcombine.high %v563, %v563
      %v572 = vcombine.high %v570, %v570
      %v574 = vunpack.c.l.s4 1966171168
      %v575 = vunpack.c.0.s8 %v574
      %v576 = vlaneseq
      %v577 = vshrl.u32 %v576, 7
      %v578 = vsub.s32 %v575, %v577
      %v579 = vrot.slane %v563, %v578
      %v581 = vunpack.c.l.s4 1966171168
      %v582 = vunpack.c.0.s8 %v581
      %v583 = vlaneseq
      %v584 = vshrl.u32 %v583, 7
      %v585 = vsub.s32 %v582, %v584
      %v586 = vrot.slane %v570, %v585
      %v588 = vunpack.c.l.s4 1966171168
      %v589 = vunpack.c.0.s8 %v588
      %v590 = vlaneseq
      %v591 = vshrl.u32 %v590, 7
      %v592 = vsub.s32 %v589, %v591
      %v593 = vrot.slane %v571, %v592
      %v595 = vunpack.c.l.s4 1966171168
      %v596 = vunpack.c.0.s8 %v595
      %v597 = vlaneseq
      %v598 = vshrl.u32 %v597, 7
      %v599 = vsub.s32 %v596, %v598
      %v600 = vrot.slane %v572, %v599
      %v601 = vcombine.high %v579, %v579
      %v602 = vcombine.high %v586, %v586
      %v603 = vcombine.high %v593, %v593
      %v604 = vcombine.high %v600, %v600
      %v605 = vlaneseq
      %v606 = vshrl.u32 %v605, 7
      %v607 = vsub.s32 0, %v606
      %v608 = vrot.slane %v579, %v607
      %v609 = vlaneseq
      %v610 = vshrl.u32 %v609, 7
      %v611 = vsub.s32 0, %v610
      %v612 = vrot.slane %v593, %v611
      %v613 = vlaneseq
      %v614 = vshrl.u32 %v613, 7
      %v615 = vsub.s32 0, %v614
      %v616 = vrot.slane %v601, %v615
      %v617 = vlaneseq
      %v618 = vshrl.u32 %v617, 7
      %v619 = vsub.s32 0, %v618
      %v620 = vrot.slane %v603, %v619
      %v621 = vlaneseq
      %v622 = vshrl.u32 %v621, 7
      %v623 = vsub.s32 0, %v622
      %v624 = vrot.slane %v586, %v623
      %v625 = vlaneseq
      %v626 = vshrl.u32 %v625, 7
      %v627 = vsub.s32 0, %v626
      %v628 = vrot.slane %v600, %v627
      %v629 = vlaneseq
      %v630 = vshrl.u32 %v629, 7
      %v631 = vsub.s32 0, %v630
      %v632 = vrot.slane %v602, %v631
      %v633 = vlaneseq
      %v634 = vshrl.u32 %v633, 7
      %v635 = vsub.s32 0, %v634
      %v636 = vrot.slane %v604, %v635
      %v645 = vadd.f32 %v547, %v608
      %v646 = vadd.f32 %v548, %v612
      %v647 = vadd.f32 %v549, %v616
      %v648 = vadd.f32 %v550, %v620
      %v649 = vadd.f32 %v551, %v624
      %v650 = vadd.f32 %v552, %v628
      %v651 = vadd.f32 %v553, %v632
      %v652 = vadd.f32 %v554, %v636
      %v653 = vxor.u32 %v645, 2147483648
      %v654 = vxor.u32 %v646, 2147483648
      %v655 = vxor.u32 %v647, 2147483648
      %v656 = vxor.u32 %v648, 2147483648
      %v657 = vxor.u32 %v649, 2147483648
      %v658 = vxor.u32 %v650, 2147483648
      %v659 = vxor.u32 %v651, 2147483648
      %v660 = vxor.u32 %v652, 2147483648
      %v661 = vmul.f32 %v653, 1.442695
      %v662 = vpow.pop %v661
      %v663 = vmul.f32 %v654, 1.442695
      %v664 = vpow.pop %v663
      %v665 = vmul.f32 %v655, 1.442695
      %v666 = vpow.pop %v665
      %v667 = vmul.f32 %v656, 1.442695
      %v668 = vpow.pop %v667
      %v669 = vmul.f32 %v657, 1.442695
      %v670 = vpow.pop %v669
      %v671 = vmul.f32 %v658, 1.442695
      %v672 = vpow.pop %v671
      %v673 = vmul.f32 %v659, 1.442695
      %v674 = vpow.pop %v673
      %v675 = vmul.f32 %v660, 1.442695
      %v676 = vpow.pop %v675
      %v677 = vadd.f32 %v662, 1.0
      %v678 = vadd.f32 %v664, 1.0
      %v679 = vadd.f32 %v666, 1.0
      %v680 = vadd.f32 %v668, 1.0
      %v681 = vadd.f32 %v670, 1.0
      %v682 = vadd.f32 %v672, 1.0
      %v683 = vadd.f32 %v674, 1.0
      %v684 = vadd.f32 %v676, 1.0
      %v685 = vrcp.pop %v677
      %v686 = vmul.f32 1.0, %v685
      %v687 = vrcp.pop %v678
      %v688 = vmul.f32 1.0, %v687
      %v689 = vrcp.pop %v679
      %v690 = vmul.f32 1.0, %v689
      %v691 = vrcp.pop %v680
      %v692 = vmul.f32 1.0, %v691
      %v693 = vrcp.pop %v681
      %v694 = vmul.f32 1.0, %v693
      %v695 = vrcp.pop %v682
      %v696 = vmul.f32 1.0, %v695
      %v697 = vrcp.pop %v683
      %v698 = vmul.f32 1.0, %v697
      %v699 = vrcp.pop %v684
      %v700 = vmul.f32 1.0, %v699
      %v701 = vld [vmem:[%s368] sm:$0x3]
      %v702 = vmul.f32 %v686, %v701
      %v703 = vmul.f32 %v688, %v701
      %v704 = vmul.f32 %v690, %v701
      %v705 = vmul.f32 %v692, %v701
      %v706 = vmul.f32 %v694, %v701
      %v707 = vmul.f32 %v696, %v701
      %v708 = vmul.f32 %v698, %v701
      %v709 = vmul.f32 %v700, %v701
      %vm710 = vcmask 1041408
      %v711 = vsel %vm710, %v702, 0.0
      %v712 = vrot.slane %v711, 4
      %v713 = vadd.f32 %v711, %v712
      %v714 = vrot.slane %v713, 2
      %v715 = vadd.f32 %v713, %v714
      %v716 = vrot.slane %v715, 1
      %v717 = vadd.f32 %v715, %v716
      %v718 = vsel %vm710, %v703, 0.0
      %v719 = vrot.slane %v718, 4
      %v720 = vadd.f32 %v718, %v719
      %v721 = vrot.slane %v720, 2
      %v722 = vadd.f32 %v720, %v721
      %v723 = vrot.slane %v722, 1
      %v724 = vadd.f32 %v722, %v723
      %v725 = vsel %vm710, %v704, 0.0
      %v726 = vrot.slane %v725, 4
      %v727 = vadd.f32 %v725, %v726
      %v728 = vrot.slane %v727, 2
      %v729 = vadd.f32 %v727, %v728
      %v730 = vrot.slane %v729, 1
      %v731 = vadd.f32 %v729, %v730
      %v732 = vsel %vm710, %v705, 0.0
      %v733 = vrot.slane %v732, 4
      %v734 = vadd.f32 %v732, %v733
      %v735 = vrot.slane %v734, 2
      %v736 = vadd.f32 %v734, %v735
      %v737 = vrot.slane %v736, 1
      %v738 = vadd.f32 %v736, %v737
      %v739 = vsel %vm710, %v706, 0.0
      %v740 = vrot.slane %v739, 4
      %v741 = vadd.f32 %v739, %v740
      %v742 = vrot.slane %v741, 2
      %v743 = vadd.f32 %v741, %v742
      %v744 = vrot.slane %v743, 1
      %v745 = vadd.f32 %v743, %v744
      %v746 = vsel %vm710, %v707, 0.0
      %v747 = vrot.slane %v746, 4
      %v748 = vadd.f32 %v746, %v747
      %v749 = vrot.slane %v748, 2
      %v750 = vadd.f32 %v748, %v749
      %v751 = vrot.slane %v750, 1
      %v752 = vadd.f32 %v750, %v751
      %v753 = vsel %vm710, %v708, 0.0
      %v754 = vrot.slane %v753, 4
      %v755 = vadd.f32 %v753, %v754
      %v756 = vrot.slane %v755, 2
      %v757 = vadd.f32 %v755, %v756
      %v758 = vrot.slane %v757, 1
      %v759 = vadd.f32 %v757, %v758
      %v760 = vsel %vm710, %v709, 0.0
      %v761 = vrot.slane %v760, 4
      %v762 = vadd.f32 %v760, %v761
      %v763 = vrot.slane %v762, 2
      %v764 = vadd.f32 %v762, %v763
      %v765 = vrot.slane %v764, 1
      %v766 = vadd.f32 %v764, %v765
      %775 = vrot.lane.b32.xlu0 %v717, 96
      %v776 = vpop.permute.xlu0 %775
      %777 = vrot.lane.b32.xlu0 %v724, 96
      %v778 = vpop.permute.xlu0 %777
      %779 = vrot.lane.b32.xlu0 %v731, 96
      %v780 = vpop.permute.xlu0 %779
      %781 = vrot.lane.b32.xlu0 %v738, 96
      %v782 = vpop.permute.xlu0 %781
      %783 = vrot.lane.b32.xlu0 %v745, 96
      %v784 = vpop.permute.xlu0 %783
      %785 = vrot.lane.b32.xlu0 %v752, 96
      %v786 = vpop.permute.xlu0 %785
      %787 = vrot.lane.b32.xlu0 %v759, 96
      %v788 = vpop.permute.xlu0 %787
      %789 = vrot.lane.b32.xlu0 %v766, 96
      %v790 = vpop.permute.xlu0 %789
      %v799 = vadd.f32 %v717, %v776
      %v800 = vadd.f32 %v724, %v778
      %v801 = vadd.f32 %v731, %v780
      %v802 = vadd.f32 %v738, %v782
      %v803 = vadd.f32 %v745, %v784
      %v804 = vadd.f32 %v752, %v786
      %v805 = vadd.f32 %v759, %v788
      %v806 = vadd.f32 %v766, %v790
      %807 = vrot.lane.b32.xlu0 %v717, 64
      %v808 = vpop.permute.xlu0 %807
      %809 = vrot.lane.b32.xlu0 %v724, 64
      %v810 = vpop.permute.xlu0 %809
      %811 = vrot.lane.b32.xlu0 %v731, 64
      %v812 = vpop.permute.xlu0 %811
      %813 = vrot.lane.b32.xlu0 %v738, 64
      %v814 = vpop.permute.xlu0 %813
      %815 = vrot.lane.b32.xlu0 %v745, 64
      %v816 = vpop.permute.xlu0 %815
      %817 = vrot.lane.b32.xlu0 %v752, 64
      %v818 = vpop.permute.xlu0 %817
      %819 = vrot.lane.b32.xlu0 %v759, 64
      %v820 = vpop.permute.xlu0 %819
      %821 = vrot.lane.b32.xlu0 %v766, 64
      %v822 = vpop.permute.xlu0 %821
      %v831 = vadd.f32 %v799, %v808
      %v832 = vadd.f32 %v800, %v810
      %v833 = vadd.f32 %v801, %v812
      %v834 = vadd.f32 %v802, %v814
      %v835 = vadd.f32 %v803, %v816
      %v836 = vadd.f32 %v804, %v818
      %v837 = vadd.f32 %v805, %v820
      %v838 = vadd.f32 %v806, %v822
      %839 = vrot.lane.b32.xlu0 %v717, 32
      %v840 = vpop.permute.xlu0 %839
      %841 = vrot.lane.b32.xlu0 %v724, 32
      %v842 = vpop.permute.xlu0 %841
      %843 = vrot.lane.b32.xlu0 %v731, 32
      %v844 = vpop.permute.xlu0 %843
      %845 = vrot.lane.b32.xlu0 %v738, 32
      %v846 = vpop.permute.xlu0 %845
      %847 = vrot.lane.b32.xlu0 %v745, 32
      %v848 = vpop.permute.xlu0 %847
      %849 = vrot.lane.b32.xlu0 %v752, 32
      %v850 = vpop.permute.xlu0 %849
      %851 = vrot.lane.b32.xlu0 %v759, 32
      %v852 = vpop.permute.xlu0 %851
      %853 = vrot.lane.b32.xlu0 %v766, 32
      %v854 = vpop.permute.xlu0 %853
      %v863 = vadd.f32 %v831, %v840
      %v864 = vadd.f32 %v832, %v842
      %v865 = vadd.f32 %v833, %v844
      %v866 = vadd.f32 %v834, %v846
      %v867 = vadd.f32 %v835, %v848
      %v868 = vadd.f32 %v836, %v850
      %v869 = vadd.f32 %v837, %v852
      %v870 = vadd.f32 %v838, %v854
      %v871 = vmul.f32 %v863, 0.125
      %v872 = vmul.f32 %v864, 0.125
      %v873 = vmul.f32 %v865, 0.125
      %v874 = vmul.f32 %v866, 0.125
      %v875 = vmul.f32 %v867, 0.125
      %v876 = vmul.f32 %v868, 0.125
      %v877 = vmul.f32 %v869, 0.125
      %v878 = vmul.f32 %v870, 0.125
      %v887 = vrot.slane %v872, 7
      %vm888 = vcmask 1041409
      %v889 = vsel %vm888, %v887, %v871
      %v890 = vrot.slane %v873, 6
      %vm891 = vcmask 1042434
      %v892 = vsel %vm891, %v890, %v889
      %v893 = vrot.slane %v874, 5
      %vm894 = vcmask 1043459
      %v895 = vsel %vm894, %v893, %v892
      %v896 = vrot.slane %v875, 4
      %vm897 = vcmask 1044484
      %v898 = vsel %vm897, %v896, %v895
      %v899 = vrot.slane %v876, 3
      %vm900 = vcmask 1045509
      %v901 = vsel %vm900, %v899, %v898
      %v902 = vrot.slane %v877, 2
      %vm903 = vcmask 1046534
      %v904 = vsel %vm903, %v902, %v901
      %v905 = vrot.slane %v878, 1
      %vm906 = vcmask 1047559
      %v907 = vsel %vm906, %v905, %v904
      %v909 = vadd.f32 %v385, %v907
      %910 = vst.msk [vmem:[%s375] sm:$0xff] %vm396, %v909
      %v911 = vsel %vm396, %v909, 0.0
      %v912 = vrot.slane %v911, 4
      %v913 = vadd.f32 %v911, %v912
      %v914 = vrot.slane %v913, 2
      %v915 = vadd.f32 %v913, %v914
      %v916 = vrot.slane %v915, 1
      %v917 = vadd.f32 %v915, %v916
      %v918 = vmul.f32 %v909, %v909
      %v919 = vsel %vm396, %v918, 0.0
      %v920 = vrot.slane %v919, 4
      %v921 = vadd.f32 %v919, %v920
      %v922 = vrot.slane %v921, 2
      %v923 = vadd.f32 %v921, %v922
      %v924 = vrot.slane %v923, 1
      %v925 = vadd.f32 %v923, %v924
      %v926 = vsel %vm710, %v645, 0.0
      %v927 = vsel %vm710, %v646, 0.0
      %v928 = vadd.f32 %v926, %v927
      %v929 = vsel %vm710, %v647, 0.0
      %v930 = vadd.f32 %v928, %v929
      %v931 = vsel %vm710, %v648, 0.0
      %v932 = vadd.f32 %v930, %v931
      %v933 = vsel %vm710, %v649, 0.0
      %v934 = vadd.f32 %v932, %v933
      %v935 = vsel %vm710, %v650, 0.0
      %v936 = vadd.f32 %v934, %v935
      %v937 = vsel %vm710, %v651, 0.0
      %v938 = vadd.f32 %v936, %v937
      %v939 = vsel %vm710, %v652, 0.0
      %v940 = vadd.f32 %v938, %v939
      %v941 = vsel %vm710, %v940, 0.0
      %v942 = vrot.slane %v941, 4
      %v943 = vadd.f32 %v941, %v942
      %v944 = vrot.slane %v943, 2
      %v945 = vadd.f32 %v943, %v944
      %v946 = vrot.slane %v945, 1
      %v947 = vadd.f32 %v945, %v946
      %v948 = vmul.f32 %v645, %v645
      %v949 = vmul.f32 %v646, %v646
      %v950 = vmul.f32 %v647, %v647
      %v951 = vmul.f32 %v648, %v648
      %v952 = vmul.f32 %v649, %v649
      %v953 = vmul.f32 %v650, %v650
      %v954 = vmul.f32 %v651, %v651
      %v955 = vmul.f32 %v652, %v652
      %v956 = vsel %vm710, %v948, 0.0
      %v957 = vsel %vm710, %v949, 0.0
      %v958 = vadd.f32 %v956, %v957
      %v959 = vsel %vm710, %v950, 0.0
      %v960 = vadd.f32 %v958, %v959
      %v961 = vsel %vm710, %v951, 0.0
      %v962 = vadd.f32 %v960, %v961
      %v963 = vsel %vm710, %v952, 0.0
      %v964 = vadd.f32 %v962, %v963
      %v965 = vsel %vm710, %v953, 0.0
      %v966 = vadd.f32 %v964, %v965
      %v967 = vsel %vm710, %v954, 0.0
      %v968 = vadd.f32 %v966, %v967
      %v969 = vsel %vm710, %v955, 0.0
      %v970 = vadd.f32 %v968, %v969
      %v971 = vsel %vm710, %v970, 0.0
      %v972 = vrot.slane %v971, 4
      %v973 = vadd.f32 %v971, %v972
      %v974 = vrot.slane %v973, 2
      %v975 = vadd.f32 %v973, %v974
      %v976 = vrot.slane %v975, 1
      %v977 = vadd.f32 %v975, %v976
      %979 = vrot.lane.b32.xlu0 %v947, 96
      %v980 = vpop.permute.xlu0 %979
      %v982 = vadd.f32 %v947, %v980
      %984 = vrot.lane.b32.xlu0 %v977, 96
      %v985 = vpop.permute.xlu0 %984
      %v987 = vadd.f32 %v977, %v985
      %988 = vrot.lane.b32.xlu0 %v947, 64
      %v989 = vpop.permute.xlu0 %988
      %v991 = vadd.f32 %v982, %v989
      %992 = vrot.lane.b32.xlu0 %v977, 64
      %v993 = vpop.permute.xlu0 %992
      %v995 = vadd.f32 %v987, %v993
      %996 = vrot.lane.b32.xlu0 %v947, 32
      %v997 = vpop.permute.xlu0 %996
      %v999 = vadd.f32 %v991, %v997
      %1000 = vrot.lane.b32.xlu0 %v977, 32
      %v1001 = vpop.permute.xlu0 %1000
      %v1003 = vadd.f32 %v995, %v1001
      %vm1004 = vcmask 253952
      %1005 = vst.msk [vmem:[%s382] sm:$0x1] %vm1004, %v917
      %1006 = vst.msk [vmem:[%s382 + $0x1] sm:$0x1] %vm1004, %v925
      %1007 = vst.msk [vmem:[%s382 + $0x2] sm:$0x1] %vm1004, %v999
      %1008 = vst.msk [vmem:[%s382 + $0x3] sm:$0x1] %vm1004, %v1003
      %p1009 = scmp.lt.s32.totalorder %s23, 1
      %s1010 = scalar_select %p1009, %s23, 1
      %p1011 = scmp.lt.s32.totalorder %s24, 0
      %s1012 = scalar_select %p1011, %s24, 0
      %s1013 = sadd.s32 %s1012, %s1010
      %s1014 = smul.addr %s1013, 8
      %s1015 = scalar_lea.vmem %s6, %s1014
      %p1016 = scmp.lt.s32.totalorder %s23, 1
      %s1017 = scalar_select %p1016, %s23, 1
      %p1018 = scmp.lt.s32.totalorder %s24, 0
      %s1019 = scalar_select %p1018, %s24, 0
      %s1020 = sadd.s32 %s1019, %s1017
      %s1021 = smul.addr %s1020, 4
      %s1022 = scalar_lea.vmem %s7, %s1021
      // Predicated region
      $region45: #{gnn_encoder.13} parent=43 // pred_check
        %p1023 = pneg %p199
      $region46: #{gnn_encoder.13} parent=43 // pred_check_branch
        %1025 = sbr.rel (%p1023) target = $region48
      $region47: #{gnn_encoder.13} parent=43 // pred_region
        _
      $region48: #{gnn_encoder.13} parent=43 // pred_fallthru
        _
      // Predicated region
      $region49: #{gnn_encoder.13} parent=43 // pred_check
        %p1026 = pneg %p227
      $region50: #{gnn_encoder.13} parent=43 // pred_check_branch
        %1028 = sbr.rel (%p1026) target = $region52
      $region51: #{gnn_encoder.13} parent=43 // pred_region
        _
      $region52: #{gnn_encoder.13} parent=43 // pred_fallthru
        _
    $region44: #{gnn_encoder.13} parent=5 // pred_fallthru
      _
    %p1029 = scmp.le.s32.totalorder 2, %s14
    // Predicated region
    $region53: #{gnn_encoder.13} parent=5 // pred_check
      %p1030 = pneg %p1029
    $region54: #{gnn_encoder.13} parent=5 // pred_check_branch
      %1032 = sbr.rel (%p1030) target = $region56
    $region55: #{gnn_encoder.13} parent=5 // pred_region
      %s1033 = ssub.s32 %s14, 2
      // Predicated region
      $region57: #{gnn_encoder.13} parent=55 // pred_check
        %p1034 = pneg %p205
      $region58: #{gnn_encoder.13} parent=55 // pred_check_branch
        %1036 = sbr.rel (%p1034) target = $region60
      $region59: #{gnn_encoder.13} parent=55 // pred_region
        %p1037 = scmp.lt.s32.totalorder %s25, 1
        %s1038 = scalar_select %p1037, %s25, 1
        %p1039 = scmp.lt.s32.totalorder %s26, 0
        %s1040 = scalar_select %p1039, %s26, 0
        %s1041 = sadd.s32 %s1040, %s1038
        %s1042 = smul.addr %s1041, 8
        %s1043 = scalar_lea.vmem %s6, %s1042
      $region60: #{gnn_encoder.13} parent=55 // pred_fallthru
        _
      // Predicated region
      $region61: #{gnn_encoder.13} parent=55 // pred_check
        %p1044 = pneg %p233
      $region62: #{gnn_encoder.13} parent=55 // pred_check_branch
        %1046 = sbr.rel (%p1044) target = $region64
      $region63: #{gnn_encoder.13} parent=55 // pred_region
        %p1047 = scmp.lt.s32.totalorder %s25, 1
        %s1048 = scalar_select %p1047, %s25, 1
        %p1049 = scmp.lt.s32.totalorder %s26, 0
        %s1050 = scalar_select %p1049, %s26, 0
        %s1051 = sadd.s32 %s1050, %s1048
        %s1052 = smul.addr %s1051, 4
        %s1053 = scalar_lea.vmem %s7, %s1052
      $region64: #{gnn_encoder.13} parent=55 // pred_fallthru
        _
    $region56: #{gnn_encoder.13} parent=5 // pred_fallthru
      _
  $region6: #{gnn_encoder.13} parent=0 // loop_footer
    %s18 = sadd.s32 1, %s14
  $region7: #{gnn_encoder.13} parent=0 // loop_footer_branch
    %13 = sbr.rel target = $region3
  $region8: #{gnn_encoder.13} parent=0 // loop_exit
    _

// kernel: gnn_encoder.15
$region0: #{gnn_encoder.15}
  #allocation0 [shape = 'u32[]', space=smem, size = 0x4, offset = 0x4, fixed_abs, tag = 'smem constant byte address 0x4 - core index']
  #allocation1 [shape = 'u32[144,128]{1,0:T(1,128)}', space=vmem, size = 0x12000, scoped, tag = 'internal scratch']
  %s0 = inlined_call_operand.vmem [shape: f32[2,16,128], index: 0, kind: input, shape index: {}]
  %s1 = inlined_call_operand.vmem [shape: f32[2,8,128], index: 1, kind: input, shape index: {}]
  %s2 = inlined_call_operand.vmem [shape: f32[2,2,128], index: 2, kind: input, shape index: {}]
  %s3 = inlined_call_operand.vmem [shape: f32[128,128], index: 3, kind: input, shape index: {}]
  %s4 = inlined_call_operand.vmem [shape: f32[1,128], index: 4, kind: input, shape index: {}]
  %s5 = inlined_call_operand.vmem [shape: f32[1,128], index: 5, kind: input, shape index: {}]
  %s6 = inlined_call_operand.vmem [shape: f32[1,128], index: 6, kind: input, shape index: {}]
  %s7 = inlined_call_operand.vmem [shape: f32[2,16,128], index: 7, kind: output, shape index: {}]
  %s8 = sld [smem:[#allocation0]]
  $region61: #{gnn_encoder.15} parent=0
    _
  %s10 = ssub.s32 1, %s8
  %s11 = scalar_select 0, %s10, %s8
  loop: start=0, step=1, limit=4
  $region2: #{gnn_encoder.15} parent=0 // loop_pre_header
    _
  $region3: #{gnn_encoder.15} parent=0 // loop_header
    %s13 = sphi 0, %s17
    %p14 = scmp.ge.s32.totalorder %s13, 4
    %s20 = sphi 0, %s32
    %s21 = sphi 0, %s28
    %s22 = sphi 0, %s20
    %s23 = sphi 0, %s21
    %s24 = sphi 0, %s22
    %s25 = sphi 0, %s23
    %s37 = sphi 0, %s39
    %s40 = sphi 0, %s37
    %s41 = sphi 0, %s40
    %s57 = sphi 0, %s41
    %s63 = sphi 0, %s65
    %s66 = sphi 0, %s63
    %s67 = sphi 0, %s66
    %s83 = sphi 0, %s67
    %s89 = sphi 0, %s91
    %s92 = sphi 0, %s89
    %s93 = sphi 0, %s92
    %s109 = sphi 0, %s93
    %s113 = sphi 0, %s113
    %s115 = sphi 0, %s113
    %s116 = sphi 0, %s115
    %s130 = sphi 0, %s116
    %s134 = sphi 0, %s134
    %s136 = sphi 0, %s134
    %s137 = sphi 0, %s136
    %s151 = sphi 0, %s137
    %s155 = sphi 0, %s155
    %s157 = sphi 0, %s155
    %s158 = sphi 0, %s157
    %s172 = sphi 0, %s158
    %s176 = sphi 0, %s176
    %s178 = sphi 0, %s176
    %s179 = sphi 0, %s178
    %s193 = sphi 0, %s179
    %s201 = sphi 0, %s203
    %s204 = sphi 0, %s201
    %s205 = sphi 0, %s204
    %s221 = sphi 0, %s205
  $region4: #{gnn_encoder.15} parent=0 // loop_header_branch
    %16 = sbr.rel (%p14) target = $region8
  $region5: #{gnn_encoder.15} parent=0 // loop_body
    %s18 = ssub.s32 %s13, 1
    %s19 = ssub.s32 %s13, 2
    %s26 = sadd.s32 1, %s21
    %p27 = scmp.ge.s32.totalorder %s26, 1
    %s28 = scalar_select %p27, 0, %s26
    %s29 = sadd.s32 1, %s20
    %s30 = scalar_select %p27, %s29, %s20
    %p31 = scmp.ge.s32.totalorder %s30, 2
    %s32 = scalar_select %p31, 0, %s30
    %s33 = ssub.s32 %s20, %s32
    %s34 = ssub.s32 %s21, %s28
    %s35 = sor.u32 %s33, %s34
    %p36 = scmp.eq.s32.totalorder %s35, 0
    %s38 = sadd.s32 %s37, 1
    %s39 = scalar_select %p36, %s37, %s38
    %p42 = pneg %p36
    %p43 = scmp.eq.s32.totalorder %s13, 1
    %p44 = por %p42, %p43
    %p45 = scmp.ne.s32.totalorder %s37, %s40
    %p46 = scmp.eq.s32.totalorder %s13, 0
    %p47 = por %p45, %p46
    %p48 = scmp.ne.s32.totalorder %s37, %s40
    %p49 = scmp.eq.s32.totalorder %s18, 1
    %p50 = por %p48, %p49
    %p51 = scmp.ne.s32.totalorder %s40, %s41
    %p52 = scmp.eq.s32.totalorder %s18, 0
    %p53 = por %p51, %p52
    %p54 = scmp.ne.s32.totalorder %s40, %s41
    %p55 = scmp.eq.s32.totalorder %s19, 1
    %p56 = por %p54, %p55
    %p58 = scmp.ne.s32.totalorder %s41, %s57
    %p59 = scmp.eq.s32.totalorder %s19, 0
    %p60 = por %p58, %p59
    %s61 = ssub.s32 %s20, %s32
    %p62 = scmp.eq.s32.totalorder %s61, 0
    %s64 = sadd.s32 %s63, 1
    %s65 = scalar_select %p62, %s63, %s64
    %p68 = pneg %p62
    %p69 = scmp.eq.s32.totalorder %s13, 1
    %p70 = por %p68, %p69
    %p71 = scmp.ne.s32.totalorder %s63, %s66
    %p72 = scmp.eq.s32.totalorder %s13, 0
    %p73 = por %p71, %p72
    %p74 = scmp.ne.s32.totalorder %s63, %s66
    %p75 = scmp.eq.s32.totalorder %s18, 1
    %p76 = por %p74, %p75
    %p77 = scmp.ne.s32.totalorder %s66, %s67
    %p78 = scmp.eq.s32.totalorder %s18, 0
    %p79 = por %p77, %p78
    %p80 = scmp.ne.s32.totalorder %s66, %s67
    %p81 = scmp.eq.s32.totalorder %s19, 1
    %p82 = por %p80, %p81
    %p84 = scmp.ne.s32.totalorder %s67, %s83
    %p85 = scmp.eq.s32.totalorder %s19, 0
    %p86 = por %p84, %p85
    %s87 = ssub.s32 %s20, %s32
    %p88 = scmp.eq.s32.totalorder %s87, 0
    %s90 = sadd.s32 %s89, 1
    %s91 = scalar_select %p88, %s89, %s90
    %p94 = pneg %p88
    %p95 = scmp.eq.s32.totalorder %s13, 1
    %p96 = por %p94, %p95
    %p97 = scmp.ne.s32.totalorder %s89, %s92
    %p98 = scmp.eq.s32.totalorder %s13, 0
    %p99 = por %p97, %p98
    %p100 = scmp.ne.s32.totalorder %s89, %s92
    %p101 = scmp.eq.s32.totalorder %s18, 1
    %p102 = por %p100, %p101
    %p103 = scmp.ne.s32.totalorder %s92, %s93
    %p104 = scmp.eq.s32.totalorder %s18, 0
    %p105 = por %p103, %p104
    %p106 = scmp.ne.s32.totalorder %s92, %s93
    %p107 = scmp.eq.s32.totalorder %s19, 1
    %p108 = por %p106, %p107
    %p110 = scmp.ne.s32.totalorder %s93, %s109
    %p111 = scmp.eq.s32.totalorder %s19, 0
    %p112 = por %p110, %p111
    %s114 = sadd.s32 %s113, 1
    %p117 = scmp.eq.s32.totalorder %s13, 1
    %p118 = scmp.ne.s32.totalorder %s113, %s115
    %p119 = scmp.eq.s32.totalorder %s13, 0
    %p120 = por %p118, %p119
    %p121 = scmp.ne.s32.totalorder %s113, %s115
    %p122 = scmp.eq.s32.totalorder %s18, 1
    %p123 = por %p121, %p122
    %p124 = scmp.ne.s32.totalorder %s115, %s116
    %p125 = scmp.eq.s32.totalorder %s18, 0
    %p126 = por %p124, %p125
    %p127 = scmp.ne.s32.totalorder %s115, %s116
    %p128 = scmp.eq.s32.totalorder %s19, 1
    %p129 = por %p127, %p128
    %p131 = scmp.ne.s32.totalorder %s116, %s130
    %p132 = scmp.eq.s32.totalorder %s19, 0
    %p133 = por %p131, %p132
    %s135 = sadd.s32 %s134, 1
    %p138 = scmp.eq.s32.totalorder %s13, 1
    %p139 = scmp.ne.s32.totalorder %s134, %s136
    %p140 = scmp.eq.s32.totalorder %s13, 0
    %p141 = por %p139, %p140
    %p142 = scmp.ne.s32.totalorder %s134, %s136
    %p143 = scmp.eq.s32.totalorder %s18, 1
    %p144 = por %p142, %p143
    %p145 = scmp.ne.s32.totalorder %s136, %s137
    %p146 = scmp.eq.s32.totalorder %s18, 0
    %p147 = por %p145, %p146
    %p148 = scmp.ne.s32.totalorder %s136, %s137
    %p149 = scmp.eq.s32.totalorder %s19, 1
    %p150 = por %p148, %p149
    %p152 = scmp.ne.s32.totalorder %s137, %s151
    %p153 = scmp.eq.s32.totalorder %s19, 0
    %p154 = por %p152, %p153
    %s156 = sadd.s32 %s155, 1
    %p159 = scmp.eq.s32.totalorder %s13, 1
    %p160 = scmp.ne.s32.totalorder %s155, %s157
    %p161 = scmp.eq.s32.totalorder %s13, 0
    %p162 = por %p160, %p161
    %p163 = scmp.ne.s32.totalorder %s155, %s157
    %p164 = scmp.eq.s32.totalorder %s18, 1
    %p165 = por %p163, %p164
    %p166 = scmp.ne.s32.totalorder %s157, %s158
    %p167 = scmp.eq.s32.totalorder %s18, 0
    %p168 = por %p166, %p167
    %p169 = scmp.ne.s32.totalorder %s157, %s158
    %p170 = scmp.eq.s32.totalorder %s19, 1
    %p171 = por %p169, %p170
    %p173 = scmp.ne.s32.totalorder %s158, %s172
    %p174 = scmp.eq.s32.totalorder %s19, 0
    %p175 = por %p173, %p174
    %s177 = sadd.s32 %s176, 1
    %p180 = scmp.eq.s32.totalorder %s13, 1
    %p181 = scmp.ne.s32.totalorder %s176, %s178
    %p182 = scmp.eq.s32.totalorder %s13, 0
    %p183 = por %p181, %p182
    %p184 = scmp.ne.s32.totalorder %s176, %s178
    %p185 = scmp.eq.s32.totalorder %s18, 1
    %p186 = por %p184, %p185
    %p187 = scmp.ne.s32.totalorder %s178, %s179
    %p188 = scmp.eq.s32.totalorder %s18, 0
    %p189 = por %p187, %p188
    %p190 = scmp.ne.s32.totalorder %s178, %s179
    %p191 = scmp.eq.s32.totalorder %s19, 1
    %p192 = por %p190, %p191
    %p194 = scmp.ne.s32.totalorder %s179, %s193
    %p195 = scmp.eq.s32.totalorder %s19, 0
    %p196 = por %p194, %p195
    %s197 = ssub.s32 %s20, %s32
    %s198 = ssub.s32 %s21, %s28
    %s199 = sor.u32 %s197, %s198
    %p200 = scmp.eq.s32.totalorder %s199, 0
    %s202 = sadd.s32 %s201, 1
    %s203 = scalar_select %p200, %s201, %s202
    %p206 = pneg %p200
    %p207 = scmp.eq.s32.totalorder %s13, 1
    %p208 = por %p206, %p207
    %p209 = scmp.ne.s32.totalorder %s201, %s204
    %p210 = scmp.eq.s32.totalorder %s13, 0
    %p211 = por %p209, %p210
    %p212 = scmp.ne.s32.totalorder %s201, %s204
    %p213 = scmp.eq.s32.totalorder %s18, 1
    %p214 = por %p212, %p213
    %p215 = scmp.ne.s32.totalorder %s204, %s205
    %p216 = scmp.eq.s32.totalorder %s18, 0
    %p217 = por %p215, %p216
    %p218 = scmp.ne.s32.totalorder %s204, %s205
    %p219 = scmp.eq.s32.totalorder %s19, 1
    %p220 = por %p218, %p219
    %p222 = scmp.ne.s32.totalorder %s205, %s221
    %p223 = scmp.eq.s32.totalorder %s19, 0
    %p224 = por %p222, %p223
    %p225 = scmp.le.s32.totalorder 1, %s13
    %p226 = scmp.lt.s32.totalorder %s13, 3
    %p227 = pnand %p225, %p226
    %p228 = pneg %p227
    // Predicated region
    $region9: #{gnn_encoder.15} parent=5 // pred_check
      _
    $region10: #{gnn_encoder.15} parent=5 // pred_check_branch
      %230 = sbr.rel (%p227) target = $region12
    $region11: #{gnn_encoder.15} parent=5 // pred_region
      %s231 = ssub.s32 %s13, 1
      // Predicated region
      $region13: #{gnn_encoder.15} parent=11 // pred_check
        %p232 = pneg %p126
      $region14: #{gnn_encoder.15} parent=11 // pred_check_branch
        %234 = sbr.rel (%p232) target = $region16
      $region15: #{gnn_encoder.15} parent=11 // pred_region
        _
      $region16: #{gnn_encoder.15} parent=11 // pred_fallthru
        _
      // Predicated region
      $region17: #{gnn_encoder.15} parent=11 // pred_check
        %p235 = pneg %p147
      $region18: #{gnn_encoder.15} parent=11 // pred_check_branch
        %237 = sbr.rel (%p235) target = $region20
      $region19: #{gnn_encoder.15} parent=11 // pred_region
        _
      $region20: #{gnn_encoder.15} parent=11 // pred_fallthru
        _
      // Predicated region
      $region21: #{gnn_encoder.15} parent=11 // pred_check
        %p238 = pneg %p168
      $region22: #{gnn_encoder.15} parent=11 // pred_check_branch
        %240 = sbr.rel (%p238) target = $region24
      $region23: #{gnn_encoder.15} parent=11 // pred_region
        _
      $region24: #{gnn_encoder.15} parent=11 // pred_fallthru
        _
      // Predicated region
      $region25: #{gnn_encoder.15} parent=11 // pred_check
        %p241 = pneg %p189
      $region26: #{gnn_encoder.15} parent=11 // pred_check_branch
        %243 = sbr.rel (%p241) target = $region28
      $region27: #{gnn_encoder.15} parent=11 // pred_region
        _
      $region28: #{gnn_encoder.15} parent=11 // pred_fallthru
        _
    $region12: #{gnn_encoder.15} parent=5 // pred_fallthru
      _
    %p244 = scmp.lt.s32.totalorder %s13, 2
    // Predicated region
    $region29: #{gnn_encoder.15} parent=5 // pred_check
      %p245 = pneg %p244
    $region30: #{gnn_encoder.15} parent=5 // pred_check_branch
      %247 = sbr.rel (%p245) target = $region32
    $region31: #{gnn_encoder.15} parent=5 // pred_region
      // Predicated region
      $region33: #{gnn_encoder.15} parent=31 // pred_check
        %p248 = pneg %p47
      $region34: #{gnn_encoder.15} parent=31 // pred_check_branch
        %250 = sbr.rel (%p248) target = $region36
      $region35: #{gnn_encoder.15} parent=31 // pred_region
        %s251 = smul.u32 2, %s21
        %p252 = scmp.lt.s32.totalorder %s20, 1
        %s253 = scalar_select %p252, %s20, 1
        %p254 = scmp.lt.s32.totalorder %s251, 1
        %s255 = scalar_select %p254, %s251, 1
        %s256 = smul.addr %s253, 2
        %s257 = sadd.s32 %s255, %s256
        %s258 = smul.addr %s257, 8
        %s259 = scalar_lea.vmem %s0, %s258
        %s260 = smul.u32 2, %s21
      $region36: #{gnn_encoder.15} parent=31 // pred_fallthru
        _
      // Predicated region
      $region37: #{gnn_encoder.15} parent=31 // pred_check
        %p261 = pneg %p73
      $region38: #{gnn_encoder.15} parent=31 // pred_check_branch
        %263 = sbr.rel (%p261) target = $region40
      $region39: #{gnn_encoder.15} parent=31 // pred_region
        %p264 = scmp.lt.s32.totalorder %s20, 1
        %s265 = scalar_select %p264, %s20, 1
        %s266 = smul.addr %s265, 8
        %s267 = scalar_lea.vmem %s1, %s266
      $region40: #{gnn_encoder.15} parent=31 // pred_fallthru
        _
      // Predicated region
      $region41: #{gnn_encoder.15} parent=31 // pred_check
        %p268 = pneg %p99
      $region42: #{gnn_encoder.15} parent=31 // pred_check_branch
        %270 = sbr.rel (%p268) target = $region44
      $region43: #{gnn_encoder.15} parent=31 // pred_region
        %p271 = scmp.lt.s32.totalorder %s20, 1
        %s272 = scalar_select %p271, %s20, 1
        %s273 = smul.addr %s272, 2
        %s274 = scalar_lea.vmem %s2, %s273
      $region44: #{gnn_encoder.15} parent=31 // pred_fallthru
        _
    $region32: #{gnn_encoder.15} parent=5 // pred_fallthru
      _
    %p275 = scmp.le.s32.totalorder 1, %s13
    %p276 = scmp.lt.s32.totalorder %s13, 3
    %p277 = pnand %p275, %p276
    %p278 = pneg %p277
    // Predicated region
    $region45: #{gnn_encoder.15} parent=5 // pred_check
      _
    $region46: #{gnn_encoder.15} parent=5 // pred_check_branch
      %280 = sbr.rel (%p277) target = $region48
    $region47: #{gnn_encoder.15} parent=5 // pred_region
      %s281 = ssub.s32 %s13, 1
      %s282 = smul.u32 2, %s23
      %p283 = scmp.lt.s32.totalorder %s22, 1
      %s284 = scalar_select %p283, %s22, 1
      %p285 = scmp.lt.s32.totalorder %s282, 1
      %s286 = scalar_select %p285, %s282, 1
      %s287 = smul.addr %s284, 2
      %s288 = sadd.s32 %s286, %s287
      %s289 = smul.addr %s288, 8
      %s290 = scalar_lea.vmem %s0, %s289
      %p291 = pneg %p53
      %p292 = pneg %p50
      %p293 = scmp.lt.s32.totalorder %s22, 1
      %s294 = scalar_select %p293, %s22, 1
      %s295 = smul.addr %s294, 8
      %s296 = scalar_lea.vmem %s1, %s295
      %p297 = pneg %p79
      %p298 = pneg %p76
      %p299 = scmp.lt.s32.totalorder %s22, 1
      %s300 = scalar_select %p299, %s22, 1
      %s301 = smul.addr %s300, 2
      %s302 = scalar_lea.vmem %s2, %s301
      %p303 = pneg %p105
      %p304 = pneg %p102
      %p305 = pneg %p126
      %p306 = pneg %p123
      %p307 = pneg %p147
      %p308 = pneg %p144
      %p309 = pneg %p168
      %p310 = pneg %p165
      %p311 = pneg %p189
      %p312 = pneg %p186
      %p313 = pneg %p217
      %p314 = pneg %p214
      %s315 = smul.u32 2, %s23
      %p316 = scmp.lt.s32.totalorder %s22, 1
      %s317 = scalar_select %p316, %s22, 1
      %p318 = scmp.lt.s32.totalorder %s315, 1
      %s319 = scalar_select %p318, %s315, 1
      %s320 = smul.addr %s317, 2
      %s321 = sadd.s32 %s319, %s320
      %s322 = smul.addr %s321, 8
      %s323 = scalar_lea.vmem %s7, %s322
      %s324 = smul.u32 2, %s23
      %p325 = scmp.lt.s32.totalorder %s22, 1
      %s326 = scalar_select %p325, %s22, 1
      %p327 = scmp.lt.s32.totalorder %s324, 1
      %s328 = scalar_select %p327, %s324, 1
      %s329 = smul.addr %s326, 2
      %s330 = sadd.s32 %s328, %s329
      %s331 = smul.addr %s330, 8
      %s332 = scalar_lea.vmem %s0, %s331
      %s333 = smul.u32 2, %s23
      %p334 = scmp.lt.s32.totalorder %s22, 1
      %s335 = scalar_select %p334, %s22, 1
      %s336 = smul.addr %s335, 8
      %s337 = scalar_lea.vmem %s1, %s336
      %p338 = scmp.lt.s32.totalorder %s22, 1
      %s339 = scalar_select %p338, %s22, 1
      %s340 = smul.addr %s339, 2
      %s341 = scalar_lea.vmem %s2, %s340
      %s342 = smul.u32 2, %s23
      %p343 = scmp.lt.s32.totalorder %s22, 1
      %s344 = scalar_select %p343, %s22, 1
      %p345 = scmp.lt.s32.totalorder %s342, 1
      %s346 = scalar_select %p345, %s342, 1
      %s347 = smul.addr %s344, 2
      %s348 = sadd.s32 %s346, %s347
      %s349 = smul.addr %s348, 8
      %s350 = scalar_lea.vmem %s7, %s349
      %s351 = smul.u32 2, %s23
      %s352 = smul.u32 %s23, 8
      %s353 = scalar_lea.vmem %s337, %s352
      %v354 = vld [vmem:[%s353] sm:$0xff]
      %356 = vrot.lane.b32.xlu0 %v354, 32
      %v357 = vpop.permute.xlu0 %356
      %359 = vrot.lane.b32.xlu0 %v354, 64
      %v360 = vpop.permute.xlu0 %359
      %362 = vrot.lane.b32.xlu0 %v354, 96
      %v363 = vpop.permute.xlu0 %362
      %vm365 = vcmask 261120
      %v366 = vsel %vm365, %v357, %v360
      %vm367 = vcmask 523264
      %v368 = vsel %vm367, %v366, %v363
      %vm369 = vcmask 785408
      %v370 = vsel %vm369, %v368, %v354
      %v371 = vld [vmem:[%s332] sm:$0xff]
      %v372 = vld [vmem:[%s332 + $0x8] sm:$0xff]
      %v373 = vld [vmem:[%s3] sm:$0xff]
      %v374 = vld [vmem:[%s3 + $0x8] sm:$0xff]
      %v375 = vld [vmem:[%s3 + $0x10] sm:$0xff]
      %v376 = vld [vmem:[%s3 + $0x18] sm:$0xff]
      %v377 = vld [vmem:[%s3 + $0x20] sm:$0xff]
      %v378 = vld [vmem:[%s3 + $0x28] sm:$0xff]
      %v379 = vld [vmem:[%s3 + $0x30] sm:$0xff]
      %v380 = vld [vmem:[%s3 + $0x38] sm:$0xff]
      %v381 = vld [vmem:[%s3 + $0x40] sm:$0xff]
      %v382 = vld [vmem:[%s3 + $0x48] sm:$0xff]
      %v383 = vld [vmem:[%s3 + $0x50] sm:$0xff]
      %v384 = vld [vmem:[%s3 + $0x58] sm:$0xff]
      %v385 = vld [vmem:[%s3 + $0x60] sm:$0xff]
      %v386 = vld [vmem:[%s3 + $0x68] sm:$0xff]
      %v387 = vld [vmem:[%s3 + $0x70] sm:$0xff]
      %v388 = vld [vmem:[%s3 + $0x78] sm:$0xff]
      %v389 = vld [vmem:[%s4] sm:$0x1]
      %v391 = vlaneseq
      %v392 = vshrl.u32 %v391, 7
      %v393 = vsub.s32 0, %v392
      %v394 = vrot.slane %v389, %v393
      %396 = vmatprep.subr.mxu0 0.0
      %397 = vmatpush1.msra.mxu0 %v373
      %398 = vmatprep.subr.mxu0 0.0
      %399 = vmatpush1.msra.mxu0 %v374
      %400 = vmatprep.subr.mxu0 0.0
      %401 = vmatpush1.msra.mxu0 %v375
      %402 = vmatprep.subr.mxu0 0.0
      %403 = vmatpush1.msra.mxu0 %v376
      %404 = vmatprep.subr.mxu0 0.0
      %405 = vmatpush1.msra.mxu0 %v377
      %406 = vmatprep.subr.mxu0 0.0
      %407 = vmatpush1.msra.mxu0 %v378
      %408 = vmatprep.subr.mxu0 0.0
      %409 = vmatpush1.msra.mxu0 %v379
      %410 = vmatprep.subr.mxu0 0.0
      %411 = vmatpush1.msra.mxu0 %v380
      %412 = vmatprep.subr.mxu0 0.0
      %413 = vmatpush1.msra.mxu0 %v381
      %414 = vmatprep.subr.mxu0 0.0
      %415 = vmatpush1.msra.mxu0 %v382
      %416 = vmatprep.subr.mxu0 0.0
      %417 = vmatpush1.msra.mxu0 %v383
      %418 = vmatprep.subr.mxu0 0.0
      %419 = vmatpush1.msra.mxu0 %v384
      %420 = vmatprep.subr.mxu0 0.0
      %421 = vmatpush1.msra.mxu0 %v385
      %422 = vmatprep.subr.mxu0 0.0
      %423 = vmatpush1.msra.mxu0 %v386
      %424 = vmatprep.subr.mxu0 0.0
      %425 = vmatpush1.msra.mxu0 %v387
      %426 = vmatprep.subr.mxu0 0.0
      %427 = vmatpush1.msra.mxu0 %v388
      %428 = vmatprep.subr.mxu0 0.0
      %429 = vmatpush1.msra.mxu0 0.0
      %430 = vmatprep.subr.mxu0 0.0
      %431 = vmatpush1.msra.mxu0 0.0
      %432 = vmatprep.subr.mxu0 0.0
      %433 = vmatpush1.msra.mxu0 0.0
      %434 = vmatprep.subr.mxu0 0.0
      %435 = vmatpush1.msra.mxu0 0.0
      %436 = vmatprep.subr.mxu0 0.0
      %437 = vmatpush1.msra.mxu0 0.0
      %438 = vmatprep.subr.mxu0 0.0
      %439 = vmatpush1.msra.mxu0 0.0
      %440 = vmatprep.subr.mxu0 0.0
      %441 = vmatpush1.msra.mxu0 0.0
      %442 = vmatprep.subr.mxu0 0.0
      %443 = vmatpush1.msra.mxu0 0.0
      %444 = vmatprep.subr.mxu0 0.0
      %445 = vmatpush1.msra.mxu0 0.0
      %446 = vmatprep.subr.mxu0 0.0
      %447 = vmatpush1.msra.mxu0 0.0
      %448 = vmatprep.subr.mxu0 0.0
      %449 = vmatpush1.msra.mxu0 0.0
      %450 = vmatprep.subr.mxu0 0.0
      %451 = vmatpush1.msra.mxu0 0.0
      %452 = vmatprep.subr.mxu0 0.0
      %453 = vmatpush1.msra.mxu0 0.0
      %454 = vmatprep.subr.mxu0 0.0
      %455 = vmatpush1.msra.mxu0 0.0
      %456 = vmatprep.subr.mxu0 0.0
      %457 = vmatpush1.msra.mxu0 0.0
      %458 = vmatprep.subr.mxu0 0.0
      %459 = vmatpush1.msra.mxu0 0.0
      %460 = vmatprep.mubr.f32.mxu0 0.0
      %461 = vmatmul.mubr.f32.gmra.mrb[0].mxu0 %v371
      %v462 = vpop.f32.mrb[0].mxu0
      %v463 = vadd.f32 %v394, %v462
      %v464 = vpop.f32.mrb[0].mxu0
      %465 = vmatprep.mubr.f32.mxu0 0.0
      %466 = vmatmul.mubr.f32.gmra.mrb[0].mxu0 %v372
      %v467 = vpop.f32.mrb[0].mxu0
      %v468 = vadd.f32 %v394, %v467
      %v469 = vpop.f32.mrb[0].mxu0
      %470 = vdwg.mxu0
      %v473 = vcombine.high %v463, %v463
      %v475 = vunpack.c.l.s4 1983009808
      %v476 = vunpack.c.0.s8 %v475
      %v477 = vlaneseq
      %v478 = vshrl.u32 %v477, 7
      %v479 = vsub.s32 %v476, %v478
      %v480 = vrot.slane %v463, %v479
      %v482 = vunpack.c.l.s4 1983009808
      %v483 = vunpack.c.0.s8 %v482
      %v484 = vlaneseq
      %v485 = vshrl.u32 %v484, 7
      %v486 = vsub.s32 %v483, %v485
      %v487 = vrot.slane %v473, %v486
      %v488 = vcombine.high %v480, %v480
      %v489 = vcombine.high %v487, %v487
      %v490 = vcombine.high %v468, %v468
      %v492 = vunpack.c.l.s4 1983009808
      %v493 = vunpack.c.0.s8 %v492
      %v494 = vlaneseq
      %v495 = vshrl.u32 %v494, 7
      %v496 = vsub.s32 %v493, %v495
      %v497 = vrot.slane %v468, %v496
      %v499 = vunpack.c.l.s4 1983009808
      %v500 = vunpack.c.0.s8 %v499
      %v501 = vlaneseq
      %v502 = vshrl.u32 %v501, 7
      %v503 = vsub.s32 %v500, %v502
      %v504 = vrot.slane %v490, %v503
      %v505 = vcombine.high %v497, %v497
      %v506 = vcombine.high %v504, %v504
      %v515 = vld [vmem:[%s341] sm:$0x3]
      %v516 = vadd.f32 %v480, %v515
      %v517 = vadd.f32 %v488, %v515
      %v518 = vadd.f32 %v487, %v515
      %v519 = vadd.f32 %v489, %v515
      %v520 = vadd.f32 %v497, %v515
      %v521 = vadd.f32 %v505, %v515
      %v522 = vadd.f32 %v504, %v515
      %v523 = vadd.f32 %v506, %v515
      %v525 = vcombine.high %v370, %v370
      %v527 = vunpack.c.l.s4 1966171168
      %v528 = vunpack.c.0.s8 %v527
      %v529 = vlaneseq
      %v530 = vshrl.u32 %v529, 7
      %v531 = vsub.s32 %v528, %v530
      %v532 = vrot.slane %v370, %v531
      %v534 = vunpack.c.l.s4 1966171168
      %v535 = vunpack.c.0.s8 %v534
      %v536 = vlaneseq
      %v537 = vshrl.u32 %v536, 7
      %v538 = vsub.s32 %v535, %v537
      %v539 = vrot.slane %v525, %v538
      %v540 = vcombine.high %v532, %v532
      %v541 = vcombine.high %v539, %v539
      %v543 = vunpack.c.l.s4 1966171168
      %v544 = vunpack.c.0.s8 %v543
      %v545 = vlaneseq
      %v546 = vshrl.u32 %v545, 7
      %v547 = vsub.s32 %v544, %v546
      %v548 = vrot.slane %v532, %v547
      %v550 = vunpack.c.l.s4 1966171168
      %v551 = vunpack.c.0.s8 %v550
      %v552 = vlaneseq
      %v553 = vshrl.u32 %v552, 7
      %v554 = vsub.s32 %v551, %v553
      %v555 = vrot.slane %v539, %v554
      %v557 = vunpack.c.l.s4 1966171168
      %v558 = vunpack.c.0.s8 %v557
      %v559 = vlaneseq
      %v560 = vshrl.u32 %v559, 7
      %v561 = vsub.s32 %v558, %v560
      %v562 = vrot.slane %v540, %v561
      %v564 = vunpack.c.l.s4 1966171168
      %v565 = vunpack.c.0.s8 %v564
      %v566 = vlaneseq
      %v567 = vshrl.u32 %v566, 7
      %v568 = vsub.s32 %v565, %v567
      %v569 = vrot.slane %v541, %v568
      %v570 = vcombine.high %v548, %v548
      %v571 = vcombine.high %v555, %v555
      %v572 = vcombine.high %v562, %v562
      %v573 = vcombine.high %v569, %v569
      %v574 = vlaneseq
      %v575 = vshrl.u32 %v574, 7
      %v576 = vsub.s32 0, %v575
      %v577 = vrot.slane %v548, %v576
      %v578 = vlaneseq
      %v579 = vshrl.u32 %v578, 7
      %v580 = vsub.s32 0, %v579
      %v581 = vrot.slane %v562, %v580
      %v582 = vlaneseq
      %v583 = vshrl.u32 %v582, 7
      %v584 = vsub.s32 0, %v583
      %v585 = vrot.slane %v570, %v584
      %v586 = vlaneseq
      %v587 = vshrl.u32 %v586, 7
      %v588 = vsub.s32 0, %v587
      %v589 = vrot.slane %v572, %v588
      %v590 = vlaneseq
      %v591 = vshrl.u32 %v590, 7
      %v592 = vsub.s32 0, %v591
      %v593 = vrot.slane %v555, %v592
      %v594 = vlaneseq
      %v595 = vshrl.u32 %v594, 7
      %v596 = vsub.s32 0, %v595
      %v597 = vrot.slane %v569, %v596
      %v598 = vlaneseq
      %v599 = vshrl.u32 %v598, 7
      %v600 = vsub.s32 0, %v599
      %v601 = vrot.slane %v571, %v600
      %v602 = vlaneseq
      %v603 = vshrl.u32 %v602, 7
      %v604 = vsub.s32 0, %v603
      %v605 = vrot.slane %v573, %v604
      %v614 = vadd.f32 %v516, %v577
      %v615 = vadd.f32 %v517, %v581
      %v616 = vadd.f32 %v518, %v585
      %v617 = vadd.f32 %v519, %v589
      %v618 = vadd.f32 %v520, %v593
      %v619 = vadd.f32 %v521, %v597
      %v620 = vadd.f32 %v522, %v601
      %v621 = vadd.f32 %v523, %v605
      %v622 = vld [vmem:[%s5] sm:$0x1]
      %v624 = vlaneseq
      %v625 = vshrl.u32 %v624, 7
      %v626 = vsub.s32 0, %v625
      %v627 = vrot.slane %v622, %v626
      %v628 = vcombine.high %v627, %v627
      %v630 = vunpack.c.l.s4 1983009808
      %v631 = vunpack.c.0.s8 %v630
      %v632 = vlaneseq
      %v633 = vshrl.u32 %v632, 7
      %v634 = vsub.s32 %v631, %v633
      %v635 = vrot.slane %v627, %v634
      %v637 = vunpack.c.l.s4 1983009808
      %v638 = vunpack.c.0.s8 %v637
      %v639 = vlaneseq
      %v640 = vshrl.u32 %v639, 7
      %v641 = vsub.s32 %v638, %v640
      %v642 = vrot.slane %v628, %v641
      %v643 = vcombine.high %v635, %v635
      %v644 = vcombine.high %v642, %v642
      %v649 = vmul.f32 %v614, %v635
      %v650 = vmul.f32 %v615, %v643
      %v651 = vmul.f32 %v616, %v642
      %v652 = vmul.f32 %v617, %v644
      %v653 = vmul.f32 %v618, %v635
      %v654 = vmul.f32 %v619, %v643
      %v655 = vmul.f32 %v620, %v642
      %v656 = vmul.f32 %v621, %v644
      %v657 = vld [vmem:[%s6] sm:$0x1]
      %v659 = vlaneseq
      %v660 = vshrl.u32 %v659, 7
      %v661 = vsub.s32 0, %v660
      %v662 = vrot.slane %v657, %v661
      %v663 = vcombine.high %v662, %v662
      %v665 = vunpack.c.l.s4 1983009808
      %v666 = vunpack.c.0.s8 %v665
      %v667 = vlaneseq
      %v668 = vshrl.u32 %v667, 7
      %v669 = vsub.s32 %v666, %v668
      %v670 = vrot.slane %v662, %v669
      %v672 = vunpack.c.l.s4 1983009808
      %v673 = vunpack.c.0.s8 %v672
      %v674 = vlaneseq
      %v675 = vshrl.u32 %v674, 7
      %v676 = vsub.s32 %v673, %v675
      %v677 = vrot.slane %v663, %v676
      %v678 = vcombine.high %v670, %v670
      %v679 = vcombine.high %v677, %v677
      %v684 = vadd.f32 %v649, %v670
      %v685 = vadd.f32 %v650, %v678
      %v686 = vadd.f32 %v651, %v677
      %v687 = vadd.f32 %v652, %v679
      %v688 = vadd.f32 %v653, %v670
      %v689 = vadd.f32 %v654, %v678
      %v690 = vadd.f32 %v655, %v677
      %v691 = vadd.f32 %v656, %v679
      %v692 = vmax.f32 %v684, 0.0
      %v693 = vmax.f32 %v685, 0.0
      %v694 = vmax.f32 %v686, 0.0
      %v695 = vmax.f32 %v687, 0.0
      %v696 = vmax.f32 %v688, 0.0
      %v697 = vmax.f32 %v689, 0.0
      %v698 = vmax.f32 %v690, 0.0
      %v699 = vmax.f32 %v691, 0.0
      %v708 = vcombine.low %v692, %v693
      %v709 = vcombine.low %v694, %v695
      %v711 = vunpack.c.l.s4 1983009808
      %v712 = vunpack.c.0.s8 %v711
      %v713 = vlaneseq
      %v714 = vshrl.u32 %v713, 7
      %v715 = vsub.s32 %v712, %v714
      %v716 = vrot.slane %v708, %v715
      %v718 = vunpack.c.l.s4 1983009808
      %v719 = vunpack.c.0.s8 %v718
      %v720 = vlaneseq
      %v721 = vshrl.u32 %v720, 7
      %v722 = vsub.s32 %v719, %v721
      %v723 = vrot.slane %v709, %v722
      %v724 = vcombine.low %v716, %v723
      %v725 = vcombine.low %v696, %v697
      %v726 = vcombine.low %v698, %v699
      %v728 = vunpack.c.l.s4 1983009808
      %v729 = vunpack.c.0.s8 %v728
      %v730 = vlaneseq
      %v731 = vshrl.u32 %v730, 7
      %v732 = vsub.s32 %v729, %v731
      %v733 = vrot.slane %v725, %v732
      %v735 = vunpack.c.l.s4 1983009808
      %v736 = vunpack.c.0.s8 %v735
      %v737 = vlaneseq
      %v738 = vshrl.u32 %v737, 7
      %v739 = vsub.s32 %v736, %v738
      %v740 = vrot.slane %v726, %v739
      %v741 = vcombine.low %v733, %v740
      %v744 = vadd.f32 %v371, %v724
      %v745 = vadd.f32 %v372, %v741
      %746 = vst [vmem:[%s350] sm:$0xff] %v744
      %747 = vst [vmem:[%s350 + $0x8] sm:$0xff] %v745
      %s748 = smul.u32 2, %s23
      %p749 = scmp.lt.s32.totalorder %s22, 1
      %s750 = scalar_select %p749, %s22, 1
      %p751 = scmp.lt.s32.totalorder %s748, 1
      %s752 = scalar_select %p751, %s748, 1
      %s753 = smul.addr %s750, 2
      %s754 = sadd.s32 %s752, %s753
      %s755 = smul.addr %s754, 8
      %s756 = scalar_lea.vmem %s7, %s755
      // Predicated region
      $region49: #{gnn_encoder.15} parent=47 // pred_check
        %p757 = pneg %p214
      $region50: #{gnn_encoder.15} parent=47 // pred_check_branch
        %759 = sbr.rel (%p757) target = $region52
      $region51: #{gnn_encoder.15} parent=47 // pred_region
        %s760 = smul.u32 2, %s23
      $region52: #{gnn_encoder.15} parent=47 // pred_fallthru
        _
    $region48: #{gnn_encoder.15} parent=5 // pred_fallthru
      _
    %p761 = scmp.le.s32.totalorder 2, %s13
    // Predicated region
    $region53: #{gnn_encoder.15} parent=5 // pred_check
      %p762 = pneg %p761
    $region54: #{gnn_encoder.15} parent=5 // pred_check_branch
      %764 = sbr.rel (%p762) target = $region56
    $region55: #{gnn_encoder.15} parent=5 // pred_region
      %s765 = ssub.s32 %s13, 2
      // Predicated region
      $region57: #{gnn_encoder.15} parent=55 // pred_check
        %p766 = pneg %p220
      $region58: #{gnn_encoder.15} parent=55 // pred_check_branch
        %768 = sbr.rel (%p766) target = $region60
      $region59: #{gnn_encoder.15} parent=55 // pred_region
        %s769 = smul.u32 2, %s25
        %p770 = scmp.lt.s32.totalorder %s24, 1
        %s771 = scalar_select %p770, %s24, 1
        %p772 = scmp.lt.s32.totalorder %s769, 1
        %s773 = scalar_select %p772, %s769, 1
        %s774 = smul.addr %s771, 2
        %s775 = sadd.s32 %s773, %s774
        %s776 = smul.addr %s775, 8
        %s777 = scalar_lea.vmem %s7, %s776
      $region60: #{gnn_encoder.15} parent=55 // pred_fallthru
        _
    $region56: #{gnn_encoder.15} parent=5 // pred_fallthru
      _
  $region6: #{gnn_encoder.15} parent=0 // loop_footer
    %s17 = sadd.s32 1, %s13
  $region7: #{gnn_encoder.15} parent=0 // loop_footer_branch
    %12 = sbr.rel target = $region3
  $region8: #{gnn_encoder.15} parent=0 // loop_exit
    _

</llo_original>
